<compile_context>
chip_gen: v5e
topology: v5e:2x2
jax: 0.10.0
libtpu: 0.0.40
codegen_flags: <defaults>
</compile_context>

<pallas_src>
import math

import jax
import jax.numpy as jnp
from jax.experimental import pallas as pl
from jax.experimental.pallas import tpu as pltpu


def mnist_logistic_kernel(x_ref, w_ref, b_ref, o_ref):
    # MXU matmul with f32 accumulate, then bias add + stabilized log-softmax
    # on the VPU/XLU/EUP.
    logits = jnp.dot(x_ref[...], w_ref[...], preferred_element_type=jnp.float32)
    logits = logits + b_ref[...]                      # (tm, C) + (1, C) broadcast
    # x - (m + log(sum(exp(x - m)))), m = rowmax(x): identical (up to rounding)
    # to the torch reference's x - log(sum(exp(x))).
    m = jnp.max(logits, axis=-1, keepdims=True)
    lse = m + jnp.log(jnp.sum(jnp.exp(logits - m), axis=-1, keepdims=True))
    o_ref[...] = (logits - lse).astype(o_ref.dtype)


def _pick_tm(B, max_tile=512):
    # <=512 rows: a single tile (one grid step, no per-step overhead).
    if B <= max_tile:
        return B
    # Otherwise split into balanced, 8-aligned tiles of at most `max_tile`
    # rows; the resulting small grid is marked "parallel" for megacore.
    n_tiles = pl.cdiv(B, max_tile)
    tm = -(-B // n_tiles)            # ceil(B / n_tiles)
    tm = ((tm + 7) // 8) * 8         # sublane (8) alignment
    return tm


def mnist_logistic_forward(x, w, b, *, tm=None):
    """x: (B, 784) f32, w: (784, 10) f32, b: (10,) f32 -> (B, 10) f32."""
    B, K = x.shape
    K2, C = w.shape
    assert K == K2
    b2d = b.reshape(1, C)
    if tm is None:
        tm = _pick_tm(B)

    grid = (pl.cdiv(B, tm),)
    return pl.pallas_call(
        mnist_logistic_kernel,
        out_shape=jax.ShapeDtypeStruct((B, C), jnp.float32),
        grid_spec=pltpu.PrefetchScalarGridSpec(
            num_scalar_prefetch=0,
            grid=grid,
            in_specs=[
                pl.BlockSpec((tm, K), lambda i: (i, 0)),   # x row tile (pipelined)
                pl.BlockSpec((K, C), lambda i: (0, 0)),    # W resident in VMEM
                pl.BlockSpec((1, C), lambda i: (0, 0)),    # bias resident in VMEM
            ],
            out_specs=pl.BlockSpec((tm, C), lambda i: (i, 0)),
        ),
        compiler_params=pltpu.CompilerParams(
            dimension_semantics=("parallel",),
        ),
    )(x, w, b2d)


def reference_forward(x, w, b):
    # Pure-JAX mirror of the torch module (unstabilized, as written in the spec).
    logits = x @ w + b
    return logits - jnp.log(jnp.sum(jnp.exp(logits), axis=-1, keepdims=True))


if __name__ == "__main__":
    key = jax.random.PRNGKey(0)
    kx, kw = jax.random.split(key)

    batch = 1000        # matches the module's bs = 1000
    in_features = 784   # MNIST flattened 28*28
    num_classes = 10

    # Deterministic params mirroring __init__: randn(784,10)/sqrt(784), zeros(10)
    x = jax.random.normal(kx, (batch, in_features), dtype=jnp.float32)
    w = jax.random.normal(kw, (in_features, num_classes), dtype=jnp.float32) / math.sqrt(
        in_features
    )
    b = jnp.zeros((num_classes,), dtype=jnp.float32)

    out = mnist_logistic_forward(x, w, b)
    out = jax.block_until_ready(out)

    ref = reference_forward(x, w, b)
    assert out.shape == (batch, num_classes)
    assert jnp.allclose(out, ref, atol=1e-5, rtol=1e-5)

    print("KERNEL_OK")
</pallas_src>

<mosaic_0001>
module attributes {stable_mosaic.version = 11 : i64} {
  func.func @mnist_logistic_kernel(%arg0: i32, %arg1: memref<504x784xf32, #tpu.memory_space<vmem>>, %arg2: memref<784x10xf32, #tpu.memory_space<vmem>>, %arg3: memref<1x10xf32, #tpu.memory_space<vmem>>, %arg4: memref<504x10xf32, #tpu.memory_space<vmem>>) attributes {dimension_semantics = [#tpu.dimension_semantics<parallel>], iteration_bounds = array<i64: 2>, scalar_prefetch = 0 : i64, scratch_operands = 0 : i64, tpu.core_type = #tpu.core_type<tc>, window_params = [{transform_indices = @transform_0, window_bounds = array<i64: 504, 784>}, {pipeline_mode = #tpu.pipeline_mode<synchronous>, transform_indices = @transform_1, window_bounds = array<i64: 784, 10>}, {pipeline_mode = #tpu.pipeline_mode<synchronous>, transform_indices = @transform_2, window_bounds = array<i64: 1, 10>}, {transform_indices = @transform_3, window_bounds = array<i64: 504, 10>}]} {
    %c0 = arith.constant 0 : index
    %c0_0 = arith.constant 0 : index
    %0 = vector.load %arg1[%c0, %c0_0] : memref<504x784xf32, #tpu.memory_space<vmem>>, vector<504x784xf32>
    %c0_1 = arith.constant 0 : index
    %c0_2 = arith.constant 0 : index
    %1 = vector.load %arg2[%c0_1, %c0_2] : memref<784x10xf32, #tpu.memory_space<vmem>>, vector<784x10xf32>
    %cst = arith.constant dense<0.000000e+00> : vector<504x10xf32>
    %2 = tpu.matmul %0, %1, %cst {dimension_numbers = #tpu.dot_dimension_numbers<[1], [0], [0], [1], [0, 0, 1, 1], [], []>} : vector<504x784xf32>, vector<784x10xf32>, vector<504x10xf32> -> vector<504x10xf32>
    %c0_3 = arith.constant 0 : index
    %c0_4 = arith.constant 0 : index
    %3 = vector.load %arg3[%c0_3, %c0_4] : memref<1x10xf32, #tpu.memory_space<vmem>>, vector<1x10xf32>
    %4 = vector.broadcast %3 : vector<1x10xf32> to vector<504x10xf32>
    %5 = arith.addf %2, %4 : vector<504x10xf32>
    %cst_5 = arith.constant dense<0xFF800000> : vector<504xf32>
    %6 = vector.multi_reduction <maximumf>, %5, %cst_5 [1] : vector<504x10xf32> to vector<504xf32>
    %7 = vector.shape_cast %6 : vector<504xf32> to vector<504x1xf32>
    %8 = vector.broadcast %7 : vector<504x1xf32> to vector<504x10xf32>
    %9 = arith.subf %5, %8 : vector<504x10xf32>
    %10 = math.exp %9 : vector<504x10xf32>
    %cst_6 = arith.constant dense<0.000000e+00> : vector<504xf32>
    %11 = vector.multi_reduction <add>, %10, %cst_6 [1] : vector<504x10xf32> to vector<504xf32>
    %12 = vector.shape_cast %11 : vector<504xf32> to vector<504x1xf32>
    %13 = math.log %12 : vector<504x1xf32>
    %14 = arith.addf %7, %13 : vector<504x1xf32>
    %15 = vector.broadcast %14 : vector<504x1xf32> to vector<504x10xf32>
    %16 = arith.subf %5, %15 : vector<504x10xf32>
    %c0_7 = arith.constant 0 : index
    %c0_8 = arith.constant 0 : index
    %17 = vector.load %arg4[%c0_7, %c0_8] : memref<504x10xf32, #tpu.memory_space<vmem>>, vector<504x10xf32>
    tpu.vector_store %arg4[%c0_7, %c0_8], %16 {strides = array<i32>} : memref<504x10xf32, #tpu.memory_space<vmem>>, vector<504x10xf32>,
    return
  }
  func.func @transform_0(%arg0: i32) -> (i32, i32) {
    %c0_i32 = arith.constant 0 : i32
    %c0_i32_0 = arith.constant 0 : i32
    return %arg0, %c0_i32 : i32, i32
  }
  func.func @transform_1(%arg0: i32) -> (i32, i32) {
    %c0_i32 = arith.constant 0 : i32
    %c0_i32_0 = arith.constant 0 : i32
    %c0_i32_1 = arith.constant 0 : i32
    return %c0_i32, %c0_i32_0 : i32, i32
  }
  func.func @transform_2(%arg0: i32) -> (i32, i32) {
    %c0_i32 = arith.constant 0 : i32
    %c0_i32_0 = arith.constant 0 : i32
    %c0_i32_1 = arith.constant 0 : i32
    return %c0_i32, %c0_i32_0 : i32, i32
  }
  func.func @transform_3(%arg0: i32) -> (i32, i32) {
    %c0_i32 = arith.constant 0 : i32
    %c0_i32_0 = arith.constant 0 : i32
    return %arg0, %c0_i32 : i32, i32
  }
}

</mosaic_0001>

<llo_original>
// kernel: tpu_custom_call.1
$region0: #{tpu_custom_call.1}
  #allocation0 [shape = 'u32[]', space=smem, size = 0x4, offset = 0x4, fixed_abs, tag = 'smem constant byte address 0x4 - core index']
  #allocation1 [shape = 'u32[72,128]{1,0:T(1,128)}', space=vmem, size = 0x9000, scoped, tag = 'internal scratch']
  %s0 = inlined_call_operand.vmem [shape: f32[1000,784], index: 0, kind: input, shape index: {}]
  %s1 = inlined_call_operand.vmem [shape: f32[784,10], index: 1, kind: input, shape index: {}]
  %s2 = inlined_call_operand.vmem [shape: f32[1,10], index: 2, kind: input, shape index: {}]
  %s3 = inlined_call_operand.vmem [shape: f32[1000,10], index: 3, kind: output, shape index: {}]
  %s4 = sld [smem:[#allocation0]]
  $region93: #{tpu_custom_call.1} parent=0
    _
  %s6 = ssub.s32 1, %s4
  %s7 = scalar_select 0, %s6, %s4
  $region1: #{tpu_custom_call.1} parent=0
    #allocation2 [shape = 'u8[516096]{0}', space=vmem, size = 0x7e000, scoped, tag = 'output window, operand 0']
    loop: start=0, step=1, limit=4
    $region2: #{tpu_custom_call.1} parent=1 // loop_pre_header
      _
    $region3: #{tpu_custom_call.1} parent=1 // loop_header
      %s9 = sphi 0, %s13
      %p10 = scmp.ge.s32.totalorder %s9, 4
      %s19 = sphi 0, %s21
      %s22 = sphi 0, %s19
      %s23 = sphi 0, %s22
      %s39 = sphi 0, %s23
      %s43 = sphi 0, %s43
      %s45 = sphi 0, %s43
      %s46 = sphi 0, %s45
      %s60 = sphi 0, %s46
      %s64 = sphi 0, %s64
      %s66 = sphi 0, %s64
      %s67 = sphi 0, %s66
      %s81 = sphi 0, %s67
      %s87 = sphi 0, %s89
      %s90 = sphi 0, %s87
      %s91 = sphi 0, %s90
      %s107 = sphi 0, %s91
    $region4: #{tpu_custom_call.1} parent=1 // loop_header_branch
      %12 = sbr.rel (%p10) target = $region8
    $region5: #{tpu_custom_call.1} parent=1 // loop_body
      %s14 = ssub.s32 %s9, 1
      %s15 = ssub.s32 %s9, 2
      %s16 = sadd.s32 %s9, 1
      %s17 = ssub.s32 %s9, %s16
      %p18 = scmp.eq.s32.totalorder %s17, 0
      %s20 = sadd.s32 %s19, 1
      %s21 = scalar_select %p18, %s19, %s20
      %p24 = pneg %p18
      %p25 = scmp.eq.s32.totalorder %s9, 1
      %p26 = por %p24, %p25
      %p27 = scmp.ne.s32.totalorder %s19, %s22
      %p28 = scmp.eq.s32.totalorder %s9, 0
      %p29 = por %p27, %p28
      %p30 = scmp.ne.s32.totalorder %s19, %s22
      %p31 = scmp.eq.s32.totalorder %s14, 1
      %p32 = por %p30, %p31
      %p33 = scmp.ne.s32.totalorder %s22, %s23
      %p34 = scmp.eq.s32.totalorder %s14, 0
      %p35 = por %p33, %p34
      %p36 = scmp.ne.s32.totalorder %s22, %s23
      %p37 = scmp.eq.s32.totalorder %s15, 1
      %p38 = por %p36, %p37
      %p40 = scmp.ne.s32.totalorder %s23, %s39
      %p41 = scmp.eq.s32.totalorder %s15, 0
      %p42 = por %p40, %p41
      %s44 = sadd.s32 %s43, 1
      %p47 = scmp.eq.s32.totalorder %s9, 1
      %p48 = scmp.ne.s32.totalorder %s43, %s45
      %p49 = scmp.eq.s32.totalorder %s9, 0
      %p50 = por %p48, %p49
      %p51 = scmp.ne.s32.totalorder %s43, %s45
      %p52 = scmp.eq.s32.totalorder %s14, 1
      %p53 = por %p51, %p52
      %p54 = scmp.ne.s32.totalorder %s45, %s46
      %p55 = scmp.eq.s32.totalorder %s14, 0
      %p56 = por %p54, %p55
      %p57 = scmp.ne.s32.totalorder %s45, %s46
      %p58 = scmp.eq.s32.totalorder %s15, 1
      %p59 = por %p57, %p58
      %p61 = scmp.ne.s32.totalorder %s46, %s60
      %p62 = scmp.eq.s32.totalorder %s15, 0
      %p63 = por %p61, %p62
      %s65 = sadd.s32 %s64, 1
      %p68 = scmp.eq.s32.totalorder %s9, 1
      %p69 = scmp.ne.s32.totalorder %s64, %s66
      %p70 = scmp.eq.s32.totalorder %s9, 0
      %p71 = por %p69, %p70
      %p72 = scmp.ne.s32.totalorder %s64, %s66
      %p73 = scmp.eq.s32.totalorder %s14, 1
      %p74 = por %p72, %p73
      %p75 = scmp.ne.s32.totalorder %s66, %s67
      %p76 = scmp.eq.s32.totalorder %s14, 0
      %p77 = por %p75, %p76
      %p78 = scmp.ne.s32.totalorder %s66, %s67
      %p79 = scmp.eq.s32.totalorder %s15, 1
      %p80 = por %p78, %p79
      %p82 = scmp.ne.s32.totalorder %s67, %s81
      %p83 = scmp.eq.s32.totalorder %s15, 0
      %p84 = por %p82, %p83
      %s85 = ssub.s32 %s9, %s16
      %p86 = scmp.eq.s32.totalorder %s85, 0
      %s88 = sadd.s32 %s87, 1
      %s89 = scalar_select %p86, %s87, %s88
      %p92 = pneg %p86
      %p93 = scmp.eq.s32.totalorder %s9, 1
      %p94 = por %p92, %p93
      %p95 = scmp.ne.s32.totalorder %s87, %s90
      %p96 = scmp.eq.s32.totalorder %s9, 0
      %p97 = por %p95, %p96
      %p98 = scmp.ne.s32.totalorder %s87, %s90
      %p99 = scmp.eq.s32.totalorder %s14, 1
      %p100 = por %p98, %p99
      %p101 = scmp.ne.s32.totalorder %s90, %s91
      %p102 = scmp.eq.s32.totalorder %s14, 0
      %p103 = por %p101, %p102
      %p104 = scmp.ne.s32.totalorder %s90, %s91
      %p105 = scmp.eq.s32.totalorder %s15, 1
      %p106 = por %p104, %p105
      %p108 = scmp.ne.s32.totalorder %s91, %s107
      %p109 = scmp.eq.s32.totalorder %s15, 0
      %p110 = por %p108, %p109
      %p111 = scmp.le.s32.totalorder 1, %s9
      %p112 = scmp.lt.s32.totalorder %s9, 3
      %p113 = pnand %p111, %p112
      %p114 = pneg %p113
      // Predicated region
      $region9: #{tpu_custom_call.1} parent=5 // pred_check
        _
      $region10: #{tpu_custom_call.1} parent=5 // pred_check_branch
        %116 = sbr.rel (%p113) target = $region12
      $region11: #{tpu_custom_call.1} parent=5 // pred_region
        %s117 = ssub.s32 %s9, 1
        // Predicated region
        $region13: #{tpu_custom_call.1} parent=11 // pred_check
          %p118 = pneg %p56
        $region14: #{tpu_custom_call.1} parent=11 // pred_check_branch
          %120 = sbr.rel (%p118) target = $region16
        $region15: #{tpu_custom_call.1} parent=11 // pred_region
          _
        $region16: #{tpu_custom_call.1} parent=11 // pred_fallthru
          _
        // Predicated region
        $region17: #{tpu_custom_call.1} parent=11 // pred_check
          %p121 = pneg %p77
        $region18: #{tpu_custom_call.1} parent=11 // pred_check_branch
          %123 = sbr.rel (%p121) target = $region20
        $region19: #{tpu_custom_call.1} parent=11 // pred_region
          _
        $region20: #{tpu_custom_call.1} parent=11 // pred_fallthru
          _
      $region12: #{tpu_custom_call.1} parent=5 // pred_fallthru
        _
      %p124 = scmp.lt.s32.totalorder %s9, 2
      // Predicated region
      $region21: #{tpu_custom_call.1} parent=5 // pred_check
        %p125 = pneg %p124
      $region22: #{tpu_custom_call.1} parent=5 // pred_check_branch
        %127 = sbr.rel (%p125) target = $region24
      $region23: #{tpu_custom_call.1} parent=5 // pred_region
        // Predicated region
        $region25: #{tpu_custom_call.1} parent=23 // pred_check
          %p128 = pneg %p29
        $region26: #{tpu_custom_call.1} parent=23 // pred_check_branch
          %130 = sbr.rel (%p128) target = $region28
        $region27: #{tpu_custom_call.1} parent=23 // pred_region
          %s131 = smul.u32 63, %s9
          %s132 = ssub.s32 125, %s131
          %p133 = scmp.lt.s32.totalorder %s132, 63
          %s134 = scalar_select %p133, %s132, 63
          %s135 = smul.u32 8, %s134
          %s136 = smul.u32 %s135, 7
          %p137 = scmp.lt.s32.totalorder %s131, 124
          %s138 = scalar_select %p137, %s131, 124
          %s139 = smul.addr %s138, 7
          %s140 = smul.addr %s139, 8
          %s141 = scalar_lea.vmem %s0, %s140
          %s142 = smul.u32 63, %s9
          %s143 = ssub.s32 125, %s142
          %p144 = scmp.lt.s32.totalorder %s143, 63
          %s145 = scalar_select %p144, %s143, 63
          %s146 = smul.u32 8, %s145
          %s147 = smul.u32 %s146, 7
        $region28: #{tpu_custom_call.1} parent=23 // pred_fallthru
          _
      $region24: #{tpu_custom_call.1} parent=5 // pred_fallthru
        _
      %p148 = scmp.le.s32.totalorder 1, %s9
      %p149 = scmp.lt.s32.totalorder %s9, 3
      %p150 = pnand %p148, %p149
      %p151 = pneg %p150
      // Predicated region
      $region29: #{tpu_custom_call.1} parent=5 // pred_check
        _
      $region30: #{tpu_custom_call.1} parent=5 // pred_check_branch
        %153 = sbr.rel (%p150) target = $region32
      $region31: #{tpu_custom_call.1} parent=5 // pred_region
        %s154 = ssub.s32 %s9, 1
        %s155 = smul.u32 63, %s14
        %s156 = ssub.s32 125, %s155
        %p157 = scmp.lt.s32.totalorder %s156, 63
        %s158 = scalar_select %p157, %s156, 63
        %s159 = smul.u32 8, %s158
        %s160 = smul.u32 %s159, 7
        %p161 = scmp.lt.s32.totalorder %s155, 124
        %s162 = scalar_select %p161, %s155, 124
        %s163 = smul.addr %s162, 7
        %s164 = smul.addr %s163, 8
        %s165 = scalar_lea.vmem %s0, %s164
        %p166 = pneg %p35
        %p167 = pneg %p32
        %p168 = pneg %p56
        %p169 = pneg %p53
        %p170 = pneg %p77
        %p171 = pneg %p74
        %p172 = pneg %p103
        %p173 = pneg %p100
        %s174 = sand.u32 %s90, 1
        %s175 = sand.u32 %s90, 1
        %s176 = smul.addr %s175, 504
        %s177 = scalar_lea.vmem [#allocation2], %s176
        %s178 = smul.u32 63, %s14
        %s179 = ssub.s32 125, %s178
        %p180 = scmp.lt.s32.totalorder %s179, 63
        %s181 = scalar_select %p180, %s179, 63
        %s182 = smul.u32 8, %s181
        %s183 = smul.u32 %s182, 7
        %p184 = scmp.lt.s32.totalorder %s178, 124
        %s185 = scalar_select %p184, %s178, 124
        %s186 = smul.addr %s185, 7
        %s187 = smul.addr %s186, 8
        %s188 = scalar_lea.vmem %s0, %s187
        %s189 = smul.u32 63, %s14
        %s190 = ssub.s32 125, %s189
        %p191 = scmp.lt.s32.totalorder %s190, 63
        %s192 = scalar_select %p191, %s190, 63
        %s193 = smul.u32 8, %s192
        %s194 = smul.u32 %s193, 7
        %s195 = smul.u32 63, %s14
        %s196 = ssub.s32 125, %s195
        %p197 = scmp.lt.s32.totalorder %s196, 63
        %s198 = scalar_select %p197, %s196, 63
        %s199 = smul.u32 8, %s198
        %v200 = vld [vmem:[%s188] sm:$0xff]
        %v201 = vld [vmem:[%s188 + $0x8] sm:$0xff]
        %v202 = vld [vmem:[%s188 + $0x10] sm:$0xff]
        %v203 = vld [vmem:[%s188 + $0x18] sm:$0xff]
        %v204 = vld [vmem:[%s188 + $0x20] sm:$0xff]
        %v205 = vld [vmem:[%s188 + $0x28] sm:$0xff]
        %v206 = vld [vmem:[%s188 + $0x30] sm:$0xff]
        %v207 = vld [vmem:[%s188 + $0x38] sm:$0xff]
        %v208 = vld [vmem:[%s188 + $0x40] sm:$0xff]
        %v209 = vld [vmem:[%s188 + $0x48] sm:$0xff]
        %v210 = vld [vmem:[%s188 + $0x50] sm:$0xff]
        %v211 = vld [vmem:[%s188 + $0x58] sm:$0xff]
        %v212 = vld [vmem:[%s188 + $0x60] sm:$0xff]
        %v213 = vld [vmem:[%s188 + $0x68] sm:$0xff]
        %v214 = vld [vmem:[%s188 + $0x70] sm:$0xff]
        %v215 = vld [vmem:[%s188 + $0x78] sm:$0xff]
        %v216 = vld [vmem:[%s188 + $0x80] sm:$0xff]
        %v217 = vld [vmem:[%s188 + $0x88] sm:$0xff]
        %v218 = vld [vmem:[%s188 + $0x90] sm:$0xff]
        %v219 = vld [vmem:[%s188 + $0x98] sm:$0xff]
        %v220 = vld [vmem:[%s188 + $0xa0] sm:$0xff]
        %v221 = vld [vmem:[%s188 + $0xa8] sm:$0xff]
        %v222 = vld [vmem:[%s188 + $0xb0] sm:$0xff]
        %v223 = vld [vmem:[%s188 + $0xb8] sm:$0xff]
        %v224 = vld [vmem:[%s188 + $0xc0] sm:$0xff]
        %v225 = vld [vmem:[%s188 + $0xc8] sm:$0xff]
        %v226 = vld [vmem:[%s188 + $0xd0] sm:$0xff]
        %v227 = vld [vmem:[%s188 + $0xd8] sm:$0xff]
        %v228 = vld [vmem:[%s188 + $0xe0] sm:$0xff]
        %v229 = vld [vmem:[%s188 + $0xe8] sm:$0xff]
        %v230 = vld [vmem:[%s188 + $0xf0] sm:$0xff]
        %v231 = vld [vmem:[%s188 + $0xf8] sm:$0xff]
        %v232 = vld [vmem:[%s188 + $0x100] sm:$0xff]
        %v233 = vld [vmem:[%s188 + $0x108] sm:$0xff]
        %v234 = vld [vmem:[%s188 + $0x110] sm:$0xff]
        %v235 = vld [vmem:[%s188 + $0x118] sm:$0xff]
        %v236 = vld [vmem:[%s188 + $0x120] sm:$0xff]
        %v237 = vld [vmem:[%s188 + $0x128] sm:$0xff]
        %v238 = vld [vmem:[%s188 + $0x130] sm:$0xff]
        %v239 = vld [vmem:[%s188 + $0x138] sm:$0xff]
        %v240 = vld [vmem:[%s188 + $0x140] sm:$0xff]
        %v241 = vld [vmem:[%s188 + $0x148] sm:$0xff]
        %v242 = vld [vmem:[%s188 + $0x150] sm:$0xff]
        %v243 = vld [vmem:[%s188 + $0x158] sm:$0xff]
        %v244 = vld [vmem:[%s188 + $0x160] sm:$0xff]
        %v245 = vld [vmem:[%s188 + $0x168] sm:$0xff]
        %v246 = vld [vmem:[%s188 + $0x170] sm:$0xff]
        %v247 = vld [vmem:[%s188 + $0x178] sm:$0xff]
        %v248 = vld [vmem:[%s188 + $0x180] sm:$0xff]
        %v249 = vld [vmem:[%s188 + $0x188] sm:$0xff]
        %v250 = vld [vmem:[%s188 + $0x190] sm:$0xff]
        %v251 = vld [vmem:[%s188 + $0x198] sm:$0xff]
        %v252 = vld [vmem:[%s188 + $0x1a0] sm:$0xff]
        %v253 = vld [vmem:[%s188 + $0x1a8] sm:$0xff]
        %v254 = vld [vmem:[%s188 + $0x1b0] sm:$0xff]
        %v255 = vld [vmem:[%s188 + $0x1b8] sm:$0xff]
        %v256 = vld [vmem:[%s188 + $0x1c0] sm:$0xff]
        %v257 = vld [vmem:[%s188 + $0x1c8] sm:$0xff]
        %v258 = vld [vmem:[%s188 + $0x1d0] sm:$0xff]
        %v259 = vld [vmem:[%s188 + $0x1d8] sm:$0xff]
        %v260 = vld [vmem:[%s188 + $0x1e0] sm:$0xff]
        %v261 = vld [vmem:[%s188 + $0x1e8] sm:$0xff]
        %v262 = vld [vmem:[%s188 + $0x1f0] sm:$0xff]
        %v263 = vld [vmem:[%s188 + $0x1f8] sm:$0xff]
        %v264 = vld [vmem:[%s188 + $0x200] sm:$0xff]
        %v265 = vld [vmem:[%s188 + $0x208] sm:$0xff]
        %v266 = vld [vmem:[%s188 + $0x210] sm:$0xff]
        %v267 = vld [vmem:[%s188 + $0x218] sm:$0xff]
        %v268 = vld [vmem:[%s188 + $0x220] sm:$0xff]
        %v269 = vld [vmem:[%s188 + $0x228] sm:$0xff]
        %v270 = vld [vmem:[%s188 + $0x230] sm:$0xff]
        %v271 = vld [vmem:[%s188 + $0x238] sm:$0xff]
        %v272 = vld [vmem:[%s188 + $0x240] sm:$0xff]
        %v273 = vld [vmem:[%s188 + $0x248] sm:$0xff]
        %v274 = vld [vmem:[%s188 + $0x250] sm:$0xff]
        %v275 = vld [vmem:[%s188 + $0x258] sm:$0xff]
        %v276 = vld [vmem:[%s188 + $0x260] sm:$0xff]
        %v277 = vld [vmem:[%s188 + $0x268] sm:$0xff]
        %v278 = vld [vmem:[%s188 + $0x270] sm:$0xff]
        %v279 = vld [vmem:[%s188 + $0x278] sm:$0xff]
        %v280 = vld [vmem:[%s188 + $0x280] sm:$0xff]
        %v281 = vld [vmem:[%s188 + $0x288] sm:$0xff]
        %v282 = vld [vmem:[%s188 + $0x290] sm:$0xff]
        %v283 = vld [vmem:[%s188 + $0x298] sm:$0xff]
        %v284 = vld [vmem:[%s188 + $0x2a0] sm:$0xff]
        %v285 = vld [vmem:[%s188 + $0x2a8] sm:$0xff]
        %v286 = vld [vmem:[%s188 + $0x2b0] sm:$0xff]
        %v287 = vld [vmem:[%s188 + $0x2b8] sm:$0xff]
        %v288 = vld [vmem:[%s188 + $0x2c0] sm:$0xff]
        %v289 = vld [vmem:[%s188 + $0x2c8] sm:$0xff]
        %v290 = vld [vmem:[%s188 + $0x2d0] sm:$0xff]
        %v291 = vld [vmem:[%s188 + $0x2d8] sm:$0xff]
        %v292 = vld [vmem:[%s188 + $0x2e0] sm:$0xff]
        %v293 = vld [vmem:[%s188 + $0x2e8] sm:$0xff]
        %v294 = vld [vmem:[%s188 + $0x2f0] sm:$0xff]
        %v295 = vld [vmem:[%s188 + $0x2f8] sm:$0xff]
        %v296 = vld [vmem:[%s188 + $0x300] sm:$0xff]
        %v297 = vld [vmem:[%s188 + $0x308] sm:$0xff]
        %v298 = vld [vmem:[%s188 + $0x310] sm:$0xff]
        %v299 = vld [vmem:[%s188 + $0x318] sm:$0xff]
        %v300 = vld [vmem:[%s188 + $0x320] sm:$0xff]
        %v301 = vld [vmem:[%s188 + $0x328] sm:$0xff]
        %v302 = vld [vmem:[%s188 + $0x330] sm:$0xff]
        %v303 = vld [vmem:[%s188 + $0x338] sm:$0xff]
        %v304 = vld [vmem:[%s188 + $0x340] sm:$0xff]
        %v305 = vld [vmem:[%s188 + $0x348] sm:$0xff]
        %v306 = vld [vmem:[%s188 + $0x350] sm:$0xff]
        %v307 = vld [vmem:[%s188 + $0x358] sm:$0xff]
        %v308 = vld [vmem:[%s188 + $0x360] sm:$0xff]
        %v309 = vld [vmem:[%s188 + $0x368] sm:$0xff]
        %v310 = vld [vmem:[%s188 + $0x370] sm:$0xff]
        %v311 = vld [vmem:[%s188 + $0x378] sm:$0xff]
        %v312 = vld [vmem:[%s188 + $0x380] sm:$0xff]
        %v313 = vld [vmem:[%s188 + $0x388] sm:$0xff]
        %v314 = vld [vmem:[%s188 + $0x390] sm:$0xff]
        %v315 = vld [vmem:[%s188 + $0x398] sm:$0xff]
        %v316 = vld [vmem:[%s188 + $0x3a0] sm:$0xff]
        %v317 = vld [vmem:[%s188 + $0x3a8] sm:$0xff]
        %v318 = vld [vmem:[%s188 + $0x3b0] sm:$0xff]
        %v319 = vld [vmem:[%s188 + $0x3b8] sm:$0xff]
        %v320 = vld [vmem:[%s188 + $0x3c0] sm:$0xff]
        %v321 = vld [vmem:[%s188 + $0x3c8] sm:$0xff]
        %v322 = vld [vmem:[%s188 + $0x3d0] sm:$0xff]
        %v323 = vld [vmem:[%s188 + $0x3d8] sm:$0xff]
        %v324 = vld [vmem:[%s188 + $0x3e0] sm:$0xff]
        %v325 = vld [vmem:[%s188 + $0x3e8] sm:$0xff]
        %v326 = vld [vmem:[%s188 + $0x3f0] sm:$0xff]
        %v327 = vld [vmem:[%s188 + $0x3f8] sm:$0xff]
        %v328 = vld [vmem:[%s188 + $0x400] sm:$0xff]
        %v329 = vld [vmem:[%s188 + $0x408] sm:$0xff]
        %v330 = vld [vmem:[%s188 + $0x410] sm:$0xff]
        %v331 = vld [vmem:[%s188 + $0x418] sm:$0xff]
        %v332 = vld [vmem:[%s188 + $0x420] sm:$0xff]
        %v333 = vld [vmem:[%s188 + $0x428] sm:$0xff]
        %v334 = vld [vmem:[%s188 + $0x430] sm:$0xff]
        %v335 = vld [vmem:[%s188 + $0x438] sm:$0xff]
        %v336 = vld [vmem:[%s188 + $0x440] sm:$0xff]
        %v337 = vld [vmem:[%s188 + $0x448] sm:$0xff]
        %v338 = vld [vmem:[%s188 + $0x450] sm:$0xff]
        %v339 = vld [vmem:[%s188 + $0x458] sm:$0xff]
        %v340 = vld [vmem:[%s188 + $0x460] sm:$0xff]
        %v341 = vld [vmem:[%s188 + $0x468] sm:$0xff]
        %v342 = vld [vmem:[%s188 + $0x470] sm:$0xff]
        %v343 = vld [vmem:[%s188 + $0x478] sm:$0xff]
        %v344 = vld [vmem:[%s188 + $0x480] sm:$0xff]
        %v345 = vld [vmem:[%s188 + $0x488] sm:$0xff]
        %v346 = vld [vmem:[%s188 + $0x490] sm:$0xff]
        %v347 = vld [vmem:[%s188 + $0x498] sm:$0xff]
        %v348 = vld [vmem:[%s188 + $0x4a0] sm:$0xff]
        %v349 = vld [vmem:[%s188 + $0x4a8] sm:$0xff]
        %v350 = vld [vmem:[%s188 + $0x4b0] sm:$0xff]
        %v351 = vld [vmem:[%s188 + $0x4b8] sm:$0xff]
        %v352 = vld [vmem:[%s188 + $0x4c0] sm:$0xff]
        %v353 = vld [vmem:[%s188 + $0x4c8] sm:$0xff]
        %v354 = vld [vmem:[%s188 + $0x4d0] sm:$0xff]
        %v355 = vld [vmem:[%s188 + $0x4d8] sm:$0xff]
        %v356 = vld [vmem:[%s188 + $0x4e0] sm:$0xff]
        %v357 = vld [vmem:[%s188 + $0x4e8] sm:$0xff]
        %v358 = vld [vmem:[%s188 + $0x4f0] sm:$0xff]
        %v359 = vld [vmem:[%s188 + $0x4f8] sm:$0xff]
        %v360 = vld [vmem:[%s188 + $0x500] sm:$0xff]
        %v361 = vld [vmem:[%s188 + $0x508] sm:$0xff]
        %v362 = vld [vmem:[%s188 + $0x510] sm:$0xff]
        %v363 = vld [vmem:[%s188 + $0x518] sm:$0xff]
        %v364 = vld [vmem:[%s188 + $0x520] sm:$0xff]
        %v365 = vld [vmem:[%s188 + $0x528] sm:$0xff]
        %v366 = vld [vmem:[%s188 + $0x530] sm:$0xff]
        %v367 = vld [vmem:[%s188 + $0x538] sm:$0xff]
        %v368 = vld [vmem:[%s188 + $0x540] sm:$0xff]
        %v369 = vld [vmem:[%s188 + $0x548] sm:$0xff]
        %v370 = vld [vmem:[%s188 + $0x550] sm:$0xff]
        %v371 = vld [vmem:[%s188 + $0x558] sm:$0xff]
        %v372 = vld [vmem:[%s188 + $0x560] sm:$0xff]
        %v373 = vld [vmem:[%s188 + $0x568] sm:$0xff]
        %v374 = vld [vmem:[%s188 + $0x570] sm:$0xff]
        %v375 = vld [vmem:[%s188 + $0x578] sm:$0xff]
        %v376 = vld [vmem:[%s188 + $0x580] sm:$0xff]
        %v377 = vld [vmem:[%s188 + $0x588] sm:$0xff]
        %v378 = vld [vmem:[%s188 + $0x590] sm:$0xff]
        %v379 = vld [vmem:[%s188 + $0x598] sm:$0xff]
        %v380 = vld [vmem:[%s188 + $0x5a0] sm:$0xff]
        %v381 = vld [vmem:[%s188 + $0x5a8] sm:$0xff]
        %v382 = vld [vmem:[%s188 + $0x5b0] sm:$0xff]
        %v383 = vld [vmem:[%s188 + $0x5b8] sm:$0xff]
        %v384 = vld [vmem:[%s188 + $0x5c0] sm:$0xff]
        %v385 = vld [vmem:[%s188 + $0x5c8] sm:$0xff]
        %v386 = vld [vmem:[%s188 + $0x5d0] sm:$0xff]
        %v387 = vld [vmem:[%s188 + $0x5d8] sm:$0xff]
        %v388 = vld [vmem:[%s188 + $0x5e0] sm:$0xff]
        %v389 = vld [vmem:[%s188 + $0x5e8] sm:$0xff]
        %v390 = vld [vmem:[%s188 + $0x5f0] sm:$0xff]
        %v391 = vld [vmem:[%s188 + $0x5f8] sm:$0xff]
        %v392 = vld [vmem:[%s188 + $0x600] sm:$0xff]
        %v393 = vld [vmem:[%s188 + $0x608] sm:$0xff]
        %v394 = vld [vmem:[%s188 + $0x610] sm:$0xff]
        %v395 = vld [vmem:[%s188 + $0x618] sm:$0xff]
        %v396 = vld [vmem:[%s188 + $0x620] sm:$0xff]
        %v397 = vld [vmem:[%s188 + $0x628] sm:$0xff]
        %v398 = vld [vmem:[%s188 + $0x630] sm:$0xff]
        %v399 = vld [vmem:[%s188 + $0x638] sm:$0xff]
        %v400 = vld [vmem:[%s188 + $0x640] sm:$0xff]
        %v401 = vld [vmem:[%s188 + $0x648] sm:$0xff]
        %v402 = vld [vmem:[%s188 + $0x650] sm:$0xff]
        %v403 = vld [vmem:[%s188 + $0x658] sm:$0xff]
        %v404 = vld [vmem:[%s188 + $0x660] sm:$0xff]
        %v405 = vld [vmem:[%s188 + $0x668] sm:$0xff]
        %v406 = vld [vmem:[%s188 + $0x670] sm:$0xff]
        %v407 = vld [vmem:[%s188 + $0x678] sm:$0xff]
        %v408 = vld [vmem:[%s188 + $0x680] sm:$0xff]
        %v409 = vld [vmem:[%s188 + $0x688] sm:$0xff]
        %v410 = vld [vmem:[%s188 + $0x690] sm:$0xff]
        %v411 = vld [vmem:[%s188 + $0x698] sm:$0xff]
        %v412 = vld [vmem:[%s188 + $0x6a0] sm:$0xff]
        %v413 = vld [vmem:[%s188 + $0x6a8] sm:$0xff]
        %v414 = vld [vmem:[%s188 + $0x6b0] sm:$0xff]
        %v415 = vld [vmem:[%s188 + $0x6b8] sm:$0xff]
        %v416 = vld [vmem:[%s188 + $0x6c0] sm:$0xff]
        %v417 = vld [vmem:[%s188 + $0x6c8] sm:$0xff]
        %v418 = vld [vmem:[%s188 + $0x6d0] sm:$0xff]
        %v419 = vld [vmem:[%s188 + $0x6d8] sm:$0xff]
        %v420 = vld [vmem:[%s188 + $0x6e0] sm:$0xff]
        %v421 = vld [vmem:[%s188 + $0x6e8] sm:$0xff]
        %v422 = vld [vmem:[%s188 + $0x6f0] sm:$0xff]
        %v423 = vld [vmem:[%s188 + $0x6f8] sm:$0xff]
        %v424 = vld [vmem:[%s188 + $0x700] sm:$0xff]
        %v425 = vld [vmem:[%s188 + $0x708] sm:$0xff]
        %v426 = vld [vmem:[%s188 + $0x710] sm:$0xff]
        %v427 = vld [vmem:[%s188 + $0x718] sm:$0xff]
        %v428 = vld [vmem:[%s188 + $0x720] sm:$0xff]
        %v429 = vld [vmem:[%s188 + $0x728] sm:$0xff]
        %v430 = vld [vmem:[%s188 + $0x730] sm:$0xff]
        %v431 = vld [vmem:[%s188 + $0x738] sm:$0xff]
        %v432 = vld [vmem:[%s188 + $0x740] sm:$0xff]
        %v433 = vld [vmem:[%s188 + $0x748] sm:$0xff]
        %v434 = vld [vmem:[%s188 + $0x750] sm:$0xff]
        %v435 = vld [vmem:[%s188 + $0x758] sm:$0xff]
        %v436 = vld [vmem:[%s188 + $0x760] sm:$0xff]
        %v437 = vld [vmem:[%s188 + $0x768] sm:$0xff]
        %v438 = vld [vmem:[%s188 + $0x770] sm:$0xff]
        %v439 = vld [vmem:[%s188 + $0x778] sm:$0xff]
        %v440 = vld [vmem:[%s188 + $0x780] sm:$0xff]
        %v441 = vld [vmem:[%s188 + $0x788] sm:$0xff]
        %v442 = vld [vmem:[%s188 + $0x790] sm:$0xff]
        %v443 = vld [vmem:[%s188 + $0x798] sm:$0xff]
        %v444 = vld [vmem:[%s188 + $0x7a0] sm:$0xff]
        %v445 = vld [vmem:[%s188 + $0x7a8] sm:$0xff]
        %v446 = vld [vmem:[%s188 + $0x7b0] sm:$0xff]
        %v447 = vld [vmem:[%s188 + $0x7b8] sm:$0xff]
        %v448 = vld [vmem:[%s188 + $0x7c0] sm:$0xff]
        %v449 = vld [vmem:[%s188 + $0x7c8] sm:$0xff]
        %v450 = vld [vmem:[%s188 + $0x7d0] sm:$0xff]
        %v451 = vld [vmem:[%s188 + $0x7d8] sm:$0xff]
        %v452 = vld [vmem:[%s188 + $0x7e0] sm:$0xff]
        %v453 = vld [vmem:[%s188 + $0x7e8] sm:$0xff]
        %v454 = vld [vmem:[%s188 + $0x7f0] sm:$0xff]
        %v455 = vld [vmem:[%s188 + $0x7f8] sm:$0xff]
        %v456 = vld [vmem:[%s188 + $0x800] sm:$0xff]
        %v457 = vld [vmem:[%s188 + $0x808] sm:$0xff]
        %v458 = vld [vmem:[%s188 + $0x810] sm:$0xff]
        %v459 = vld [vmem:[%s188 + $0x818] sm:$0xff]
        %v460 = vld [vmem:[%s188 + $0x820] sm:$0xff]
        %v461 = vld [vmem:[%s188 + $0x828] sm:$0xff]
        %v462 = vld [vmem:[%s188 + $0x830] sm:$0xff]
        %v463 = vld [vmem:[%s188 + $0x838] sm:$0xff]
        %v464 = vld [vmem:[%s188 + $0x840] sm:$0xff]
        %v465 = vld [vmem:[%s188 + $0x848] sm:$0xff]
        %v466 = vld [vmem:[%s188 + $0x850] sm:$0xff]
        %v467 = vld [vmem:[%s188 + $0x858] sm:$0xff]
        %v468 = vld [vmem:[%s188 + $0x860] sm:$0xff]
        %v469 = vld [vmem:[%s188 + $0x868] sm:$0xff]
        %v470 = vld [vmem:[%s188 + $0x870] sm:$0xff]
        %v471 = vld [vmem:[%s188 + $0x878] sm:$0xff]
        %v472 = vld [vmem:[%s188 + $0x880] sm:$0xff]
        %v473 = vld [vmem:[%s188 + $0x888] sm:$0xff]
        %v474 = vld [vmem:[%s188 + $0x890] sm:$0xff]
        %v475 = vld [vmem:[%s188 + $0x898] sm:$0xff]
        %v476 = vld [vmem:[%s188 + $0x8a0] sm:$0xff]
        %v477 = vld [vmem:[%s188 + $0x8a8] sm:$0xff]
        %v478 = vld [vmem:[%s188 + $0x8b0] sm:$0xff]
        %v479 = vld [vmem:[%s188 + $0x8b8] sm:$0xff]
        %v480 = vld [vmem:[%s188 + $0x8c0] sm:$0xff]
        %v481 = vld [vmem:[%s188 + $0x8c8] sm:$0xff]
        %v482 = vld [vmem:[%s188 + $0x8d0] sm:$0xff]
        %v483 = vld [vmem:[%s188 + $0x8d8] sm:$0xff]
        %v484 = vld [vmem:[%s188 + $0x8e0] sm:$0xff]
        %v485 = vld [vmem:[%s188 + $0x8e8] sm:$0xff]
        %v486 = vld [vmem:[%s188 + $0x8f0] sm:$0xff]
        %v487 = vld [vmem:[%s188 + $0x8f8] sm:$0xff]
        %v488 = vld [vmem:[%s188 + $0x900] sm:$0xff]
        %v489 = vld [vmem:[%s188 + $0x908] sm:$0xff]
        %v490 = vld [vmem:[%s188 + $0x910] sm:$0xff]
        %v491 = vld [vmem:[%s188 + $0x918] sm:$0xff]
        %v492 = vld [vmem:[%s188 + $0x920] sm:$0xff]
        %v493 = vld [vmem:[%s188 + $0x928] sm:$0xff]
        %v494 = vld [vmem:[%s188 + $0x930] sm:$0xff]
        %v495 = vld [vmem:[%s188 + $0x938] sm:$0xff]
        %v496 = vld [vmem:[%s188 + $0x940] sm:$0xff]
        %v497 = vld [vmem:[%s188 + $0x948] sm:$0xff]
        %v498 = vld [vmem:[%s188 + $0x950] sm:$0xff]
        %v499 = vld [vmem:[%s188 + $0x958] sm:$0xff]
        %v500 = vld [vmem:[%s188 + $0x960] sm:$0xff]
        %v501 = vld [vmem:[%s188 + $0x968] sm:$0xff]
        %v502 = vld [vmem:[%s188 + $0x970] sm:$0xff]
        %v503 = vld [vmem:[%s188 + $0x978] sm:$0xff]
        %v504 = vld [vmem:[%s188 + $0x980] sm:$0xff]
        %v505 = vld [vmem:[%s188 + $0x988] sm:$0xff]
        %v506 = vld [vmem:[%s188 + $0x990] sm:$0xff]
        %v507 = vld [vmem:[%s188 + $0x998] sm:$0xff]
        %v508 = vld [vmem:[%s188 + $0x9a0] sm:$0xff]
        %v509 = vld [vmem:[%s188 + $0x9a8] sm:$0xff]
        %v510 = vld [vmem:[%s188 + $0x9b0] sm:$0xff]
        %v511 = vld [vmem:[%s188 + $0x9b8] sm:$0xff]
        %v512 = vld [vmem:[%s188 + $0x9c0] sm:$0xff]
        %v513 = vld [vmem:[%s188 + $0x9c8] sm:$0xff]
        %v514 = vld [vmem:[%s188 + $0x9d0] sm:$0xff]
        %v515 = vld [vmem:[%s188 + $0x9d8] sm:$0xff]
        %v516 = vld [vmem:[%s188 + $0x9e0] sm:$0xff]
        %v517 = vld [vmem:[%s188 + $0x9e8] sm:$0xff]
        %v518 = vld [vmem:[%s188 + $0x9f0] sm:$0xff]
        %v519 = vld [vmem:[%s188 + $0x9f8] sm:$0xff]
        %v520 = vld [vmem:[%s188 + $0xa00] sm:$0xff]
        %v521 = vld [vmem:[%s188 + $0xa08] sm:$0xff]
        %v522 = vld [vmem:[%s188 + $0xa10] sm:$0xff]
        %v523 = vld [vmem:[%s188 + $0xa18] sm:$0xff]
        %v524 = vld [vmem:[%s188 + $0xa20] sm:$0xff]
        %v525 = vld [vmem:[%s188 + $0xa28] sm:$0xff]
        %v526 = vld [vmem:[%s188 + $0xa30] sm:$0xff]
        %v527 = vld [vmem:[%s188 + $0xa38] sm:$0xff]
        %v528 = vld [vmem:[%s188 + $0xa40] sm:$0xff]
        %v529 = vld [vmem:[%s188 + $0xa48] sm:$0xff]
        %v530 = vld [vmem:[%s188 + $0xa50] sm:$0xff]
        %v531 = vld [vmem:[%s188 + $0xa58] sm:$0xff]
        %v532 = vld [vmem:[%s188 + $0xa60] sm:$0xff]
        %v533 = vld [vmem:[%s188 + $0xa68] sm:$0xff]
        %v534 = vld [vmem:[%s188 + $0xa70] sm:$0xff]
        %v535 = vld [vmem:[%s188 + $0xa78] sm:$0xff]
        %v536 = vld [vmem:[%s188 + $0xa80] sm:$0xff]
        %v537 = vld [vmem:[%s188 + $0xa88] sm:$0xff]
        %v538 = vld [vmem:[%s188 + $0xa90] sm:$0xff]
        %v539 = vld [vmem:[%s188 + $0xa98] sm:$0xff]
        %v540 = vld [vmem:[%s188 + $0xaa0] sm:$0xff]
        %v541 = vld [vmem:[%s188 + $0xaa8] sm:$0xff]
        %v542 = vld [vmem:[%s188 + $0xab0] sm:$0xff]
        %v543 = vld [vmem:[%s188 + $0xab8] sm:$0xff]
        %v544 = vld [vmem:[%s188 + $0xac0] sm:$0xff]
        %v545 = vld [vmem:[%s188 + $0xac8] sm:$0xff]
        %v546 = vld [vmem:[%s188 + $0xad0] sm:$0xff]
        %v547 = vld [vmem:[%s188 + $0xad8] sm:$0xff]
        %v548 = vld [vmem:[%s188 + $0xae0] sm:$0xff]
        %v549 = vld [vmem:[%s188 + $0xae8] sm:$0xff]
        %v550 = vld [vmem:[%s188 + $0xaf0] sm:$0xff]
        %v551 = vld [vmem:[%s188 + $0xaf8] sm:$0xff]
        %v552 = vld [vmem:[%s188 + $0xb00] sm:$0xff]
        %v553 = vld [vmem:[%s188 + $0xb08] sm:$0xff]
        %v554 = vld [vmem:[%s188 + $0xb10] sm:$0xff]
        %v555 = vld [vmem:[%s188 + $0xb18] sm:$0xff]
        %v556 = vld [vmem:[%s188 + $0xb20] sm:$0xff]
        %v557 = vld [vmem:[%s188 + $0xb28] sm:$0xff]
        %v558 = vld [vmem:[%s188 + $0xb30] sm:$0xff]
        %v559 = vld [vmem:[%s188 + $0xb38] sm:$0xff]
        %v560 = vld [vmem:[%s188 + $0xb40] sm:$0xff]
        %v561 = vld [vmem:[%s188 + $0xb48] sm:$0xff]
        %v562 = vld [vmem:[%s188 + $0xb50] sm:$0xff]
        %v563 = vld [vmem:[%s188 + $0xb58] sm:$0xff]
        %v564 = vld [vmem:[%s188 + $0xb60] sm:$0xff]
        %v565 = vld [vmem:[%s188 + $0xb68] sm:$0xff]
        %v566 = vld [vmem:[%s188 + $0xb70] sm:$0xff]
        %v567 = vld [vmem:[%s188 + $0xb78] sm:$0xff]
        %v568 = vld [vmem:[%s188 + $0xb80] sm:$0xff]
        %v569 = vld [vmem:[%s188 + $0xb88] sm:$0xff]
        %v570 = vld [vmem:[%s188 + $0xb90] sm:$0xff]
        %v571 = vld [vmem:[%s188 + $0xb98] sm:$0xff]
        %v572 = vld [vmem:[%s188 + $0xba0] sm:$0xff]
        %v573 = vld [vmem:[%s188 + $0xba8] sm:$0xff]
        %v574 = vld [vmem:[%s188 + $0xbb0] sm:$0xff]
        %v575 = vld [vmem:[%s188 + $0xbb8] sm:$0xff]
        %v576 = vld [vmem:[%s188 + $0xbc0] sm:$0xff]
        %v577 = vld [vmem:[%s188 + $0xbc8] sm:$0xff]
        %v578 = vld [vmem:[%s188 + $0xbd0] sm:$0xff]
        %v579 = vld [vmem:[%s188 + $0xbd8] sm:$0xff]
        %v580 = vld [vmem:[%s188 + $0xbe0] sm:$0xff]
        %v581 = vld [vmem:[%s188 + $0xbe8] sm:$0xff]
        %v582 = vld [vmem:[%s188 + $0xbf0] sm:$0xff]
        %v583 = vld [vmem:[%s188 + $0xbf8] sm:$0xff]
        %v584 = vld [vmem:[%s188 + $0xc00] sm:$0xff]
        %v585 = vld [vmem:[%s188 + $0xc08] sm:$0xff]
        %v586 = vld [vmem:[%s188 + $0xc10] sm:$0xff]
        %v587 = vld [vmem:[%s188 + $0xc18] sm:$0xff]
        %v588 = vld [vmem:[%s188 + $0xc20] sm:$0xff]
        %v589 = vld [vmem:[%s188 + $0xc28] sm:$0xff]
        %v590 = vld [vmem:[%s188 + $0xc30] sm:$0xff]
        %v591 = vld [vmem:[%s188 + $0xc38] sm:$0xff]
        %v592 = vld [vmem:[%s188 + $0xc40] sm:$0xff]
        %v593 = vld [vmem:[%s188 + $0xc48] sm:$0xff]
        %v594 = vld [vmem:[%s188 + $0xc50] sm:$0xff]
        %v595 = vld [vmem:[%s188 + $0xc58] sm:$0xff]
        %v596 = vld [vmem:[%s188 + $0xc60] sm:$0xff]
        %v597 = vld [vmem:[%s188 + $0xc68] sm:$0xff]
        %v598 = vld [vmem:[%s188 + $0xc70] sm:$0xff]
        %v599 = vld [vmem:[%s188 + $0xc78] sm:$0xff]
        %v600 = vld [vmem:[%s188 + $0xc80] sm:$0xff]
        %v601 = vld [vmem:[%s188 + $0xc88] sm:$0xff]
        %v602 = vld [vmem:[%s188 + $0xc90] sm:$0xff]
        %v603 = vld [vmem:[%s188 + $0xc98] sm:$0xff]
        %v604 = vld [vmem:[%s188 + $0xca0] sm:$0xff]
        %v605 = vld [vmem:[%s188 + $0xca8] sm:$0xff]
        %v606 = vld [vmem:[%s188 + $0xcb0] sm:$0xff]
        %v607 = vld [vmem:[%s188 + $0xcb8] sm:$0xff]
        %v608 = vld [vmem:[%s188 + $0xcc0] sm:$0xff]
        %v609 = vld [vmem:[%s188 + $0xcc8] sm:$0xff]
        %v610 = vld [vmem:[%s188 + $0xcd0] sm:$0xff]
        %v611 = vld [vmem:[%s188 + $0xcd8] sm:$0xff]
        %v612 = vld [vmem:[%s188 + $0xce0] sm:$0xff]
        %v613 = vld [vmem:[%s188 + $0xce8] sm:$0xff]
        %v614 = vld [vmem:[%s188 + $0xcf0] sm:$0xff]
        %v615 = vld [vmem:[%s188 + $0xcf8] sm:$0xff]
        %v616 = vld [vmem:[%s188 + $0xd00] sm:$0xff]
        %v617 = vld [vmem:[%s188 + $0xd08] sm:$0xff]
        %v618 = vld [vmem:[%s188 + $0xd10] sm:$0xff]
        %v619 = vld [vmem:[%s188 + $0xd18] sm:$0xff]
        %v620 = vld [vmem:[%s188 + $0xd20] sm:$0xff]
        %v621 = vld [vmem:[%s188 + $0xd28] sm:$0xff]
        %v622 = vld [vmem:[%s188 + $0xd30] sm:$0xff]
        %v623 = vld [vmem:[%s188 + $0xd38] sm:$0xff]
        %v624 = vld [vmem:[%s188 + $0xd40] sm:$0xff]
        %v625 = vld [vmem:[%s188 + $0xd48] sm:$0xff]
        %v626 = vld [vmem:[%s188 + $0xd50] sm:$0xff]
        %v627 = vld [vmem:[%s188 + $0xd58] sm:$0xff]
        %v628 = vld [vmem:[%s188 + $0xd60] sm:$0xff]
        %v629 = vld [vmem:[%s188 + $0xd68] sm:$0xff]
        %v630 = vld [vmem:[%s188 + $0xd70] sm:$0xff]
        %v631 = vld [vmem:[%s188 + $0xd78] sm:$0xff]
        %v632 = vld [vmem:[%s188 + $0xd80] sm:$0xff]
        %v633 = vld [vmem:[%s188 + $0xd88] sm:$0xff]
        %v634 = vld [vmem:[%s188 + $0xd90] sm:$0xff]
        %v635 = vld [vmem:[%s188 + $0xd98] sm:$0xff]
        %v636 = vld [vmem:[%s188 + $0xda0] sm:$0xff]
        %v637 = vld [vmem:[%s188 + $0xda8] sm:$0xff]
        %v638 = vld [vmem:[%s188 + $0xdb0] sm:$0xff]
        %v639 = vld [vmem:[%s188 + $0xdb8] sm:$0xff]
        %v640 = vld [vmem:[%s188 + $0xdc0] sm:$0xff]
        %v641 = vld [vmem:[%s1] sm:$0xff]
        %v642 = vld [vmem:[%s1 + $0x8] sm:$0xff]
        %v643 = vld [vmem:[%s1 + $0x10] sm:$0xff]
        %v644 = vld [vmem:[%s1 + $0x18] sm:$0xff]
        %v645 = vld [vmem:[%s1 + $0x20] sm:$0xff]
        %v646 = vld [vmem:[%s1 + $0x28] sm:$0xff]
        %v647 = vld [vmem:[%s1 + $0x30] sm:$0xff]
        %v648 = vld [vmem:[%s1 + $0x38] sm:$0xff]
        %v649 = vld [vmem:[%s1 + $0x40] sm:$0xff]
        %v650 = vld [vmem:[%s1 + $0x48] sm:$0xff]
        %v651 = vld [vmem:[%s1 + $0x50] sm:$0xff]
        %v652 = vld [vmem:[%s1 + $0x58] sm:$0xff]
        %v653 = vld [vmem:[%s1 + $0x60] sm:$0xff]
        %v654 = vld [vmem:[%s1 + $0x68] sm:$0xff]
        %v655 = vld [vmem:[%s1 + $0x70] sm:$0xff]
        %v656 = vld [vmem:[%s1 + $0x78] sm:$0xff]
        %v657 = vld [vmem:[%s1 + $0x80] sm:$0xff]
        %v658 = vld [vmem:[%s1 + $0x88] sm:$0xff]
        %v659 = vld [vmem:[%s1 + $0x90] sm:$0xff]
        %v660 = vld [vmem:[%s1 + $0x98] sm:$0xff]
        %v661 = vld [vmem:[%s1 + $0xa0] sm:$0xff]
        %v662 = vld [vmem:[%s1 + $0xa8] sm:$0xff]
        %v663 = vld [vmem:[%s1 + $0xb0] sm:$0xff]
        %v664 = vld [vmem:[%s1 + $0xb8] sm:$0xff]
        %v665 = vld [vmem:[%s1 + $0xc0] sm:$0xff]
        %v666 = vld [vmem:[%s1 + $0xc8] sm:$0xff]
        %v667 = vld [vmem:[%s1 + $0xd0] sm:$0xff]
        %v668 = vld [vmem:[%s1 + $0xd8] sm:$0xff]
        %v669 = vld [vmem:[%s1 + $0xe0] sm:$0xff]
        %v670 = vld [vmem:[%s1 + $0xe8] sm:$0xff]
        %v671 = vld [vmem:[%s1 + $0xf0] sm:$0xff]
        %v672 = vld [vmem:[%s1 + $0xf8] sm:$0xff]
        %v673 = vld [vmem:[%s1 + $0x100] sm:$0xff]
        %v674 = vld [vmem:[%s1 + $0x108] sm:$0xff]
        %v675 = vld [vmem:[%s1 + $0x110] sm:$0xff]
        %v676 = vld [vmem:[%s1 + $0x118] sm:$0xff]
        %v677 = vld [vmem:[%s1 + $0x120] sm:$0xff]
        %v678 = vld [vmem:[%s1 + $0x128] sm:$0xff]
        %v679 = vld [vmem:[%s1 + $0x130] sm:$0xff]
        %v680 = vld [vmem:[%s1 + $0x138] sm:$0xff]
        %v681 = vld [vmem:[%s1 + $0x140] sm:$0xff]
        %v682 = vld [vmem:[%s1 + $0x148] sm:$0xff]
        %v683 = vld [vmem:[%s1 + $0x150] sm:$0xff]
        %v684 = vld [vmem:[%s1 + $0x158] sm:$0xff]
        %v685 = vld [vmem:[%s1 + $0x160] sm:$0xff]
        %v686 = vld [vmem:[%s1 + $0x168] sm:$0xff]
        %v687 = vld [vmem:[%s1 + $0x170] sm:$0xff]
        %v688 = vld [vmem:[%s1 + $0x178] sm:$0xff]
        %v689 = vld [vmem:[%s1 + $0x180] sm:$0xff]
        %v690 = vld [vmem:[%s1 + $0x188] sm:$0xff]
        %v691 = vld [vmem:[%s1 + $0x190] sm:$0xff]
        %v692 = vld [vmem:[%s1 + $0x198] sm:$0xff]
        %v693 = vld [vmem:[%s1 + $0x1a0] sm:$0xff]
        %v694 = vld [vmem:[%s1 + $0x1a8] sm:$0xff]
        %v695 = vld [vmem:[%s1 + $0x1b0] sm:$0xff]
        %v696 = vld [vmem:[%s1 + $0x1b8] sm:$0xff]
        %v697 = vld [vmem:[%s1 + $0x1c0] sm:$0xff]
        %v698 = vld [vmem:[%s1 + $0x1c8] sm:$0xff]
        %v699 = vld [vmem:[%s1 + $0x1d0] sm:$0xff]
        %v700 = vld [vmem:[%s1 + $0x1d8] sm:$0xff]
        %v701 = vld [vmem:[%s1 + $0x1e0] sm:$0xff]
        %v702 = vld [vmem:[%s1 + $0x1e8] sm:$0xff]
        %v703 = vld [vmem:[%s1 + $0x1f0] sm:$0xff]
        %v704 = vld [vmem:[%s1 + $0x1f8] sm:$0xff]
        %v705 = vld [vmem:[%s1 + $0x200] sm:$0xff]
        %v706 = vld [vmem:[%s1 + $0x208] sm:$0xff]
        %v707 = vld [vmem:[%s1 + $0x210] sm:$0xff]
        %v708 = vld [vmem:[%s1 + $0x218] sm:$0xff]
        %v709 = vld [vmem:[%s1 + $0x220] sm:$0xff]
        %v710 = vld [vmem:[%s1 + $0x228] sm:$0xff]
        %v711 = vld [vmem:[%s1 + $0x230] sm:$0xff]
        %v712 = vld [vmem:[%s1 + $0x238] sm:$0xff]
        %v713 = vld [vmem:[%s1 + $0x240] sm:$0xff]
        %v714 = vld [vmem:[%s1 + $0x248] sm:$0xff]
        %v715 = vld [vmem:[%s1 + $0x250] sm:$0xff]
        %v716 = vld [vmem:[%s1 + $0x258] sm:$0xff]
        %v717 = vld [vmem:[%s1 + $0x260] sm:$0xff]
        %v718 = vld [vmem:[%s1 + $0x268] sm:$0xff]
        %v719 = vld [vmem:[%s1 + $0x270] sm:$0xff]
        %v720 = vld [vmem:[%s1 + $0x278] sm:$0xff]
        %v721 = vld [vmem:[%s1 + $0x280] sm:$0xff]
        %v722 = vld [vmem:[%s1 + $0x288] sm:$0xff]
        %v723 = vld [vmem:[%s1 + $0x290] sm:$0xff]
        %v724 = vld [vmem:[%s1 + $0x298] sm:$0xff]
        %v725 = vld [vmem:[%s1 + $0x2a0] sm:$0xff]
        %v726 = vld [vmem:[%s1 + $0x2a8] sm:$0xff]
        %v727 = vld [vmem:[%s1 + $0x2b0] sm:$0xff]
        %v728 = vld [vmem:[%s1 + $0x2b8] sm:$0xff]
        %v729 = vld [vmem:[%s1 + $0x2c0] sm:$0xff]
        %v730 = vld [vmem:[%s1 + $0x2c8] sm:$0xff]
        %v731 = vld [vmem:[%s1 + $0x2d0] sm:$0xff]
        %v732 = vld [vmem:[%s1 + $0x2d8] sm:$0xff]
        %v733 = vld [vmem:[%s1 + $0x2e0] sm:$0xff]
        %v734 = vld [vmem:[%s1 + $0x2e8] sm:$0xff]
        %v735 = vld [vmem:[%s1 + $0x2f0] sm:$0xff]
        %v736 = vld [vmem:[%s1 + $0x2f8] sm:$0xff]
        %v737 = vld [vmem:[%s1 + $0x300] sm:$0xff]
        %v738 = vld [vmem:[%s1 + $0x308] sm:$0xff]
        %v739 = vld [vmem:[%s2] sm:$0x1]
        %v741 = vperm.slane %v739, 0
        %vm743 = vcmask 130048
        %v745 = vsel %vm743, %v206, 0
        %v748 = vsel %vm743, %v213, 0
        %v751 = vsel %vm743, %v220, 0
        %v754 = vsel %vm743, %v227, 0
        %v757 = vsel %vm743, %v234, 0
        %v760 = vsel %vm743, %v241, 0
        %v763 = vsel %vm743, %v248, 0
        %v766 = vsel %vm743, %v255, 0
        %v769 = vsel %vm743, %v262, 0
        %v772 = vsel %vm743, %v269, 0
        %v775 = vsel %vm743, %v276, 0
        %v778 = vsel %vm743, %v283, 0
        %v781 = vsel %vm743, %v290, 0
        %v784 = vsel %vm743, %v297, 0
        %v787 = vsel %vm743, %v304, 0
        %v790 = vsel %vm743, %v311, 0
        %v793 = vsel %vm743, %v318, 0
        %v796 = vsel %vm743, %v325, 0
        %v799 = vsel %vm743, %v332, 0
        %v802 = vsel %vm743, %v339, 0
        %v805 = vsel %vm743, %v346, 0
        %v808 = vsel %vm743, %v353, 0
        %v811 = vsel %vm743, %v360, 0
        %v814 = vsel %vm743, %v367, 0
        %v817 = vsel %vm743, %v374, 0
        %v820 = vsel %vm743, %v381, 0
        %v823 = vsel %vm743, %v388, 0
        %v826 = vsel %vm743, %v395, 0
        %v829 = vsel %vm743, %v402, 0
        %v832 = vsel %vm743, %v409, 0
        %v835 = vsel %vm743, %v416, 0
        %v838 = vsel %vm743, %v423, 0
        %v841 = vsel %vm743, %v430, 0
        %v844 = vsel %vm743, %v437, 0
        %v847 = vsel %vm743, %v444, 0
        %v850 = vsel %vm743, %v451, 0
        %v853 = vsel %vm743, %v458, 0
        %v856 = vsel %vm743, %v465, 0
        %v859 = vsel %vm743, %v472, 0
        %v862 = vsel %vm743, %v479, 0
        %v865 = vsel %vm743, %v486, 0
        %v868 = vsel %vm743, %v493, 0
        %v871 = vsel %vm743, %v500, 0
        %v874 = vsel %vm743, %v507, 0
        %v877 = vsel %vm743, %v514, 0
        %v880 = vsel %vm743, %v521, 0
        %v883 = vsel %vm743, %v528, 0
        %v886 = vsel %vm743, %v535, 0
        %v889 = vsel %vm743, %v542, 0
        %v892 = vsel %vm743, %v549, 0
        %v895 = vsel %vm743, %v556, 0
        %v898 = vsel %vm743, %v563, 0
        %v901 = vsel %vm743, %v570, 0
        %v904 = vsel %vm743, %v577, 0
        %v907 = vsel %vm743, %v584, 0
        %v910 = vsel %vm743, %v591, 0
        %v913 = vsel %vm743, %v598, 0
        %v916 = vsel %vm743, %v605, 0
        %v919 = vsel %vm743, %v612, 0
        %v922 = vsel %vm743, %v619, 0
        %v925 = vsel %vm743, %v626, 0
        %v928 = vsel %vm743, %v633, 0
        %v931 = vsel %vm743, %v640, 0
        %933 = vmatpush.msra.mxu0 %v656
        %934 = vmatpush.msra.mxu0 %v655
        %935 = vmatpush.msra.mxu0 %v654
        %936 = vmatpush.msra.mxu0 %v653
        %937 = vmatpush.msra.mxu0 %v652
        %938 = vmatpush.msra.mxu0 %v651
        %939 = vmatpush.msra.mxu0 %v650
        %940 = vmatpush.msra.mxu0 %v649
        %941 = vmatpush.msra.mxu0 %v648
        %942 = vmatpush.msra.mxu0 %v647
        %943 = vmatpush.msra.mxu0 %v646
        %944 = vmatpush.msra.mxu0 %v645
        %945 = vmatpush.msra.mxu0 %v644
        %946 = vmatpush.msra.mxu0 %v643
        %947 = vmatpush.msra.mxu0 %v642
        %948 = vmatpush.msra.mxu0 %v641
        %949 = vmatmul.f32.gmra.mxu0 %v200
        %v950 = vpop.f32.mrf.mxu0
        %v951 = vadd.f32 %v741, %v950
        %952 = vmatmul.f32.gmra.mxu0 %v207
        %v953 = vpop.f32.mrf.mxu0
        %v954 = vadd.f32 %v741, %v953
        %955 = vmatmul.f32.gmra.mxu0 %v214
        %v956 = vpop.f32.mrf.mxu0
        %v957 = vadd.f32 %v741, %v956
        %958 = vmatmul.f32.gmra.mxu0 %v221
        %v959 = vpop.f32.mrf.mxu0
        %v960 = vadd.f32 %v741, %v959
        %961 = vmatmul.f32.gmra.mxu0 %v228
        %v962 = vpop.f32.mrf.mxu0
        %v963 = vadd.f32 %v741, %v962
        %964 = vmatmul.f32.gmra.mxu0 %v235
        %v965 = vpop.f32.mrf.mxu0
        %v966 = vadd.f32 %v741, %v965
        %967 = vmatmul.f32.gmra.mxu0 %v242
        %v968 = vpop.f32.mrf.mxu0
        %v969 = vadd.f32 %v741, %v968
        %970 = vmatmul.f32.gmra.mxu0 %v249
        %v971 = vpop.f32.mrf.mxu0
        %v972 = vadd.f32 %v741, %v971
        %973 = vmatmul.f32.gmra.mxu0 %v256
        %v974 = vpop.f32.mrf.mxu0
        %v975 = vadd.f32 %v741, %v974
        %976 = vmatmul.f32.gmra.mxu0 %v263
        %v977 = vpop.f32.mrf.mxu0
        %v978 = vadd.f32 %v741, %v977
        %979 = vmatmul.f32.gmra.mxu0 %v270
        %v980 = vpop.f32.mrf.mxu0
        %v981 = vadd.f32 %v741, %v980
        %982 = vmatmul.f32.gmra.mxu0 %v277
        %v983 = vpop.f32.mrf.mxu0
        %v984 = vadd.f32 %v741, %v983
        %985 = vmatmul.f32.gmra.mxu0 %v284
        %v986 = vpop.f32.mrf.mxu0
        %v987 = vadd.f32 %v741, %v986
        %988 = vmatmul.f32.gmra.mxu0 %v291
        %v989 = vpop.f32.mrf.mxu0
        %v990 = vadd.f32 %v741, %v989
        %991 = vmatmul.f32.gmra.mxu0 %v298
        %v992 = vpop.f32.mrf.mxu0
        %v993 = vadd.f32 %v741, %v992
        %994 = vmatmul.f32.gmra.mxu0 %v305
        %v995 = vpop.f32.mrf.mxu0
        %v996 = vadd.f32 %v741, %v995
        %997 = vmatmul.f32.gmra.mxu0 %v312
        %v998 = vpop.f32.mrf.mxu0
        %v999 = vadd.f32 %v741, %v998
        %1000 = vmatmul.f32.gmra.mxu0 %v319
        %v1001 = vpop.f32.mrf.mxu0
        %v1002 = vadd.f32 %v741, %v1001
        %1003 = vmatmul.f32.gmra.mxu0 %v326
        %v1004 = vpop.f32.mrf.mxu0
        %v1005 = vadd.f32 %v741, %v1004
        %1006 = vmatmul.f32.gmra.mxu0 %v333
        %v1007 = vpop.f32.mrf.mxu0
        %v1008 = vadd.f32 %v741, %v1007
        %1009 = vmatmul.f32.gmra.mxu0 %v340
        %v1010 = vpop.f32.mrf.mxu0
        %v1011 = vadd.f32 %v741, %v1010
        %1012 = vmatmul.f32.gmra.mxu0 %v347
        %v1013 = vpop.f32.mrf.mxu0
        %v1014 = vadd.f32 %v741, %v1013
        %1015 = vmatmul.f32.gmra.mxu0 %v354
        %v1016 = vpop.f32.mrf.mxu0
        %v1017 = vadd.f32 %v741, %v1016
        %1018 = vmatmul.f32.gmra.mxu0 %v361
        %v1019 = vpop.f32.mrf.mxu0
        %v1020 = vadd.f32 %v741, %v1019
        %1021 = vmatmul.f32.gmra.mxu0 %v368
        %v1022 = vpop.f32.mrf.mxu0
        %v1023 = vadd.f32 %v741, %v1022
        %1024 = vmatmul.f32.gmra.mxu0 %v375
        %v1025 = vpop.f32.mrf.mxu0
        %v1026 = vadd.f32 %v741, %v1025
        %1027 = vmatmul.f32.gmra.mxu0 %v382
        %v1028 = vpop.f32.mrf.mxu0
        %v1029 = vadd.f32 %v741, %v1028
        %1030 = vmatmul.f32.gmra.mxu0 %v389
        %v1031 = vpop.f32.mrf.mxu0
        %v1032 = vadd.f32 %v741, %v1031
        %1033 = vmatmul.f32.gmra.mxu0 %v396
        %v1034 = vpop.f32.mrf.mxu0
        %v1035 = vadd.f32 %v741, %v1034
        %1036 = vmatmul.f32.gmra.mxu0 %v403
        %v1037 = vpop.f32.mrf.mxu0
        %v1038 = vadd.f32 %v741, %v1037
        %1039 = vmatmul.f32.gmra.mxu0 %v410
        %v1040 = vpop.f32.mrf.mxu0
        %v1041 = vadd.f32 %v741, %v1040
        %1042 = vmatmul.f32.gmra.mxu0 %v417
        %v1043 = vpop.f32.mrf.mxu0
        %v1044 = vadd.f32 %v741, %v1043
        %1045 = vmatmul.f32.gmra.mxu0 %v424
        %v1046 = vpop.f32.mrf.mxu0
        %v1047 = vadd.f32 %v741, %v1046
        %1048 = vmatmul.f32.gmra.mxu0 %v431
        %v1049 = vpop.f32.mrf.mxu0
        %v1050 = vadd.f32 %v741, %v1049
        %1051 = vmatmul.f32.gmra.mxu0 %v438
        %v1052 = vpop.f32.mrf.mxu0
        %v1053 = vadd.f32 %v741, %v1052
        %1054 = vmatmul.f32.gmra.mxu0 %v445
        %v1055 = vpop.f32.mrf.mxu0
        %v1056 = vadd.f32 %v741, %v1055
        %1057 = vmatmul.f32.gmra.mxu0 %v452
        %v1058 = vpop.f32.mrf.mxu0
        %v1059 = vadd.f32 %v741, %v1058
        %1060 = vmatmul.f32.gmra.mxu0 %v459
        %v1061 = vpop.f32.mrf.mxu0
        %v1062 = vadd.f32 %v741, %v1061
        %1063 = vmatmul.f32.gmra.mxu0 %v466
        %v1064 = vpop.f32.mrf.mxu0
        %v1065 = vadd.f32 %v741, %v1064
        %1066 = vmatmul.f32.gmra.mxu0 %v473
        %v1067 = vpop.f32.mrf.mxu0
        %v1068 = vadd.f32 %v741, %v1067
        %1069 = vmatmul.f32.gmra.mxu0 %v480
        %v1070 = vpop.f32.mrf.mxu0
        %v1071 = vadd.f32 %v741, %v1070
        %1072 = vmatmul.f32.gmra.mxu0 %v487
        %v1073 = vpop.f32.mrf.mxu0
        %v1074 = vadd.f32 %v741, %v1073
        %1075 = vmatmul.f32.gmra.mxu0 %v494
        %v1076 = vpop.f32.mrf.mxu0
        %v1077 = vadd.f32 %v741, %v1076
        %1078 = vmatmul.f32.gmra.mxu0 %v501
        %v1079 = vpop.f32.mrf.mxu0
        %v1080 = vadd.f32 %v741, %v1079
        %1081 = vmatmul.f32.gmra.mxu0 %v508
        %v1082 = vpop.f32.mrf.mxu0
        %v1083 = vadd.f32 %v741, %v1082
        %1084 = vmatmul.f32.gmra.mxu0 %v515
        %v1085 = vpop.f32.mrf.mxu0
        %v1086 = vadd.f32 %v741, %v1085
        %1087 = vmatmul.f32.gmra.mxu0 %v522
        %v1088 = vpop.f32.mrf.mxu0
        %v1089 = vadd.f32 %v741, %v1088
        %1090 = vmatmul.f32.gmra.mxu0 %v529
        %v1091 = vpop.f32.mrf.mxu0
        %v1092 = vadd.f32 %v741, %v1091
        %1093 = vmatmul.f32.gmra.mxu0 %v536
        %v1094 = vpop.f32.mrf.mxu0
        %v1095 = vadd.f32 %v741, %v1094
        %1096 = vmatmul.f32.gmra.mxu0 %v543
        %v1097 = vpop.f32.mrf.mxu0
        %v1098 = vadd.f32 %v741, %v1097
        %1099 = vmatmul.f32.gmra.mxu0 %v550
        %v1100 = vpop.f32.mrf.mxu0
        %v1101 = vadd.f32 %v741, %v1100
        %1102 = vmatmul.f32.gmra.mxu0 %v557
        %v1103 = vpop.f32.mrf.mxu0
        %v1104 = vadd.f32 %v741, %v1103
        %1105 = vmatmul.f32.gmra.mxu0 %v564
        %v1106 = vpop.f32.mrf.mxu0
        %v1107 = vadd.f32 %v741, %v1106
        %1108 = vmatmul.f32.gmra.mxu0 %v571
        %v1109 = vpop.f32.mrf.mxu0
        %v1110 = vadd.f32 %v741, %v1109
        %1111 = vmatmul.f32.gmra.mxu0 %v578
        %v1112 = vpop.f32.mrf.mxu0
        %v1113 = vadd.f32 %v741, %v1112
        %1114 = vmatmul.f32.gmra.mxu0 %v585
        %v1115 = vpop.f32.mrf.mxu0
        %v1116 = vadd.f32 %v741, %v1115
        %1117 = vmatmul.f32.gmra.mxu0 %v592
        %v1118 = vpop.f32.mrf.mxu0
        %v1119 = vadd.f32 %v741, %v1118
        %1120 = vmatmul.f32.gmra.mxu0 %v599
        %v1121 = vpop.f32.mrf.mxu0
        %v1122 = vadd.f32 %v741, %v1121
        %1123 = vmatmul.f32.gmra.mxu0 %v606
        %v1124 = vpop.f32.mrf.mxu0
        %v1125 = vadd.f32 %v741, %v1124
        %1126 = vmatmul.f32.gmra.mxu0 %v613
        %v1127 = vpop.f32.mrf.mxu0
        %v1128 = vadd.f32 %v741, %v1127
        %1129 = vmatmul.f32.gmra.mxu0 %v620
        %v1130 = vpop.f32.mrf.mxu0
        %v1131 = vadd.f32 %v741, %v1130
        %1132 = vmatmul.f32.gmra.mxu0 %v627
        %v1133 = vpop.f32.mrf.mxu0
        %v1134 = vadd.f32 %v741, %v1133
        %1135 = vmatmul.f32.gmra.mxu0 %v634
        %v1136 = vpop.f32.mrf.mxu0
        %v1137 = vadd.f32 %v741, %v1136
        %1138 = vdwg.mxu0
        %1139 = vmatpush.msra.mxu0 %v672
        %1140 = vmatpush.msra.mxu0 %v671
        %1141 = vmatpush.msra.mxu0 %v670
        %1142 = vmatpush.msra.mxu0 %v669
        %1143 = vmatpush.msra.mxu0 %v668
        %1144 = vmatpush.msra.mxu0 %v667
        %1145 = vmatpush.msra.mxu0 %v666
        %1146 = vmatpush.msra.mxu0 %v665
        %1147 = vmatpush.msra.mxu0 %v664
        %1148 = vmatpush.msra.mxu0 %v663
        %1149 = vmatpush.msra.mxu0 %v662
        %1150 = vmatpush.msra.mxu0 %v661
        %1151 = vmatpush.msra.mxu0 %v660
        %1152 = vmatpush.msra.mxu0 %v659
        %1153 = vmatpush.msra.mxu0 %v658
        %1154 = vmatpush.msra.mxu0 %v657
        %1155 = vmatmul.f32.gmra.mxu0 %v201
        %v1156 = vpop.f32.mrf.mxu0
        %v1157 = vadd.f32 %v951, %v1156
        %1158 = vmatmul.f32.gmra.mxu0 %v208
        %v1159 = vpop.f32.mrf.mxu0
        %v1160 = vadd.f32 %v954, %v1159
        %1161 = vmatmul.f32.gmra.mxu0 %v215
        %v1162 = vpop.f32.mrf.mxu0
        %v1163 = vadd.f32 %v957, %v1162
        %1164 = vmatmul.f32.gmra.mxu0 %v222
        %v1165 = vpop.f32.mrf.mxu0
        %v1166 = vadd.f32 %v960, %v1165
        %1167 = vmatmul.f32.gmra.mxu0 %v229
        %v1168 = vpop.f32.mrf.mxu0
        %v1169 = vadd.f32 %v963, %v1168
        %1170 = vmatmul.f32.gmra.mxu0 %v236
        %v1171 = vpop.f32.mrf.mxu0
        %v1172 = vadd.f32 %v966, %v1171
        %1173 = vmatmul.f32.gmra.mxu0 %v243
        %v1174 = vpop.f32.mrf.mxu0
        %v1175 = vadd.f32 %v969, %v1174
        %1176 = vmatmul.f32.gmra.mxu0 %v250
        %v1177 = vpop.f32.mrf.mxu0
        %v1178 = vadd.f32 %v972, %v1177
        %1179 = vmatmul.f32.gmra.mxu0 %v257
        %v1180 = vpop.f32.mrf.mxu0
        %v1181 = vadd.f32 %v975, %v1180
        %1182 = vmatmul.f32.gmra.mxu0 %v264
        %v1183 = vpop.f32.mrf.mxu0
        %v1184 = vadd.f32 %v978, %v1183
        %1185 = vmatmul.f32.gmra.mxu0 %v271
        %v1186 = vpop.f32.mrf.mxu0
        %v1187 = vadd.f32 %v981, %v1186
        %1188 = vmatmul.f32.gmra.mxu0 %v278
        %v1189 = vpop.f32.mrf.mxu0
        %v1190 = vadd.f32 %v984, %v1189
        %1191 = vmatmul.f32.gmra.mxu0 %v285
        %v1192 = vpop.f32.mrf.mxu0
        %v1193 = vadd.f32 %v987, %v1192
        %1194 = vmatmul.f32.gmra.mxu0 %v292
        %v1195 = vpop.f32.mrf.mxu0
        %v1196 = vadd.f32 %v990, %v1195
        %1197 = vmatmul.f32.gmra.mxu0 %v299
        %v1198 = vpop.f32.mrf.mxu0
        %v1199 = vadd.f32 %v993, %v1198
        %1200 = vmatmul.f32.gmra.mxu0 %v306
        %v1201 = vpop.f32.mrf.mxu0
        %v1202 = vadd.f32 %v996, %v1201
        %1203 = vmatmul.f32.gmra.mxu0 %v313
        %v1204 = vpop.f32.mrf.mxu0
        %v1205 = vadd.f32 %v999, %v1204
        %1206 = vmatmul.f32.gmra.mxu0 %v320
        %v1207 = vpop.f32.mrf.mxu0
        %v1208 = vadd.f32 %v1002, %v1207
        %1209 = vmatmul.f32.gmra.mxu0 %v327
        %v1210 = vpop.f32.mrf.mxu0
        %v1211 = vadd.f32 %v1005, %v1210
        %1212 = vmatmul.f32.gmra.mxu0 %v334
        %v1213 = vpop.f32.mrf.mxu0
        %v1214 = vadd.f32 %v1008, %v1213
        %1215 = vmatmul.f32.gmra.mxu0 %v341
        %v1216 = vpop.f32.mrf.mxu0
        %v1217 = vadd.f32 %v1011, %v1216
        %1218 = vmatmul.f32.gmra.mxu0 %v348
        %v1219 = vpop.f32.mrf.mxu0
        %v1220 = vadd.f32 %v1014, %v1219
        %1221 = vmatmul.f32.gmra.mxu0 %v355
        %v1222 = vpop.f32.mrf.mxu0
        %v1223 = vadd.f32 %v1017, %v1222
        %1224 = vmatmul.f32.gmra.mxu0 %v362
        %v1225 = vpop.f32.mrf.mxu0
        %v1226 = vadd.f32 %v1020, %v1225
        %1227 = vmatmul.f32.gmra.mxu0 %v369
        %v1228 = vpop.f32.mrf.mxu0
        %v1229 = vadd.f32 %v1023, %v1228
        %1230 = vmatmul.f32.gmra.mxu0 %v376
        %v1231 = vpop.f32.mrf.mxu0
        %v1232 = vadd.f32 %v1026, %v1231
        %1233 = vmatmul.f32.gmra.mxu0 %v383
        %v1234 = vpop.f32.mrf.mxu0
        %v1235 = vadd.f32 %v1029, %v1234
        %1236 = vmatmul.f32.gmra.mxu0 %v390
        %v1237 = vpop.f32.mrf.mxu0
        %v1238 = vadd.f32 %v1032, %v1237
        %1239 = vmatmul.f32.gmra.mxu0 %v397
        %v1240 = vpop.f32.mrf.mxu0
        %v1241 = vadd.f32 %v1035, %v1240
        %1242 = vmatmul.f32.gmra.mxu0 %v404
        %v1243 = vpop.f32.mrf.mxu0
        %v1244 = vadd.f32 %v1038, %v1243
        %1245 = vmatmul.f32.gmra.mxu0 %v411
        %v1246 = vpop.f32.mrf.mxu0
        %v1247 = vadd.f32 %v1041, %v1246
        %1248 = vmatmul.f32.gmra.mxu0 %v418
        %v1249 = vpop.f32.mrf.mxu0
        %v1250 = vadd.f32 %v1044, %v1249
        %1251 = vmatmul.f32.gmra.mxu0 %v425
        %v1252 = vpop.f32.mrf.mxu0
        %v1253 = vadd.f32 %v1047, %v1252
        %1254 = vmatmul.f32.gmra.mxu0 %v432
        %v1255 = vpop.f32.mrf.mxu0
        %v1256 = vadd.f32 %v1050, %v1255
        %1257 = vmatmul.f32.gmra.mxu0 %v439
        %v1258 = vpop.f32.mrf.mxu0
        %v1259 = vadd.f32 %v1053, %v1258
        %1260 = vmatmul.f32.gmra.mxu0 %v446
        %v1261 = vpop.f32.mrf.mxu0
        %v1262 = vadd.f32 %v1056, %v1261
        %1263 = vmatmul.f32.gmra.mxu0 %v453
        %v1264 = vpop.f32.mrf.mxu0
        %v1265 = vadd.f32 %v1059, %v1264
        %1266 = vmatmul.f32.gmra.mxu0 %v460
        %v1267 = vpop.f32.mrf.mxu0
        %v1268 = vadd.f32 %v1062, %v1267
        %1269 = vmatmul.f32.gmra.mxu0 %v467
        %v1270 = vpop.f32.mrf.mxu0
        %v1271 = vadd.f32 %v1065, %v1270
        %1272 = vmatmul.f32.gmra.mxu0 %v474
        %v1273 = vpop.f32.mrf.mxu0
        %v1274 = vadd.f32 %v1068, %v1273
        %1275 = vmatmul.f32.gmra.mxu0 %v481
        %v1276 = vpop.f32.mrf.mxu0
        %v1277 = vadd.f32 %v1071, %v1276
        %1278 = vmatmul.f32.gmra.mxu0 %v488
        %v1279 = vpop.f32.mrf.mxu0
        %v1280 = vadd.f32 %v1074, %v1279
        %1281 = vmatmul.f32.gmra.mxu0 %v495
        %v1282 = vpop.f32.mrf.mxu0
        %v1283 = vadd.f32 %v1077, %v1282
        %1284 = vmatmul.f32.gmra.mxu0 %v502
        %v1285 = vpop.f32.mrf.mxu0
        %v1286 = vadd.f32 %v1080, %v1285
        %1287 = vmatmul.f32.gmra.mxu0 %v509
        %v1288 = vpop.f32.mrf.mxu0
        %v1289 = vadd.f32 %v1083, %v1288
        %1290 = vmatmul.f32.gmra.mxu0 %v516
        %v1291 = vpop.f32.mrf.mxu0
        %v1292 = vadd.f32 %v1086, %v1291
        %1293 = vmatmul.f32.gmra.mxu0 %v523
        %v1294 = vpop.f32.mrf.mxu0
        %v1295 = vadd.f32 %v1089, %v1294
        %1296 = vmatmul.f32.gmra.mxu0 %v530
        %v1297 = vpop.f32.mrf.mxu0
        %v1298 = vadd.f32 %v1092, %v1297
        %1299 = vmatmul.f32.gmra.mxu0 %v537
        %v1300 = vpop.f32.mrf.mxu0
        %v1301 = vadd.f32 %v1095, %v1300
        %1302 = vmatmul.f32.gmra.mxu0 %v544
        %v1303 = vpop.f32.mrf.mxu0
        %v1304 = vadd.f32 %v1098, %v1303
        %1305 = vmatmul.f32.gmra.mxu0 %v551
        %v1306 = vpop.f32.mrf.mxu0
        %v1307 = vadd.f32 %v1101, %v1306
        %1308 = vmatmul.f32.gmra.mxu0 %v558
        %v1309 = vpop.f32.mrf.mxu0
        %v1310 = vadd.f32 %v1104, %v1309
        %1311 = vmatmul.f32.gmra.mxu0 %v565
        %v1312 = vpop.f32.mrf.mxu0
        %v1313 = vadd.f32 %v1107, %v1312
        %1314 = vmatmul.f32.gmra.mxu0 %v572
        %v1315 = vpop.f32.mrf.mxu0
        %v1316 = vadd.f32 %v1110, %v1315
        %1317 = vmatmul.f32.gmra.mxu0 %v579
        %v1318 = vpop.f32.mrf.mxu0
        %v1319 = vadd.f32 %v1113, %v1318
        %1320 = vmatmul.f32.gmra.mxu0 %v586
        %v1321 = vpop.f32.mrf.mxu0
        %v1322 = vadd.f32 %v1116, %v1321
        %1323 = vmatmul.f32.gmra.mxu0 %v593
        %v1324 = vpop.f32.mrf.mxu0
        %v1325 = vadd.f32 %v1119, %v1324
        %1326 = vmatmul.f32.gmra.mxu0 %v600
        %v1327 = vpop.f32.mrf.mxu0
        %v1328 = vadd.f32 %v1122, %v1327
        %1329 = vmatmul.f32.gmra.mxu0 %v607
        %v1330 = vpop.f32.mrf.mxu0
        %v1331 = vadd.f32 %v1125, %v1330
        %1332 = vmatmul.f32.gmra.mxu0 %v614
        %v1333 = vpop.f32.mrf.mxu0
        %v1334 = vadd.f32 %v1128, %v1333
        %1335 = vmatmul.f32.gmra.mxu0 %v621
        %v1336 = vpop.f32.mrf.mxu0
        %v1337 = vadd.f32 %v1131, %v1336
        %1338 = vmatmul.f32.gmra.mxu0 %v628
        %v1339 = vpop.f32.mrf.mxu0
        %v1340 = vadd.f32 %v1134, %v1339
        %1341 = vmatmul.f32.gmra.mxu0 %v635
        %v1342 = vpop.f32.mrf.mxu0
        %v1343 = vadd.f32 %v1137, %v1342
        %1344 = vdwg.mxu0
        %1345 = vmatpush.msra.mxu0 %v688
        %1346 = vmatpush.msra.mxu0 %v687
        %1347 = vmatpush.msra.mxu0 %v686
        %1348 = vmatpush.msra.mxu0 %v685
        %1349 = vmatpush.msra.mxu0 %v684
        %1350 = vmatpush.msra.mxu0 %v683
        %1351 = vmatpush.msra.mxu0 %v682
        %1352 = vmatpush.msra.mxu0 %v681
        %1353 = vmatpush.msra.mxu0 %v680
        %1354 = vmatpush.msra.mxu0 %v679
        %1355 = vmatpush.msra.mxu0 %v678
        %1356 = vmatpush.msra.mxu0 %v677
        %1357 = vmatpush.msra.mxu0 %v676
        %1358 = vmatpush.msra.mxu0 %v675
        %1359 = vmatpush.msra.mxu0 %v674
        %1360 = vmatpush.msra.mxu0 %v673
        %1361 = vmatmul.f32.gmra.mxu0 %v202
        %v1362 = vpop.f32.mrf.mxu0
        %v1363 = vadd.f32 %v1157, %v1362
        %1364 = vmatmul.f32.gmra.mxu0 %v209
        %v1365 = vpop.f32.mrf.mxu0
        %v1366 = vadd.f32 %v1160, %v1365
        %1367 = vmatmul.f32.gmra.mxu0 %v216
        %v1368 = vpop.f32.mrf.mxu0
        %v1369 = vadd.f32 %v1163, %v1368
        %1370 = vmatmul.f32.gmra.mxu0 %v223
        %v1371 = vpop.f32.mrf.mxu0
        %v1372 = vadd.f32 %v1166, %v1371
        %1373 = vmatmul.f32.gmra.mxu0 %v230
        %v1374 = vpop.f32.mrf.mxu0
        %v1375 = vadd.f32 %v1169, %v1374
        %1376 = vmatmul.f32.gmra.mxu0 %v237
        %v1377 = vpop.f32.mrf.mxu0
        %v1378 = vadd.f32 %v1172, %v1377
        %1379 = vmatmul.f32.gmra.mxu0 %v244
        %v1380 = vpop.f32.mrf.mxu0
        %v1381 = vadd.f32 %v1175, %v1380
        %1382 = vmatmul.f32.gmra.mxu0 %v251
        %v1383 = vpop.f32.mrf.mxu0
        %v1384 = vadd.f32 %v1178, %v1383
        %1385 = vmatmul.f32.gmra.mxu0 %v258
        %v1386 = vpop.f32.mrf.mxu0
        %v1387 = vadd.f32 %v1181, %v1386
        %1388 = vmatmul.f32.gmra.mxu0 %v265
        %v1389 = vpop.f32.mrf.mxu0
        %v1390 = vadd.f32 %v1184, %v1389
        %1391 = vmatmul.f32.gmra.mxu0 %v272
        %v1392 = vpop.f32.mrf.mxu0
        %v1393 = vadd.f32 %v1187, %v1392
        %1394 = vmatmul.f32.gmra.mxu0 %v279
        %v1395 = vpop.f32.mrf.mxu0
        %v1396 = vadd.f32 %v1190, %v1395
        %1397 = vmatmul.f32.gmra.mxu0 %v286
        %v1398 = vpop.f32.mrf.mxu0
        %v1399 = vadd.f32 %v1193, %v1398
        %1400 = vmatmul.f32.gmra.mxu0 %v293
        %v1401 = vpop.f32.mrf.mxu0
        %v1402 = vadd.f32 %v1196, %v1401
        %1403 = vmatmul.f32.gmra.mxu0 %v300
        %v1404 = vpop.f32.mrf.mxu0
        %v1405 = vadd.f32 %v1199, %v1404
        %1406 = vmatmul.f32.gmra.mxu0 %v307
        %v1407 = vpop.f32.mrf.mxu0
        %v1408 = vadd.f32 %v1202, %v1407
        %1409 = vmatmul.f32.gmra.mxu0 %v314
        %v1410 = vpop.f32.mrf.mxu0
        %v1411 = vadd.f32 %v1205, %v1410
        %1412 = vmatmul.f32.gmra.mxu0 %v321
        %v1413 = vpop.f32.mrf.mxu0
        %v1414 = vadd.f32 %v1208, %v1413
        %1415 = vmatmul.f32.gmra.mxu0 %v328
        %v1416 = vpop.f32.mrf.mxu0
        %v1417 = vadd.f32 %v1211, %v1416
        %1418 = vmatmul.f32.gmra.mxu0 %v335
        %v1419 = vpop.f32.mrf.mxu0
        %v1420 = vadd.f32 %v1214, %v1419
        %1421 = vmatmul.f32.gmra.mxu0 %v342
        %v1422 = vpop.f32.mrf.mxu0
        %v1423 = vadd.f32 %v1217, %v1422
        %1424 = vmatmul.f32.gmra.mxu0 %v349
        %v1425 = vpop.f32.mrf.mxu0
        %v1426 = vadd.f32 %v1220, %v1425
        %1427 = vmatmul.f32.gmra.mxu0 %v356
        %v1428 = vpop.f32.mrf.mxu0
        %v1429 = vadd.f32 %v1223, %v1428
        %1430 = vmatmul.f32.gmra.mxu0 %v363
        %v1431 = vpop.f32.mrf.mxu0
        %v1432 = vadd.f32 %v1226, %v1431
        %1433 = vmatmul.f32.gmra.mxu0 %v370
        %v1434 = vpop.f32.mrf.mxu0
        %v1435 = vadd.f32 %v1229, %v1434
        %1436 = vmatmul.f32.gmra.mxu0 %v377
        %v1437 = vpop.f32.mrf.mxu0
        %v1438 = vadd.f32 %v1232, %v1437
        %1439 = vmatmul.f32.gmra.mxu0 %v384
        %v1440 = vpop.f32.mrf.mxu0
        %v1441 = vadd.f32 %v1235, %v1440
        %1442 = vmatmul.f32.gmra.mxu0 %v391
        %v1443 = vpop.f32.mrf.mxu0
        %v1444 = vadd.f32 %v1238, %v1443
        %1445 = vmatmul.f32.gmra.mxu0 %v398
        %v1446 = vpop.f32.mrf.mxu0
        %v1447 = vadd.f32 %v1241, %v1446
        %1448 = vmatmul.f32.gmra.mxu0 %v405
        %v1449 = vpop.f32.mrf.mxu0
        %v1450 = vadd.f32 %v1244, %v1449
        %1451 = vmatmul.f32.gmra.mxu0 %v412
        %v1452 = vpop.f32.mrf.mxu0
        %v1453 = vadd.f32 %v1247, %v1452
        %1454 = vmatmul.f32.gmra.mxu0 %v419
        %v1455 = vpop.f32.mrf.mxu0
        %v1456 = vadd.f32 %v1250, %v1455
        %1457 = vmatmul.f32.gmra.mxu0 %v426
        %v1458 = vpop.f32.mrf.mxu0
        %v1459 = vadd.f32 %v1253, %v1458
        %1460 = vmatmul.f32.gmra.mxu0 %v433
        %v1461 = vpop.f32.mrf.mxu0
        %v1462 = vadd.f32 %v1256, %v1461
        %1463 = vmatmul.f32.gmra.mxu0 %v440
        %v1464 = vpop.f32.mrf.mxu0
        %v1465 = vadd.f32 %v1259, %v1464
        %1466 = vmatmul.f32.gmra.mxu0 %v447
        %v1467 = vpop.f32.mrf.mxu0
        %v1468 = vadd.f32 %v1262, %v1467
        %1469 = vmatmul.f32.gmra.mxu0 %v454
        %v1470 = vpop.f32.mrf.mxu0
        %v1471 = vadd.f32 %v1265, %v1470
        %1472 = vmatmul.f32.gmra.mxu0 %v461
        %v1473 = vpop.f32.mrf.mxu0
        %v1474 = vadd.f32 %v1268, %v1473
        %1475 = vmatmul.f32.gmra.mxu0 %v468
        %v1476 = vpop.f32.mrf.mxu0
        %v1477 = vadd.f32 %v1271, %v1476
        %1478 = vmatmul.f32.gmra.mxu0 %v475
        %v1479 = vpop.f32.mrf.mxu0
        %v1480 = vadd.f32 %v1274, %v1479
        %1481 = vmatmul.f32.gmra.mxu0 %v482
        %v1482 = vpop.f32.mrf.mxu0
        %v1483 = vadd.f32 %v1277, %v1482
        %1484 = vmatmul.f32.gmra.mxu0 %v489
        %v1485 = vpop.f32.mrf.mxu0
        %v1486 = vadd.f32 %v1280, %v1485
        %1487 = vmatmul.f32.gmra.mxu0 %v496
        %v1488 = vpop.f32.mrf.mxu0
        %v1489 = vadd.f32 %v1283, %v1488
        %1490 = vmatmul.f32.gmra.mxu0 %v503
        %v1491 = vpop.f32.mrf.mxu0
        %v1492 = vadd.f32 %v1286, %v1491
        %1493 = vmatmul.f32.gmra.mxu0 %v510
        %v1494 = vpop.f32.mrf.mxu0
        %v1495 = vadd.f32 %v1289, %v1494
        %1496 = vmatmul.f32.gmra.mxu0 %v517
        %v1497 = vpop.f32.mrf.mxu0
        %v1498 = vadd.f32 %v1292, %v1497
        %1499 = vmatmul.f32.gmra.mxu0 %v524
        %v1500 = vpop.f32.mrf.mxu0
        %v1501 = vadd.f32 %v1295, %v1500
        %1502 = vmatmul.f32.gmra.mxu0 %v531
        %v1503 = vpop.f32.mrf.mxu0
        %v1504 = vadd.f32 %v1298, %v1503
        %1505 = vmatmul.f32.gmra.mxu0 %v538
        %v1506 = vpop.f32.mrf.mxu0
        %v1507 = vadd.f32 %v1301, %v1506
        %1508 = vmatmul.f32.gmra.mxu0 %v545
        %v1509 = vpop.f32.mrf.mxu0
        %v1510 = vadd.f32 %v1304, %v1509
        %1511 = vmatmul.f32.gmra.mxu0 %v552
        %v1512 = vpop.f32.mrf.mxu0
        %v1513 = vadd.f32 %v1307, %v1512
        %1514 = vmatmul.f32.gmra.mxu0 %v559
        %v1515 = vpop.f32.mrf.mxu0
        %v1516 = vadd.f32 %v1310, %v1515
        %1517 = vmatmul.f32.gmra.mxu0 %v566
        %v1518 = vpop.f32.mrf.mxu0
        %v1519 = vadd.f32 %v1313, %v1518
        %1520 = vmatmul.f32.gmra.mxu0 %v573
        %v1521 = vpop.f32.mrf.mxu0
        %v1522 = vadd.f32 %v1316, %v1521
        %1523 = vmatmul.f32.gmra.mxu0 %v580
        %v1524 = vpop.f32.mrf.mxu0
        %v1525 = vadd.f32 %v1319, %v1524
        %1526 = vmatmul.f32.gmra.mxu0 %v587
        %v1527 = vpop.f32.mrf.mxu0
        %v1528 = vadd.f32 %v1322, %v1527
        %1529 = vmatmul.f32.gmra.mxu0 %v594
        %v1530 = vpop.f32.mrf.mxu0
        %v1531 = vadd.f32 %v1325, %v1530
        %1532 = vmatmul.f32.gmra.mxu0 %v601
        %v1533 = vpop.f32.mrf.mxu0
        %v1534 = vadd.f32 %v1328, %v1533
        %1535 = vmatmul.f32.gmra.mxu0 %v608
        %v1536 = vpop.f32.mrf.mxu0
        %v1537 = vadd.f32 %v1331, %v1536
        %1538 = vmatmul.f32.gmra.mxu0 %v615
        %v1539 = vpop.f32.mrf.mxu0
        %v1540 = vadd.f32 %v1334, %v1539
        %1541 = vmatmul.f32.gmra.mxu0 %v622
        %v1542 = vpop.f32.mrf.mxu0
        %v1543 = vadd.f32 %v1337, %v1542
        %1544 = vmatmul.f32.gmra.mxu0 %v629
        %v1545 = vpop.f32.mrf.mxu0
        %v1546 = vadd.f32 %v1340, %v1545
        %1547 = vmatmul.f32.gmra.mxu0 %v636
        %v1548 = vpop.f32.mrf.mxu0
        %v1549 = vadd.f32 %v1343, %v1548
        %1550 = vdwg.mxu0
        %1551 = vmatpush.msra.mxu0 %v704
        %1552 = vmatpush.msra.mxu0 %v703
        %1553 = vmatpush.msra.mxu0 %v702
        %1554 = vmatpush.msra.mxu0 %v701
        %1555 = vmatpush.msra.mxu0 %v700
        %1556 = vmatpush.msra.mxu0 %v699
        %1557 = vmatpush.msra.mxu0 %v698
        %1558 = vmatpush.msra.mxu0 %v697
        %1559 = vmatpush.msra.mxu0 %v696
        %1560 = vmatpush.msra.mxu0 %v695
        %1561 = vmatpush.msra.mxu0 %v694
        %1562 = vmatpush.msra.mxu0 %v693
        %1563 = vmatpush.msra.mxu0 %v692
        %1564 = vmatpush.msra.mxu0 %v691
        %1565 = vmatpush.msra.mxu0 %v690
        %1566 = vmatpush.msra.mxu0 %v689
        %1567 = vmatmul.f32.gmra.mxu0 %v203
        %v1568 = vpop.f32.mrf.mxu0
        %v1569 = vadd.f32 %v1363, %v1568
        %1570 = vmatmul.f32.gmra.mxu0 %v210
        %v1571 = vpop.f32.mrf.mxu0
        %v1572 = vadd.f32 %v1366, %v1571
        %1573 = vmatmul.f32.gmra.mxu0 %v217
        %v1574 = vpop.f32.mrf.mxu0
        %v1575 = vadd.f32 %v1369, %v1574
        %1576 = vmatmul.f32.gmra.mxu0 %v224
        %v1577 = vpop.f32.mrf.mxu0
        %v1578 = vadd.f32 %v1372, %v1577
        %1579 = vmatmul.f32.gmra.mxu0 %v231
        %v1580 = vpop.f32.mrf.mxu0
        %v1581 = vadd.f32 %v1375, %v1580
        %1582 = vmatmul.f32.gmra.mxu0 %v238
        %v1583 = vpop.f32.mrf.mxu0
        %v1584 = vadd.f32 %v1378, %v1583
        %1585 = vmatmul.f32.gmra.mxu0 %v245
        %v1586 = vpop.f32.mrf.mxu0
        %v1587 = vadd.f32 %v1381, %v1586
        %1588 = vmatmul.f32.gmra.mxu0 %v252
        %v1589 = vpop.f32.mrf.mxu0
        %v1590 = vadd.f32 %v1384, %v1589
        %1591 = vmatmul.f32.gmra.mxu0 %v259
        %v1592 = vpop.f32.mrf.mxu0
        %v1593 = vadd.f32 %v1387, %v1592
        %1594 = vmatmul.f32.gmra.mxu0 %v266
        %v1595 = vpop.f32.mrf.mxu0
        %v1596 = vadd.f32 %v1390, %v1595
        %1597 = vmatmul.f32.gmra.mxu0 %v273
        %v1598 = vpop.f32.mrf.mxu0
        %v1599 = vadd.f32 %v1393, %v1598
        %1600 = vmatmul.f32.gmra.mxu0 %v280
        %v1601 = vpop.f32.mrf.mxu0
        %v1602 = vadd.f32 %v1396, %v1601
        %1603 = vmatmul.f32.gmra.mxu0 %v287
        %v1604 = vpop.f32.mrf.mxu0
        %v1605 = vadd.f32 %v1399, %v1604
        %1606 = vmatmul.f32.gmra.mxu0 %v294
        %v1607 = vpop.f32.mrf.mxu0
        %v1608 = vadd.f32 %v1402, %v1607
        %1609 = vmatmul.f32.gmra.mxu0 %v301
        %v1610 = vpop.f32.mrf.mxu0
        %v1611 = vadd.f32 %v1405, %v1610
        %1612 = vmatmul.f32.gmra.mxu0 %v308
        %v1613 = vpop.f32.mrf.mxu0
        %v1614 = vadd.f32 %v1408, %v1613
        %1615 = vmatmul.f32.gmra.mxu0 %v315
        %v1616 = vpop.f32.mrf.mxu0
        %v1617 = vadd.f32 %v1411, %v1616
        %1618 = vmatmul.f32.gmra.mxu0 %v322
        %v1619 = vpop.f32.mrf.mxu0
        %v1620 = vadd.f32 %v1414, %v1619
        %1621 = vmatmul.f32.gmra.mxu0 %v329
        %v1622 = vpop.f32.mrf.mxu0
        %v1623 = vadd.f32 %v1417, %v1622
        %1624 = vmatmul.f32.gmra.mxu0 %v336
        %v1625 = vpop.f32.mrf.mxu0
        %v1626 = vadd.f32 %v1420, %v1625
        %1627 = vmatmul.f32.gmra.mxu0 %v343
        %v1628 = vpop.f32.mrf.mxu0
        %v1629 = vadd.f32 %v1423, %v1628
        %1630 = vmatmul.f32.gmra.mxu0 %v350
        %v1631 = vpop.f32.mrf.mxu0
        %v1632 = vadd.f32 %v1426, %v1631
        %1633 = vmatmul.f32.gmra.mxu0 %v357
        %v1634 = vpop.f32.mrf.mxu0
        %v1635 = vadd.f32 %v1429, %v1634
        %1636 = vmatmul.f32.gmra.mxu0 %v364
        %v1637 = vpop.f32.mrf.mxu0
        %v1638 = vadd.f32 %v1432, %v1637
        %1639 = vmatmul.f32.gmra.mxu0 %v371
        %v1640 = vpop.f32.mrf.mxu0
        %v1641 = vadd.f32 %v1435, %v1640
        %1642 = vmatmul.f32.gmra.mxu0 %v378
        %v1643 = vpop.f32.mrf.mxu0
        %v1644 = vadd.f32 %v1438, %v1643
        %1645 = vmatmul.f32.gmra.mxu0 %v385
        %v1646 = vpop.f32.mrf.mxu0
        %v1647 = vadd.f32 %v1441, %v1646
        %1648 = vmatmul.f32.gmra.mxu0 %v392
        %v1649 = vpop.f32.mrf.mxu0
        %v1650 = vadd.f32 %v1444, %v1649
        %1651 = vmatmul.f32.gmra.mxu0 %v399
        %v1652 = vpop.f32.mrf.mxu0
        %v1653 = vadd.f32 %v1447, %v1652
        %1654 = vmatmul.f32.gmra.mxu0 %v406
        %v1655 = vpop.f32.mrf.mxu0
        %v1656 = vadd.f32 %v1450, %v1655
        %1657 = vmatmul.f32.gmra.mxu0 %v413
        %v1658 = vpop.f32.mrf.mxu0
        %v1659 = vadd.f32 %v1453, %v1658
        %1660 = vmatmul.f32.gmra.mxu0 %v420
        %v1661 = vpop.f32.mrf.mxu0
        %v1662 = vadd.f32 %v1456, %v1661
        %1663 = vmatmul.f32.gmra.mxu0 %v427
        %v1664 = vpop.f32.mrf.mxu0
        %v1665 = vadd.f32 %v1459, %v1664
        %1666 = vmatmul.f32.gmra.mxu0 %v434
        %v1667 = vpop.f32.mrf.mxu0
        %v1668 = vadd.f32 %v1462, %v1667
        %1669 = vmatmul.f32.gmra.mxu0 %v441
        %v1670 = vpop.f32.mrf.mxu0
        %v1671 = vadd.f32 %v1465, %v1670
        %1672 = vmatmul.f32.gmra.mxu0 %v448
        %v1673 = vpop.f32.mrf.mxu0
        %v1674 = vadd.f32 %v1468, %v1673
        %1675 = vmatmul.f32.gmra.mxu0 %v455
        %v1676 = vpop.f32.mrf.mxu0
        %v1677 = vadd.f32 %v1471, %v1676
        %1678 = vmatmul.f32.gmra.mxu0 %v462
        %v1679 = vpop.f32.mrf.mxu0
        %v1680 = vadd.f32 %v1474, %v1679
        %1681 = vmatmul.f32.gmra.mxu0 %v469
        %v1682 = vpop.f32.mrf.mxu0
        %v1683 = vadd.f32 %v1477, %v1682
        %1684 = vmatmul.f32.gmra.mxu0 %v476
        %v1685 = vpop.f32.mrf.mxu0
        %v1686 = vadd.f32 %v1480, %v1685
        %1687 = vmatmul.f32.gmra.mxu0 %v483
        %v1688 = vpop.f32.mrf.mxu0
        %v1689 = vadd.f32 %v1483, %v1688
        %1690 = vmatmul.f32.gmra.mxu0 %v490
        %v1691 = vpop.f32.mrf.mxu0
        %v1692 = vadd.f32 %v1486, %v1691
        %1693 = vmatmul.f32.gmra.mxu0 %v497
        %v1694 = vpop.f32.mrf.mxu0
        %v1695 = vadd.f32 %v1489, %v1694
        %1696 = vmatmul.f32.gmra.mxu0 %v504
        %v1697 = vpop.f32.mrf.mxu0
        %v1698 = vadd.f32 %v1492, %v1697
        %1699 = vmatmul.f32.gmra.mxu0 %v511
        %v1700 = vpop.f32.mrf.mxu0
        %v1701 = vadd.f32 %v1495, %v1700
        %1702 = vmatmul.f32.gmra.mxu0 %v518
        %v1703 = vpop.f32.mrf.mxu0
        %v1704 = vadd.f32 %v1498, %v1703
        %1705 = vmatmul.f32.gmra.mxu0 %v525
        %v1706 = vpop.f32.mrf.mxu0
        %v1707 = vadd.f32 %v1501, %v1706
        %1708 = vmatmul.f32.gmra.mxu0 %v532
        %v1709 = vpop.f32.mrf.mxu0
        %v1710 = vadd.f32 %v1504, %v1709
        %1711 = vmatmul.f32.gmra.mxu0 %v539
        %v1712 = vpop.f32.mrf.mxu0
        %v1713 = vadd.f32 %v1507, %v1712
        %1714 = vmatmul.f32.gmra.mxu0 %v546
        %v1715 = vpop.f32.mrf.mxu0
        %v1716 = vadd.f32 %v1510, %v1715
        %1717 = vmatmul.f32.gmra.mxu0 %v553
        %v1718 = vpop.f32.mrf.mxu0
        %v1719 = vadd.f32 %v1513, %v1718
        %1720 = vmatmul.f32.gmra.mxu0 %v560
        %v1721 = vpop.f32.mrf.mxu0
        %v1722 = vadd.f32 %v1516, %v1721
        %1723 = vmatmul.f32.gmra.mxu0 %v567
        %v1724 = vpop.f32.mrf.mxu0
        %v1725 = vadd.f32 %v1519, %v1724
        %1726 = vmatmul.f32.gmra.mxu0 %v574
        %v1727 = vpop.f32.mrf.mxu0
        %v1728 = vadd.f32 %v1522, %v1727
        %1729 = vmatmul.f32.gmra.mxu0 %v581
        %v1730 = vpop.f32.mrf.mxu0
        %v1731 = vadd.f32 %v1525, %v1730
        %1732 = vmatmul.f32.gmra.mxu0 %v588
        %v1733 = vpop.f32.mrf.mxu0
        %v1734 = vadd.f32 %v1528, %v1733
        %1735 = vmatmul.f32.gmra.mxu0 %v595
        %v1736 = vpop.f32.mrf.mxu0
        %v1737 = vadd.f32 %v1531, %v1736
        %1738 = vmatmul.f32.gmra.mxu0 %v602
        %v1739 = vpop.f32.mrf.mxu0
        %v1740 = vadd.f32 %v1534, %v1739
        %1741 = vmatmul.f32.gmra.mxu0 %v609
        %v1742 = vpop.f32.mrf.mxu0
        %v1743 = vadd.f32 %v1537, %v1742
        %1744 = vmatmul.f32.gmra.mxu0 %v616
        %v1745 = vpop.f32.mrf.mxu0
        %v1746 = vadd.f32 %v1540, %v1745
        %1747 = vmatmul.f32.gmra.mxu0 %v623
        %v1748 = vpop.f32.mrf.mxu0
        %v1749 = vadd.f32 %v1543, %v1748
        %1750 = vmatmul.f32.gmra.mxu0 %v630
        %v1751 = vpop.f32.mrf.mxu0
        %v1752 = vadd.f32 %v1546, %v1751
        %1753 = vmatmul.f32.gmra.mxu0 %v637
        %v1754 = vpop.f32.mrf.mxu0
        %v1755 = vadd.f32 %v1549, %v1754
        %1756 = vdwg.mxu0
        %1757 = vmatpush.msra.mxu0 %v720
        %1758 = vmatpush.msra.mxu0 %v719
        %1759 = vmatpush.msra.mxu0 %v718
        %1760 = vmatpush.msra.mxu0 %v717
        %1761 = vmatpush.msra.mxu0 %v716
        %1762 = vmatpush.msra.mxu0 %v715
        %1763 = vmatpush.msra.mxu0 %v714
        %1764 = vmatpush.msra.mxu0 %v713
        %1765 = vmatpush.msra.mxu0 %v712
        %1766 = vmatpush.msra.mxu0 %v711
        %1767 = vmatpush.msra.mxu0 %v710
        %1768 = vmatpush.msra.mxu0 %v709
        %1769 = vmatpush.msra.mxu0 %v708
        %1770 = vmatpush.msra.mxu0 %v707
        %1771 = vmatpush.msra.mxu0 %v706
        %1772 = vmatpush.msra.mxu0 %v705
        %1773 = vmatmul.f32.gmra.mxu0 %v204
        %v1774 = vpop.f32.mrf.mxu0
        %v1775 = vadd.f32 %v1569, %v1774
        %1776 = vmatmul.f32.gmra.mxu0 %v211
        %v1777 = vpop.f32.mrf.mxu0
        %v1778 = vadd.f32 %v1572, %v1777
        %1779 = vmatmul.f32.gmra.mxu0 %v218
        %v1780 = vpop.f32.mrf.mxu0
        %v1781 = vadd.f32 %v1575, %v1780
        %1782 = vmatmul.f32.gmra.mxu0 %v225
        %v1783 = vpop.f32.mrf.mxu0
        %v1784 = vadd.f32 %v1578, %v1783
        %1785 = vmatmul.f32.gmra.mxu0 %v232
        %v1786 = vpop.f32.mrf.mxu0
        %v1787 = vadd.f32 %v1581, %v1786
        %1788 = vmatmul.f32.gmra.mxu0 %v239
        %v1789 = vpop.f32.mrf.mxu0
        %v1790 = vadd.f32 %v1584, %v1789
        %1791 = vmatmul.f32.gmra.mxu0 %v246
        %v1792 = vpop.f32.mrf.mxu0
        %v1793 = vadd.f32 %v1587, %v1792
        %1794 = vmatmul.f32.gmra.mxu0 %v253
        %v1795 = vpop.f32.mrf.mxu0
        %v1796 = vadd.f32 %v1590, %v1795
        %1797 = vmatmul.f32.gmra.mxu0 %v260
        %v1798 = vpop.f32.mrf.mxu0
        %v1799 = vadd.f32 %v1593, %v1798
        %1800 = vmatmul.f32.gmra.mxu0 %v267
        %v1801 = vpop.f32.mrf.mxu0
        %v1802 = vadd.f32 %v1596, %v1801
        %1803 = vmatmul.f32.gmra.mxu0 %v274
        %v1804 = vpop.f32.mrf.mxu0
        %v1805 = vadd.f32 %v1599, %v1804
        %1806 = vmatmul.f32.gmra.mxu0 %v281
        %v1807 = vpop.f32.mrf.mxu0
        %v1808 = vadd.f32 %v1602, %v1807
        %1809 = vmatmul.f32.gmra.mxu0 %v288
        %v1810 = vpop.f32.mrf.mxu0
        %v1811 = vadd.f32 %v1605, %v1810
        %1812 = vmatmul.f32.gmra.mxu0 %v295
        %v1813 = vpop.f32.mrf.mxu0
        %v1814 = vadd.f32 %v1608, %v1813
        %1815 = vmatmul.f32.gmra.mxu0 %v302
        %v1816 = vpop.f32.mrf.mxu0
        %v1817 = vadd.f32 %v1611, %v1816
        %1818 = vmatmul.f32.gmra.mxu0 %v309
        %v1819 = vpop.f32.mrf.mxu0
        %v1820 = vadd.f32 %v1614, %v1819
        %1821 = vmatmul.f32.gmra.mxu0 %v316
        %v1822 = vpop.f32.mrf.mxu0
        %v1823 = vadd.f32 %v1617, %v1822
        %1824 = vmatmul.f32.gmra.mxu0 %v323
        %v1825 = vpop.f32.mrf.mxu0
        %v1826 = vadd.f32 %v1620, %v1825
        %1827 = vmatmul.f32.gmra.mxu0 %v330
        %v1828 = vpop.f32.mrf.mxu0
        %v1829 = vadd.f32 %v1623, %v1828
        %1830 = vmatmul.f32.gmra.mxu0 %v337
        %v1831 = vpop.f32.mrf.mxu0
        %v1832 = vadd.f32 %v1626, %v1831
        %1833 = vmatmul.f32.gmra.mxu0 %v344
        %v1834 = vpop.f32.mrf.mxu0
        %v1835 = vadd.f32 %v1629, %v1834
        %1836 = vmatmul.f32.gmra.mxu0 %v351
        %v1837 = vpop.f32.mrf.mxu0
        %v1838 = vadd.f32 %v1632, %v1837
        %1839 = vmatmul.f32.gmra.mxu0 %v358
        %v1840 = vpop.f32.mrf.mxu0
        %v1841 = vadd.f32 %v1635, %v1840
        %1842 = vmatmul.f32.gmra.mxu0 %v365
        %v1843 = vpop.f32.mrf.mxu0
        %v1844 = vadd.f32 %v1638, %v1843
        %1845 = vmatmul.f32.gmra.mxu0 %v372
        %v1846 = vpop.f32.mrf.mxu0
        %v1847 = vadd.f32 %v1641, %v1846
        %1848 = vmatmul.f32.gmra.mxu0 %v379
        %v1849 = vpop.f32.mrf.mxu0
        %v1850 = vadd.f32 %v1644, %v1849
        %1851 = vmatmul.f32.gmra.mxu0 %v386
        %v1852 = vpop.f32.mrf.mxu0
        %v1853 = vadd.f32 %v1647, %v1852
        %1854 = vmatmul.f32.gmra.mxu0 %v393
        %v1855 = vpop.f32.mrf.mxu0
        %v1856 = vadd.f32 %v1650, %v1855
        %1857 = vmatmul.f32.gmra.mxu0 %v400
        %v1858 = vpop.f32.mrf.mxu0
        %v1859 = vadd.f32 %v1653, %v1858
        %1860 = vmatmul.f32.gmra.mxu0 %v407
        %v1861 = vpop.f32.mrf.mxu0
        %v1862 = vadd.f32 %v1656, %v1861
        %1863 = vmatmul.f32.gmra.mxu0 %v414
        %v1864 = vpop.f32.mrf.mxu0
        %v1865 = vadd.f32 %v1659, %v1864
        %1866 = vmatmul.f32.gmra.mxu0 %v421
        %v1867 = vpop.f32.mrf.mxu0
        %v1868 = vadd.f32 %v1662, %v1867
        %1869 = vmatmul.f32.gmra.mxu0 %v428
        %v1870 = vpop.f32.mrf.mxu0
        %v1871 = vadd.f32 %v1665, %v1870
        %1872 = vmatmul.f32.gmra.mxu0 %v435
        %v1873 = vpop.f32.mrf.mxu0
        %v1874 = vadd.f32 %v1668, %v1873
        %1875 = vmatmul.f32.gmra.mxu0 %v442
        %v1876 = vpop.f32.mrf.mxu0
        %v1877 = vadd.f32 %v1671, %v1876
        %1878 = vmatmul.f32.gmra.mxu0 %v449
        %v1879 = vpop.f32.mrf.mxu0
        %v1880 = vadd.f32 %v1674, %v1879
        %1881 = vmatmul.f32.gmra.mxu0 %v456
        %v1882 = vpop.f32.mrf.mxu0
        %v1883 = vadd.f32 %v1677, %v1882
        %1884 = vmatmul.f32.gmra.mxu0 %v463
        %v1885 = vpop.f32.mrf.mxu0
        %v1886 = vadd.f32 %v1680, %v1885
        %1887 = vmatmul.f32.gmra.mxu0 %v470
        %v1888 = vpop.f32.mrf.mxu0
        %v1889 = vadd.f32 %v1683, %v1888
        %1890 = vmatmul.f32.gmra.mxu0 %v477
        %v1891 = vpop.f32.mrf.mxu0
        %v1892 = vadd.f32 %v1686, %v1891
        %1893 = vmatmul.f32.gmra.mxu0 %v484
        %v1894 = vpop.f32.mrf.mxu0
        %v1895 = vadd.f32 %v1689, %v1894
        %1896 = vmatmul.f32.gmra.mxu0 %v491
        %v1897 = vpop.f32.mrf.mxu0
        %v1898 = vadd.f32 %v1692, %v1897
        %1899 = vmatmul.f32.gmra.mxu0 %v498
        %v1900 = vpop.f32.mrf.mxu0
        %v1901 = vadd.f32 %v1695, %v1900
        %1902 = vmatmul.f32.gmra.mxu0 %v505
        %v1903 = vpop.f32.mrf.mxu0
        %v1904 = vadd.f32 %v1698, %v1903
        %1905 = vmatmul.f32.gmra.mxu0 %v512
        %v1906 = vpop.f32.mrf.mxu0
        %v1907 = vadd.f32 %v1701, %v1906
        %1908 = vmatmul.f32.gmra.mxu0 %v519
        %v1909 = vpop.f32.mrf.mxu0
        %v1910 = vadd.f32 %v1704, %v1909
        %1911 = vmatmul.f32.gmra.mxu0 %v526
        %v1912 = vpop.f32.mrf.mxu0
        %v1913 = vadd.f32 %v1707, %v1912
        %1914 = vmatmul.f32.gmra.mxu0 %v533
        %v1915 = vpop.f32.mrf.mxu0
        %v1916 = vadd.f32 %v1710, %v1915
        %1917 = vmatmul.f32.gmra.mxu0 %v540
        %v1918 = vpop.f32.mrf.mxu0
        %v1919 = vadd.f32 %v1713, %v1918
        %1920 = vmatmul.f32.gmra.mxu0 %v547
        %v1921 = vpop.f32.mrf.mxu0
        %v1922 = vadd.f32 %v1716, %v1921
        %1923 = vmatmul.f32.gmra.mxu0 %v554
        %v1924 = vpop.f32.mrf.mxu0
        %v1925 = vadd.f32 %v1719, %v1924
        %1926 = vmatmul.f32.gmra.mxu0 %v561
        %v1927 = vpop.f32.mrf.mxu0
        %v1928 = vadd.f32 %v1722, %v1927
        %1929 = vmatmul.f32.gmra.mxu0 %v568
        %v1930 = vpop.f32.mrf.mxu0
        %v1931 = vadd.f32 %v1725, %v1930
        %1932 = vmatmul.f32.gmra.mxu0 %v575
        %v1933 = vpop.f32.mrf.mxu0
        %v1934 = vadd.f32 %v1728, %v1933
        %1935 = vmatmul.f32.gmra.mxu0 %v582
        %v1936 = vpop.f32.mrf.mxu0
        %v1937 = vadd.f32 %v1731, %v1936
        %1938 = vmatmul.f32.gmra.mxu0 %v589
        %v1939 = vpop.f32.mrf.mxu0
        %v1940 = vadd.f32 %v1734, %v1939
        %1941 = vmatmul.f32.gmra.mxu0 %v596
        %v1942 = vpop.f32.mrf.mxu0
        %v1943 = vadd.f32 %v1737, %v1942
        %1944 = vmatmul.f32.gmra.mxu0 %v603
        %v1945 = vpop.f32.mrf.mxu0
        %v1946 = vadd.f32 %v1740, %v1945
        %1947 = vmatmul.f32.gmra.mxu0 %v610
        %v1948 = vpop.f32.mrf.mxu0
        %v1949 = vadd.f32 %v1743, %v1948
        %1950 = vmatmul.f32.gmra.mxu0 %v617
        %v1951 = vpop.f32.mrf.mxu0
        %v1952 = vadd.f32 %v1746, %v1951
        %1953 = vmatmul.f32.gmra.mxu0 %v624
        %v1954 = vpop.f32.mrf.mxu0
        %v1955 = vadd.f32 %v1749, %v1954
        %1956 = vmatmul.f32.gmra.mxu0 %v631
        %v1957 = vpop.f32.mrf.mxu0
        %v1958 = vadd.f32 %v1752, %v1957
        %1959 = vmatmul.f32.gmra.mxu0 %v638
        %v1960 = vpop.f32.mrf.mxu0
        %v1961 = vadd.f32 %v1755, %v1960
        %1962 = vdwg.mxu0
        %1963 = vmatpush.msra.mxu0 %v736
        %1964 = vmatpush.msra.mxu0 %v735
        %1965 = vmatpush.msra.mxu0 %v734
        %1966 = vmatpush.msra.mxu0 %v733
        %1967 = vmatpush.msra.mxu0 %v732
        %1968 = vmatpush.msra.mxu0 %v731
        %1969 = vmatpush.msra.mxu0 %v730
        %1970 = vmatpush.msra.mxu0 %v729
        %1971 = vmatpush.msra.mxu0 %v728
        %1972 = vmatpush.msra.mxu0 %v727
        %1973 = vmatpush.msra.mxu0 %v726
        %1974 = vmatpush.msra.mxu0 %v725
        %1975 = vmatpush.msra.mxu0 %v724
        %1976 = vmatpush.msra.mxu0 %v723
        %1977 = vmatpush.msra.mxu0 %v722
        %1978 = vmatpush.msra.mxu0 %v721
        %1979 = vmatmul.f32.gmra.mxu0 %v205
        %v1980 = vpop.f32.mrf.mxu0
        %v1981 = vadd.f32 %v1775, %v1980
        %1982 = vmatmul.f32.gmra.mxu0 %v212
        %v1983 = vpop.f32.mrf.mxu0
        %v1984 = vadd.f32 %v1778, %v1983
        %1985 = vmatmul.f32.gmra.mxu0 %v219
        %v1986 = vpop.f32.mrf.mxu0
        %v1987 = vadd.f32 %v1781, %v1986
        %1988 = vmatmul.f32.gmra.mxu0 %v226
        %v1989 = vpop.f32.mrf.mxu0
        %v1990 = vadd.f32 %v1784, %v1989
        %1991 = vmatmul.f32.gmra.mxu0 %v233
        %v1992 = vpop.f32.mrf.mxu0
        %v1993 = vadd.f32 %v1787, %v1992
        %1994 = vmatmul.f32.gmra.mxu0 %v240
        %v1995 = vpop.f32.mrf.mxu0
        %v1996 = vadd.f32 %v1790, %v1995
        %1997 = vmatmul.f32.gmra.mxu0 %v247
        %v1998 = vpop.f32.mrf.mxu0
        %v1999 = vadd.f32 %v1793, %v1998
        %2000 = vmatmul.f32.gmra.mxu0 %v254
        %v2001 = vpop.f32.mrf.mxu0
        %v2002 = vadd.f32 %v1796, %v2001
        %2003 = vmatmul.f32.gmra.mxu0 %v261
        %v2004 = vpop.f32.mrf.mxu0
        %v2005 = vadd.f32 %v1799, %v2004
        %2006 = vmatmul.f32.gmra.mxu0 %v268
        %v2007 = vpop.f32.mrf.mxu0
        %v2008 = vadd.f32 %v1802, %v2007
        %2009 = vmatmul.f32.gmra.mxu0 %v275
        %v2010 = vpop.f32.mrf.mxu0
        %v2011 = vadd.f32 %v1805, %v2010
        %2012 = vmatmul.f32.gmra.mxu0 %v282
        %v2013 = vpop.f32.mrf.mxu0
        %v2014 = vadd.f32 %v1808, %v2013
        %2015 = vmatmul.f32.gmra.mxu0 %v289
        %v2016 = vpop.f32.mrf.mxu0
        %v2017 = vadd.f32 %v1811, %v2016
        %2018 = vmatmul.f32.gmra.mxu0 %v296
        %v2019 = vpop.f32.mrf.mxu0
        %v2020 = vadd.f32 %v1814, %v2019
        %2021 = vmatmul.f32.gmra.mxu0 %v303
        %v2022 = vpop.f32.mrf.mxu0
        %v2023 = vadd.f32 %v1817, %v2022
        %2024 = vmatmul.f32.gmra.mxu0 %v310
        %v2025 = vpop.f32.mrf.mxu0
        %v2026 = vadd.f32 %v1820, %v2025
        %2027 = vmatmul.f32.gmra.mxu0 %v317
        %v2028 = vpop.f32.mrf.mxu0
        %v2029 = vadd.f32 %v1823, %v2028
        %2030 = vmatmul.f32.gmra.mxu0 %v324
        %v2031 = vpop.f32.mrf.mxu0
        %v2032 = vadd.f32 %v1826, %v2031
        %2033 = vmatmul.f32.gmra.mxu0 %v331
        %v2034 = vpop.f32.mrf.mxu0
        %v2035 = vadd.f32 %v1829, %v2034
        %2036 = vmatmul.f32.gmra.mxu0 %v338
        %v2037 = vpop.f32.mrf.mxu0
        %v2038 = vadd.f32 %v1832, %v2037
        %2039 = vmatmul.f32.gmra.mxu0 %v345
        %v2040 = vpop.f32.mrf.mxu0
        %v2041 = vadd.f32 %v1835, %v2040
        %2042 = vmatmul.f32.gmra.mxu0 %v352
        %v2043 = vpop.f32.mrf.mxu0
        %v2044 = vadd.f32 %v1838, %v2043
        %2045 = vmatmul.f32.gmra.mxu0 %v359
        %v2046 = vpop.f32.mrf.mxu0
        %v2047 = vadd.f32 %v1841, %v2046
        %2048 = vmatmul.f32.gmra.mxu0 %v366
        %v2049 = vpop.f32.mrf.mxu0
        %v2050 = vadd.f32 %v1844, %v2049
        %2051 = vmatmul.f32.gmra.mxu0 %v373
        %v2052 = vpop.f32.mrf.mxu0
        %v2053 = vadd.f32 %v1847, %v2052
        %2054 = vmatmul.f32.gmra.mxu0 %v380
        %v2055 = vpop.f32.mrf.mxu0
        %v2056 = vadd.f32 %v1850, %v2055
        %2057 = vmatmul.f32.gmra.mxu0 %v387
        %v2058 = vpop.f32.mrf.mxu0
        %v2059 = vadd.f32 %v1853, %v2058
        %2060 = vmatmul.f32.gmra.mxu0 %v394
        %v2061 = vpop.f32.mrf.mxu0
        %v2062 = vadd.f32 %v1856, %v2061
        %2063 = vmatmul.f32.gmra.mxu0 %v401
        %v2064 = vpop.f32.mrf.mxu0
        %v2065 = vadd.f32 %v1859, %v2064
        %2066 = vmatmul.f32.gmra.mxu0 %v408
        %v2067 = vpop.f32.mrf.mxu0
        %v2068 = vadd.f32 %v1862, %v2067
        %2069 = vmatmul.f32.gmra.mxu0 %v415
        %v2070 = vpop.f32.mrf.mxu0
        %v2071 = vadd.f32 %v1865, %v2070
        %2072 = vmatmul.f32.gmra.mxu0 %v422
        %v2073 = vpop.f32.mrf.mxu0
        %v2074 = vadd.f32 %v1868, %v2073
        %2075 = vmatmul.f32.gmra.mxu0 %v429
        %v2076 = vpop.f32.mrf.mxu0
        %v2077 = vadd.f32 %v1871, %v2076
        %2078 = vmatmul.f32.gmra.mxu0 %v436
        %v2079 = vpop.f32.mrf.mxu0
        %v2080 = vadd.f32 %v1874, %v2079
        %2081 = vmatmul.f32.gmra.mxu0 %v443
        %v2082 = vpop.f32.mrf.mxu0
        %v2083 = vadd.f32 %v1877, %v2082
        %2084 = vmatmul.f32.gmra.mxu0 %v450
        %v2085 = vpop.f32.mrf.mxu0
        %v2086 = vadd.f32 %v1880, %v2085
        %2087 = vmatmul.f32.gmra.mxu0 %v457
        %v2088 = vpop.f32.mrf.mxu0
        %v2089 = vadd.f32 %v1883, %v2088
        %2090 = vmatmul.f32.gmra.mxu0 %v464
        %v2091 = vpop.f32.mrf.mxu0
        %v2092 = vadd.f32 %v1886, %v2091
        %2093 = vmatmul.f32.gmra.mxu0 %v471
        %v2094 = vpop.f32.mrf.mxu0
        %v2095 = vadd.f32 %v1889, %v2094
        %2096 = vmatmul.f32.gmra.mxu0 %v478
        %v2097 = vpop.f32.mrf.mxu0
        %v2098 = vadd.f32 %v1892, %v2097
        %2099 = vmatmul.f32.gmra.mxu0 %v485
        %v2100 = vpop.f32.mrf.mxu0
        %v2101 = vadd.f32 %v1895, %v2100
        %2102 = vmatmul.f32.gmra.mxu0 %v492
        %v2103 = vpop.f32.mrf.mxu0
        %v2104 = vadd.f32 %v1898, %v2103
        %2105 = vmatmul.f32.gmra.mxu0 %v499
        %v2106 = vpop.f32.mrf.mxu0
        %v2107 = vadd.f32 %v1901, %v2106
        %2108 = vmatmul.f32.gmra.mxu0 %v506
        %v2109 = vpop.f32.mrf.mxu0
        %v2110 = vadd.f32 %v1904, %v2109
        %2111 = vmatmul.f32.gmra.mxu0 %v513
        %v2112 = vpop.f32.mrf.mxu0
        %v2113 = vadd.f32 %v1907, %v2112
        %2114 = vmatmul.f32.gmra.mxu0 %v520
        %v2115 = vpop.f32.mrf.mxu0
        %v2116 = vadd.f32 %v1910, %v2115
        %2117 = vmatmul.f32.gmra.mxu0 %v527
        %v2118 = vpop.f32.mrf.mxu0
        %v2119 = vadd.f32 %v1913, %v2118
        %2120 = vmatmul.f32.gmra.mxu0 %v534
        %v2121 = vpop.f32.mrf.mxu0
        %v2122 = vadd.f32 %v1916, %v2121
        %2123 = vmatmul.f32.gmra.mxu0 %v541
        %v2124 = vpop.f32.mrf.mxu0
        %v2125 = vadd.f32 %v1919, %v2124
        %2126 = vmatmul.f32.gmra.mxu0 %v548
        %v2127 = vpop.f32.mrf.mxu0
        %v2128 = vadd.f32 %v1922, %v2127
        %2129 = vmatmul.f32.gmra.mxu0 %v555
        %v2130 = vpop.f32.mrf.mxu0
        %v2131 = vadd.f32 %v1925, %v2130
        %2132 = vmatmul.f32.gmra.mxu0 %v562
        %v2133 = vpop.f32.mrf.mxu0
        %v2134 = vadd.f32 %v1928, %v2133
        %2135 = vmatmul.f32.gmra.mxu0 %v569
        %v2136 = vpop.f32.mrf.mxu0
        %v2137 = vadd.f32 %v1931, %v2136
        %2138 = vmatmul.f32.gmra.mxu0 %v576
        %v2139 = vpop.f32.mrf.mxu0
        %v2140 = vadd.f32 %v1934, %v2139
        %2141 = vmatmul.f32.gmra.mxu0 %v583
        %v2142 = vpop.f32.mrf.mxu0
        %v2143 = vadd.f32 %v1937, %v2142
        %2144 = vmatmul.f32.gmra.mxu0 %v590
        %v2145 = vpop.f32.mrf.mxu0
        %v2146 = vadd.f32 %v1940, %v2145
        %2147 = vmatmul.f32.gmra.mxu0 %v597
        %v2148 = vpop.f32.mrf.mxu0
        %v2149 = vadd.f32 %v1943, %v2148
        %2150 = vmatmul.f32.gmra.mxu0 %v604
        %v2151 = vpop.f32.mrf.mxu0
        %v2152 = vadd.f32 %v1946, %v2151
        %2153 = vmatmul.f32.gmra.mxu0 %v611
        %v2154 = vpop.f32.mrf.mxu0
        %v2155 = vadd.f32 %v1949, %v2154
        %2156 = vmatmul.f32.gmra.mxu0 %v618
        %v2157 = vpop.f32.mrf.mxu0
        %v2158 = vadd.f32 %v1952, %v2157
        %2159 = vmatmul.f32.gmra.mxu0 %v625
        %v2160 = vpop.f32.mrf.mxu0
        %v2161 = vadd.f32 %v1955, %v2160
        %2162 = vmatmul.f32.gmra.mxu0 %v632
        %v2163 = vpop.f32.mrf.mxu0
        %v2164 = vadd.f32 %v1958, %v2163
        %2165 = vmatmul.f32.gmra.mxu0 %v639
        %v2166 = vpop.f32.mrf.mxu0
        %v2167 = vadd.f32 %v1961, %v2166
        %2168 = vdwg.mxu0
        %2169 = vmatpush.msra.mxu0 0.0
        %2170 = vmatpush.msra.mxu0 0.0
        %2171 = vmatpush.msra.mxu0 0.0
        %2172 = vmatpush.msra.mxu0 0.0
        %2173 = vmatpush.msra.mxu0 0.0
        %2174 = vmatpush.msra.mxu0 0.0
        %2175 = vmatpush.msra.mxu0 0.0
        %2176 = vmatpush.msra.mxu0 0.0
        %2177 = vmatpush.msra.mxu0 0.0
        %2178 = vmatpush.msra.mxu0 0.0
        %2179 = vmatpush.msra.mxu0 0.0
        %2180 = vmatpush.msra.mxu0 0.0
        %2181 = vmatpush.msra.mxu0 0.0
        %2182 = vmatpush.msra.mxu0 0.0
        %2183 = vmatpush.msra.mxu0 %v738
        %2184 = vmatpush.msra.mxu0 %v737
        %2185 = vmatmul.f32.gmra.mxu0 %v745
        %v2186 = vpop.f32.mrf.mxu0
        %v2187 = vadd.f32 %v1981, %v2186
        %2188 = vmatmul.f32.gmra.mxu0 %v748
        %v2189 = vpop.f32.mrf.mxu0
        %v2190 = vadd.f32 %v1984, %v2189
        %2191 = vmatmul.f32.gmra.mxu0 %v751
        %v2192 = vpop.f32.mrf.mxu0
        %v2193 = vadd.f32 %v1987, %v2192
        %2194 = vmatmul.f32.gmra.mxu0 %v754
        %v2195 = vpop.f32.mrf.mxu0
        %v2196 = vadd.f32 %v1990, %v2195
        %2197 = vmatmul.f32.gmra.mxu0 %v757
        %v2198 = vpop.f32.mrf.mxu0
        %v2199 = vadd.f32 %v1993, %v2198
        %2200 = vmatmul.f32.gmra.mxu0 %v760
        %v2201 = vpop.f32.mrf.mxu0
        %v2202 = vadd.f32 %v1996, %v2201
        %2203 = vmatmul.f32.gmra.mxu0 %v763
        %v2204 = vpop.f32.mrf.mxu0
        %v2205 = vadd.f32 %v1999, %v2204
        %2206 = vmatmul.f32.gmra.mxu0 %v766
        %v2207 = vpop.f32.mrf.mxu0
        %v2208 = vadd.f32 %v2002, %v2207
        %2209 = vmatmul.f32.gmra.mxu0 %v769
        %v2210 = vpop.f32.mrf.mxu0
        %v2211 = vadd.f32 %v2005, %v2210
        %2212 = vmatmul.f32.gmra.mxu0 %v772
        %v2213 = vpop.f32.mrf.mxu0
        %v2214 = vadd.f32 %v2008, %v2213
        %2215 = vmatmul.f32.gmra.mxu0 %v775
        %v2216 = vpop.f32.mrf.mxu0
        %v2217 = vadd.f32 %v2011, %v2216
        %2218 = vmatmul.f32.gmra.mxu0 %v778
        %v2219 = vpop.f32.mrf.mxu0
        %v2220 = vadd.f32 %v2014, %v2219
        %2221 = vmatmul.f32.gmra.mxu0 %v781
        %v2222 = vpop.f32.mrf.mxu0
        %v2223 = vadd.f32 %v2017, %v2222
        %2224 = vmatmul.f32.gmra.mxu0 %v784
        %v2225 = vpop.f32.mrf.mxu0
        %v2226 = vadd.f32 %v2020, %v2225
        %2227 = vmatmul.f32.gmra.mxu0 %v787
        %v2228 = vpop.f32.mrf.mxu0
        %v2229 = vadd.f32 %v2023, %v2228
        %2230 = vmatmul.f32.gmra.mxu0 %v790
        %v2231 = vpop.f32.mrf.mxu0
        %v2232 = vadd.f32 %v2026, %v2231
        %2233 = vmatmul.f32.gmra.mxu0 %v793
        %v2234 = vpop.f32.mrf.mxu0
        %v2235 = vadd.f32 %v2029, %v2234
        %2236 = vmatmul.f32.gmra.mxu0 %v796
        %v2237 = vpop.f32.mrf.mxu0
        %v2238 = vadd.f32 %v2032, %v2237
        %2239 = vmatmul.f32.gmra.mxu0 %v799
        %v2240 = vpop.f32.mrf.mxu0
        %v2241 = vadd.f32 %v2035, %v2240
        %2242 = vmatmul.f32.gmra.mxu0 %v802
        %v2243 = vpop.f32.mrf.mxu0
        %v2244 = vadd.f32 %v2038, %v2243
        %2245 = vmatmul.f32.gmra.mxu0 %v805
        %v2246 = vpop.f32.mrf.mxu0
        %v2247 = vadd.f32 %v2041, %v2246
        %2248 = vmatmul.f32.gmra.mxu0 %v808
        %v2249 = vpop.f32.mrf.mxu0
        %v2250 = vadd.f32 %v2044, %v2249
        %2251 = vmatmul.f32.gmra.mxu0 %v811
        %v2252 = vpop.f32.mrf.mxu0
        %v2253 = vadd.f32 %v2047, %v2252
        %2254 = vmatmul.f32.gmra.mxu0 %v814
        %v2255 = vpop.f32.mrf.mxu0
        %v2256 = vadd.f32 %v2050, %v2255
        %2257 = vmatmul.f32.gmra.mxu0 %v817
        %v2258 = vpop.f32.mrf.mxu0
        %v2259 = vadd.f32 %v2053, %v2258
        %2260 = vmatmul.f32.gmra.mxu0 %v820
        %v2261 = vpop.f32.mrf.mxu0
        %v2262 = vadd.f32 %v2056, %v2261
        %2263 = vmatmul.f32.gmra.mxu0 %v823
        %v2264 = vpop.f32.mrf.mxu0
        %v2265 = vadd.f32 %v2059, %v2264
        %2266 = vmatmul.f32.gmra.mxu0 %v826
        %v2267 = vpop.f32.mrf.mxu0
        %v2268 = vadd.f32 %v2062, %v2267
        %2269 = vmatmul.f32.gmra.mxu0 %v829
        %v2270 = vpop.f32.mrf.mxu0
        %v2271 = vadd.f32 %v2065, %v2270
        %2272 = vmatmul.f32.gmra.mxu0 %v832
        %v2273 = vpop.f32.mrf.mxu0
        %v2274 = vadd.f32 %v2068, %v2273
        %2275 = vmatmul.f32.gmra.mxu0 %v835
        %v2276 = vpop.f32.mrf.mxu0
        %v2277 = vadd.f32 %v2071, %v2276
        %2278 = vmatmul.f32.gmra.mxu0 %v838
        %v2279 = vpop.f32.mrf.mxu0
        %v2280 = vadd.f32 %v2074, %v2279
        %2281 = vmatmul.f32.gmra.mxu0 %v841
        %v2282 = vpop.f32.mrf.mxu0
        %v2283 = vadd.f32 %v2077, %v2282
        %2284 = vmatmul.f32.gmra.mxu0 %v844
        %v2285 = vpop.f32.mrf.mxu0
        %v2286 = vadd.f32 %v2080, %v2285
        %2287 = vmatmul.f32.gmra.mxu0 %v847
        %v2288 = vpop.f32.mrf.mxu0
        %v2289 = vadd.f32 %v2083, %v2288
        %2290 = vmatmul.f32.gmra.mxu0 %v850
        %v2291 = vpop.f32.mrf.mxu0
        %v2292 = vadd.f32 %v2086, %v2291
        %2293 = vmatmul.f32.gmra.mxu0 %v853
        %v2294 = vpop.f32.mrf.mxu0
        %v2295 = vadd.f32 %v2089, %v2294
        %2296 = vmatmul.f32.gmra.mxu0 %v856
        %v2297 = vpop.f32.mrf.mxu0
        %v2298 = vadd.f32 %v2092, %v2297
        %2299 = vmatmul.f32.gmra.mxu0 %v859
        %v2300 = vpop.f32.mrf.mxu0
        %v2301 = vadd.f32 %v2095, %v2300
        %2302 = vmatmul.f32.gmra.mxu0 %v862
        %v2303 = vpop.f32.mrf.mxu0
        %v2304 = vadd.f32 %v2098, %v2303
        %2305 = vmatmul.f32.gmra.mxu0 %v865
        %v2306 = vpop.f32.mrf.mxu0
        %v2307 = vadd.f32 %v2101, %v2306
        %2308 = vmatmul.f32.gmra.mxu0 %v868
        %v2309 = vpop.f32.mrf.mxu0
        %v2310 = vadd.f32 %v2104, %v2309
        %2311 = vmatmul.f32.gmra.mxu0 %v871
        %v2312 = vpop.f32.mrf.mxu0
        %v2313 = vadd.f32 %v2107, %v2312
        %2314 = vmatmul.f32.gmra.mxu0 %v874
        %v2315 = vpop.f32.mrf.mxu0
        %v2316 = vadd.f32 %v2110, %v2315
        %2317 = vmatmul.f32.gmra.mxu0 %v877
        %v2318 = vpop.f32.mrf.mxu0
        %v2319 = vadd.f32 %v2113, %v2318
        %2320 = vmatmul.f32.gmra.mxu0 %v880
        %v2321 = vpop.f32.mrf.mxu0
        %v2322 = vadd.f32 %v2116, %v2321
        %2323 = vmatmul.f32.gmra.mxu0 %v883
        %v2324 = vpop.f32.mrf.mxu0
        %v2325 = vadd.f32 %v2119, %v2324
        %2326 = vmatmul.f32.gmra.mxu0 %v886
        %v2327 = vpop.f32.mrf.mxu0
        %v2328 = vadd.f32 %v2122, %v2327
        %2329 = vmatmul.f32.gmra.mxu0 %v889
        %v2330 = vpop.f32.mrf.mxu0
        %v2331 = vadd.f32 %v2125, %v2330
        %2332 = vmatmul.f32.gmra.mxu0 %v892
        %v2333 = vpop.f32.mrf.mxu0
        %v2334 = vadd.f32 %v2128, %v2333
        %2335 = vmatmul.f32.gmra.mxu0 %v895
        %v2336 = vpop.f32.mrf.mxu0
        %v2337 = vadd.f32 %v2131, %v2336
        %2338 = vmatmul.f32.gmra.mxu0 %v898
        %v2339 = vpop.f32.mrf.mxu0
        %v2340 = vadd.f32 %v2134, %v2339
        %2341 = vmatmul.f32.gmra.mxu0 %v901
        %v2342 = vpop.f32.mrf.mxu0
        %v2343 = vadd.f32 %v2137, %v2342
        %2344 = vmatmul.f32.gmra.mxu0 %v904
        %v2345 = vpop.f32.mrf.mxu0
        %v2346 = vadd.f32 %v2140, %v2345
        %2347 = vmatmul.f32.gmra.mxu0 %v907
        %v2348 = vpop.f32.mrf.mxu0
        %v2349 = vadd.f32 %v2143, %v2348
        %2350 = vmatmul.f32.gmra.mxu0 %v910
        %v2351 = vpop.f32.mrf.mxu0
        %v2352 = vadd.f32 %v2146, %v2351
        %2353 = vmatmul.f32.gmra.mxu0 %v913
        %v2354 = vpop.f32.mrf.mxu0
        %v2355 = vadd.f32 %v2149, %v2354
        %2356 = vmatmul.f32.gmra.mxu0 %v916
        %v2357 = vpop.f32.mrf.mxu0
        %v2358 = vadd.f32 %v2152, %v2357
        %2359 = vmatmul.f32.gmra.mxu0 %v919
        %v2360 = vpop.f32.mrf.mxu0
        %v2361 = vadd.f32 %v2155, %v2360
        %2362 = vmatmul.f32.gmra.mxu0 %v922
        %v2363 = vpop.f32.mrf.mxu0
        %v2364 = vadd.f32 %v2158, %v2363
        %2365 = vmatmul.f32.gmra.mxu0 %v925
        %v2366 = vpop.f32.mrf.mxu0
        %v2367 = vadd.f32 %v2161, %v2366
        %2368 = vmatmul.f32.gmra.mxu0 %v928
        %v2369 = vpop.f32.mrf.mxu0
        %v2370 = vadd.f32 %v2164, %v2369
        %2371 = vmatmul.f32.gmra.mxu0 %v931
        %v2372 = vpop.f32.mrf.mxu0
        %v2373 = vadd.f32 %v2167, %v2372
        %2374 = vdwg.mxu0
        %vm2375 = vcmask 80896
        %v2376 = vsel %vm2375, %v2187, -inf
        %2377 = vmax.xlane.f32.xlu0 %v2376
        %v2378 = vpop.xlane.xlu0 %2377
        %v2379 = vsel %vm2375, %v2190, -inf
        %2380 = vmax.xlane.f32.xlu0 %v2379
        %v2381 = vpop.xlane.xlu0 %2380
        %v2382 = vsel %vm2375, %v2193, -inf
        %2383 = vmax.xlane.f32.xlu0 %v2382
        %v2384 = vpop.xlane.xlu0 %2383
        %v2385 = vsel %vm2375, %v2196, -inf
        %2386 = vmax.xlane.f32.xlu0 %v2385
        %v2387 = vpop.xlane.xlu0 %2386
        %v2388 = vsel %vm2375, %v2199, -inf
        %2389 = vmax.xlane.f32.xlu0 %v2388
        %v2390 = vpop.xlane.xlu0 %2389
        %v2391 = vsel %vm2375, %v2202, -inf
        %2392 = vmax.xlane.f32.xlu0 %v2391
        %v2393 = vpop.xlane.xlu0 %2392
        %v2394 = vsel %vm2375, %v2205, -inf
        %2395 = vmax.xlane.f32.xlu0 %v2394
        %v2396 = vpop.xlane.xlu0 %2395
        %v2397 = vsel %vm2375, %v2208, -inf
        %2398 = vmax.xlane.f32.xlu0 %v2397
        %v2399 = vpop.xlane.xlu0 %2398
        %v2400 = vsel %vm2375, %v2211, -inf
        %2401 = vmax.xlane.f32.xlu0 %v2400
        %v2402 = vpop.xlane.xlu0 %2401
        %v2403 = vsel %vm2375, %v2214, -inf
        %2404 = vmax.xlane.f32.xlu0 %v2403
        %v2405 = vpop.xlane.xlu0 %2404
        %v2406 = vsel %vm2375, %v2217, -inf
        %2407 = vmax.xlane.f32.xlu0 %v2406
        %v2408 = vpop.xlane.xlu0 %2407
        %v2409 = vsel %vm2375, %v2220, -inf
        %2410 = vmax.xlane.f32.xlu0 %v2409
        %v2411 = vpop.xlane.xlu0 %2410
        %v2412 = vsel %vm2375, %v2223, -inf
        %2413 = vmax.xlane.f32.xlu0 %v2412
        %v2414 = vpop.xlane.xlu0 %2413
        %v2415 = vsel %vm2375, %v2226, -inf
        %2416 = vmax.xlane.f32.xlu0 %v2415
        %v2417 = vpop.xlane.xlu0 %2416
        %v2418 = vsel %vm2375, %v2229, -inf
        %2419 = vmax.xlane.f32.xlu0 %v2418
        %v2420 = vpop.xlane.xlu0 %2419
        %v2421 = vsel %vm2375, %v2232, -inf
        %2422 = vmax.xlane.f32.xlu0 %v2421
        %v2423 = vpop.xlane.xlu0 %2422
        %v2424 = vsel %vm2375, %v2235, -inf
        %2425 = vmax.xlane.f32.xlu0 %v2424
        %v2426 = vpop.xlane.xlu0 %2425
        %v2427 = vsel %vm2375, %v2238, -inf
        %2428 = vmax.xlane.f32.xlu0 %v2427
        %v2429 = vpop.xlane.xlu0 %2428
        %v2430 = vsel %vm2375, %v2241, -inf
        %2431 = vmax.xlane.f32.xlu0 %v2430
        %v2432 = vpop.xlane.xlu0 %2431
        %v2433 = vsel %vm2375, %v2244, -inf
        %2434 = vmax.xlane.f32.xlu0 %v2433
        %v2435 = vpop.xlane.xlu0 %2434
        %v2436 = vsel %vm2375, %v2247, -inf
        %2437 = vmax.xlane.f32.xlu0 %v2436
        %v2438 = vpop.xlane.xlu0 %2437
        %v2439 = vsel %vm2375, %v2250, -inf
        %2440 = vmax.xlane.f32.xlu0 %v2439
        %v2441 = vpop.xlane.xlu0 %2440
        %v2442 = vsel %vm2375, %v2253, -inf
        %2443 = vmax.xlane.f32.xlu0 %v2442
        %v2444 = vpop.xlane.xlu0 %2443
        %v2445 = vsel %vm2375, %v2256, -inf
        %2446 = vmax.xlane.f32.xlu0 %v2445
        %v2447 = vpop.xlane.xlu0 %2446
        %v2448 = vsel %vm2375, %v2259, -inf
        %2449 = vmax.xlane.f32.xlu0 %v2448
        %v2450 = vpop.xlane.xlu0 %2449
        %v2451 = vsel %vm2375, %v2262, -inf
        %2452 = vmax.xlane.f32.xlu0 %v2451
        %v2453 = vpop.xlane.xlu0 %2452
        %v2454 = vsel %vm2375, %v2265, -inf
        %2455 = vmax.xlane.f32.xlu0 %v2454
        %v2456 = vpop.xlane.xlu0 %2455
        %v2457 = vsel %vm2375, %v2268, -inf
        %2458 = vmax.xlane.f32.xlu0 %v2457
        %v2459 = vpop.xlane.xlu0 %2458
        %v2460 = vsel %vm2375, %v2271, -inf
        %2461 = vmax.xlane.f32.xlu0 %v2460
        %v2462 = vpop.xlane.xlu0 %2461
        %v2463 = vsel %vm2375, %v2274, -inf
        %2464 = vmax.xlane.f32.xlu0 %v2463
        %v2465 = vpop.xlane.xlu0 %2464
        %v2466 = vsel %vm2375, %v2277, -inf
        %2467 = vmax.xlane.f32.xlu0 %v2466
        %v2468 = vpop.xlane.xlu0 %2467
        %v2469 = vsel %vm2375, %v2280, -inf
        %2470 = vmax.xlane.f32.xlu0 %v2469
        %v2471 = vpop.xlane.xlu0 %2470
        %v2472 = vsel %vm2375, %v2283, -inf
        %2473 = vmax.xlane.f32.xlu0 %v2472
        %v2474 = vpop.xlane.xlu0 %2473
        %v2475 = vsel %vm2375, %v2286, -inf
        %2476 = vmax.xlane.f32.xlu0 %v2475
        %v2477 = vpop.xlane.xlu0 %2476
        %v2478 = vsel %vm2375, %v2289, -inf
        %2479 = vmax.xlane.f32.xlu0 %v2478
        %v2480 = vpop.xlane.xlu0 %2479
        %v2481 = vsel %vm2375, %v2292, -inf
        %2482 = vmax.xlane.f32.xlu0 %v2481
        %v2483 = vpop.xlane.xlu0 %2482
        %v2484 = vsel %vm2375, %v2295, -inf
        %2485 = vmax.xlane.f32.xlu0 %v2484
        %v2486 = vpop.xlane.xlu0 %2485
        %v2487 = vsel %vm2375, %v2298, -inf
        %2488 = vmax.xlane.f32.xlu0 %v2487
        %v2489 = vpop.xlane.xlu0 %2488
        %v2490 = vsel %vm2375, %v2301, -inf
        %2491 = vmax.xlane.f32.xlu0 %v2490
        %v2492 = vpop.xlane.xlu0 %2491
        %v2493 = vsel %vm2375, %v2304, -inf
        %2494 = vmax.xlane.f32.xlu0 %v2493
        %v2495 = vpop.xlane.xlu0 %2494
        %v2496 = vsel %vm2375, %v2307, -inf
        %2497 = vmax.xlane.f32.xlu0 %v2496
        %v2498 = vpop.xlane.xlu0 %2497
        %v2499 = vsel %vm2375, %v2310, -inf
        %2500 = vmax.xlane.f32.xlu0 %v2499
        %v2501 = vpop.xlane.xlu0 %2500
        %v2502 = vsel %vm2375, %v2313, -inf
        %2503 = vmax.xlane.f32.xlu0 %v2502
        %v2504 = vpop.xlane.xlu0 %2503
        %v2505 = vsel %vm2375, %v2316, -inf
        %2506 = vmax.xlane.f32.xlu0 %v2505
        %v2507 = vpop.xlane.xlu0 %2506
        %v2508 = vsel %vm2375, %v2319, -inf
        %2509 = vmax.xlane.f32.xlu0 %v2508
        %v2510 = vpop.xlane.xlu0 %2509
        %v2511 = vsel %vm2375, %v2322, -inf
        %2512 = vmax.xlane.f32.xlu0 %v2511
        %v2513 = vpop.xlane.xlu0 %2512
        %v2514 = vsel %vm2375, %v2325, -inf
        %2515 = vmax.xlane.f32.xlu0 %v2514
        %v2516 = vpop.xlane.xlu0 %2515
        %v2517 = vsel %vm2375, %v2328, -inf
        %2518 = vmax.xlane.f32.xlu0 %v2517
        %v2519 = vpop.xlane.xlu0 %2518
        %v2520 = vsel %vm2375, %v2331, -inf
        %2521 = vmax.xlane.f32.xlu0 %v2520
        %v2522 = vpop.xlane.xlu0 %2521
        %v2523 = vsel %vm2375, %v2334, -inf
        %2524 = vmax.xlane.f32.xlu0 %v2523
        %v2525 = vpop.xlane.xlu0 %2524
        %v2526 = vsel %vm2375, %v2337, -inf
        %2527 = vmax.xlane.f32.xlu0 %v2526
        %v2528 = vpop.xlane.xlu0 %2527
        %v2529 = vsel %vm2375, %v2340, -inf
        %2530 = vmax.xlane.f32.xlu0 %v2529
        %v2531 = vpop.xlane.xlu0 %2530
        %v2532 = vsel %vm2375, %v2343, -inf
        %2533 = vmax.xlane.f32.xlu0 %v2532
        %v2534 = vpop.xlane.xlu0 %2533
        %v2535 = vsel %vm2375, %v2346, -inf
        %2536 = vmax.xlane.f32.xlu0 %v2535
        %v2537 = vpop.xlane.xlu0 %2536
        %v2538 = vsel %vm2375, %v2349, -inf
        %2539 = vmax.xlane.f32.xlu0 %v2538
        %v2540 = vpop.xlane.xlu0 %2539
        %v2541 = vsel %vm2375, %v2352, -inf
        %2542 = vmax.xlane.f32.xlu0 %v2541
        %v2543 = vpop.xlane.xlu0 %2542
        %v2544 = vsel %vm2375, %v2355, -inf
        %2545 = vmax.xlane.f32.xlu0 %v2544
        %v2546 = vpop.xlane.xlu0 %2545
        %v2547 = vsel %vm2375, %v2358, -inf
        %2548 = vmax.xlane.f32.xlu0 %v2547
        %v2549 = vpop.xlane.xlu0 %2548
        %v2550 = vsel %vm2375, %v2361, -inf
        %2551 = vmax.xlane.f32.xlu0 %v2550
        %v2552 = vpop.xlane.xlu0 %2551
        %v2553 = vsel %vm2375, %v2364, -inf
        %2554 = vmax.xlane.f32.xlu0 %v2553
        %v2555 = vpop.xlane.xlu0 %2554
        %v2556 = vsel %vm2375, %v2367, -inf
        %2557 = vmax.xlane.f32.xlu0 %v2556
        %v2558 = vpop.xlane.xlu0 %2557
        %v2559 = vsel %vm2375, %v2370, -inf
        %2560 = vmax.xlane.f32.xlu0 %v2559
        %v2561 = vpop.xlane.xlu0 %2560
        %v2562 = vsel %vm2375, %v2373, -inf
        %2563 = vmax.xlane.f32.xlu0 %v2562
        %v2564 = vpop.xlane.xlu0 %2563
        %v2565 = vsub.f32 %v2187, %v2378
        %v2566 = vsub.f32 %v2190, %v2381
        %v2567 = vsub.f32 %v2193, %v2384
        %v2568 = vsub.f32 %v2196, %v2387
        %v2569 = vsub.f32 %v2199, %v2390
        %v2570 = vsub.f32 %v2202, %v2393
        %v2571 = vsub.f32 %v2205, %v2396
        %v2572 = vsub.f32 %v2208, %v2399
        %v2573 = vsub.f32 %v2211, %v2402
        %v2574 = vsub.f32 %v2214, %v2405
        %v2575 = vsub.f32 %v2217, %v2408
        %v2576 = vsub.f32 %v2220, %v2411
        %v2577 = vsub.f32 %v2223, %v2414
        %v2578 = vsub.f32 %v2226, %v2417
        %v2579 = vsub.f32 %v2229, %v2420
        %v2580 = vsub.f32 %v2232, %v2423
        %v2581 = vsub.f32 %v2235, %v2426
        %v2582 = vsub.f32 %v2238, %v2429
        %v2583 = vsub.f32 %v2241, %v2432
        %v2584 = vsub.f32 %v2244, %v2435
        %v2585 = vsub.f32 %v2247, %v2438
        %v2586 = vsub.f32 %v2250, %v2441
        %v2587 = vsub.f32 %v2253, %v2444
        %v2588 = vsub.f32 %v2256, %v2447
        %v2589 = vsub.f32 %v2259, %v2450
        %v2590 = vsub.f32 %v2262, %v2453
        %v2591 = vsub.f32 %v2265, %v2456
        %v2592 = vsub.f32 %v2268, %v2459
        %v2593 = vsub.f32 %v2271, %v2462
        %v2594 = vsub.f32 %v2274, %v2465
        %v2595 = vsub.f32 %v2277, %v2468
        %v2596 = vsub.f32 %v2280, %v2471
        %v2597 = vsub.f32 %v2283, %v2474
        %v2598 = vsub.f32 %v2286, %v2477
        %v2599 = vsub.f32 %v2289, %v2480
        %v2600 = vsub.f32 %v2292, %v2483
        %v2601 = vsub.f32 %v2295, %v2486
        %v2602 = vsub.f32 %v2298, %v2489
        %v2603 = vsub.f32 %v2301, %v2492
        %v2604 = vsub.f32 %v2304, %v2495
        %v2605 = vsub.f32 %v2307, %v2498
        %v2606 = vsub.f32 %v2310, %v2501
        %v2607 = vsub.f32 %v2313, %v2504
        %v2608 = vsub.f32 %v2316, %v2507
        %v2609 = vsub.f32 %v2319, %v2510
        %v2610 = vsub.f32 %v2322, %v2513
        %v2611 = vsub.f32 %v2325, %v2516
        %v2612 = vsub.f32 %v2328, %v2519
        %v2613 = vsub.f32 %v2331, %v2522
        %v2614 = vsub.f32 %v2334, %v2525
        %v2615 = vsub.f32 %v2337, %v2528
        %v2616 = vsub.f32 %v2340, %v2531
        %v2617 = vsub.f32 %v2343, %v2534
        %v2618 = vsub.f32 %v2346, %v2537
        %v2619 = vsub.f32 %v2349, %v2540
        %v2620 = vsub.f32 %v2352, %v2543
        %v2621 = vsub.f32 %v2355, %v2546
        %v2622 = vsub.f32 %v2358, %v2549
        %v2623 = vsub.f32 %v2361, %v2552
        %v2624 = vsub.f32 %v2364, %v2555
        %v2625 = vsub.f32 %v2367, %v2558
        %v2626 = vsub.f32 %v2370, %v2561
        %v2627 = vsub.f32 %v2373, %v2564
        %v2628 = vmul.f32 %v2565, 1.442695
        %v2629 = vpow.pop %v2628
        %v2630 = vmul.f32 %v2566, 1.442695
        %v2631 = vpow.pop %v2630
        %v2632 = vmul.f32 %v2567, 1.442695
        %v2633 = vpow.pop %v2632
        %v2634 = vmul.f32 %v2568, 1.442695
        %v2635 = vpow.pop %v2634
        %v2636 = vmul.f32 %v2569, 1.442695
        %v2637 = vpow.pop %v2636
        %v2638 = vmul.f32 %v2570, 1.442695
        %v2639 = vpow.pop %v2638
        %v2640 = vmul.f32 %v2571, 1.442695
        %v2641 = vpow.pop %v2640
        %v2642 = vmul.f32 %v2572, 1.442695
        %v2643 = vpow.pop %v2642
        %v2644 = vmul.f32 %v2573, 1.442695
        %v2645 = vpow.pop %v2644
        %v2646 = vmul.f32 %v2574, 1.442695
        %v2647 = vpow.pop %v2646
        %v2648 = vmul.f32 %v2575, 1.442695
        %v2649 = vpow.pop %v2648
        %v2650 = vmul.f32 %v2576, 1.442695
        %v2651 = vpow.pop %v2650
        %v2652 = vmul.f32 %v2577, 1.442695
        %v2653 = vpow.pop %v2652
        %v2654 = vmul.f32 %v2578, 1.442695
        %v2655 = vpow.pop %v2654
        %v2656 = vmul.f32 %v2579, 1.442695
        %v2657 = vpow.pop %v2656
        %v2658 = vmul.f32 %v2580, 1.442695
        %v2659 = vpow.pop %v2658
        %v2660 = vmul.f32 %v2581, 1.442695
        %v2661 = vpow.pop %v2660
        %v2662 = vmul.f32 %v2582, 1.442695
        %v2663 = vpow.pop %v2662
        %v2664 = vmul.f32 %v2583, 1.442695
        %v2665 = vpow.pop %v2664
        %v2666 = vmul.f32 %v2584, 1.442695
        %v2667 = vpow.pop %v2666
        %v2668 = vmul.f32 %v2585, 1.442695
        %v2669 = vpow.pop %v2668
        %v2670 = vmul.f32 %v2586, 1.442695
        %v2671 = vpow.pop %v2670
        %v2672 = vmul.f32 %v2587, 1.442695
        %v2673 = vpow.pop %v2672
        %v2674 = vmul.f32 %v2588, 1.442695
        %v2675 = vpow.pop %v2674
        %v2676 = vmul.f32 %v2589, 1.442695
        %v2677 = vpow.pop %v2676
        %v2678 = vmul.f32 %v2590, 1.442695
        %v2679 = vpow.pop %v2678
        %v2680 = vmul.f32 %v2591, 1.442695
        %v2681 = vpow.pop %v2680
        %v2682 = vmul.f32 %v2592, 1.442695
        %v2683 = vpow.pop %v2682
        %v2684 = vmul.f32 %v2593, 1.442695
        %v2685 = vpow.pop %v2684
        %v2686 = vmul.f32 %v2594, 1.442695
        %v2687 = vpow.pop %v2686
        %v2688 = vmul.f32 %v2595, 1.442695
        %v2689 = vpow.pop %v2688
        %v2690 = vmul.f32 %v2596, 1.442695
        %v2691 = vpow.pop %v2690
        %v2692 = vmul.f32 %v2597, 1.442695
        %v2693 = vpow.pop %v2692
        %v2694 = vmul.f32 %v2598, 1.442695
        %v2695 = vpow.pop %v2694
        %v2696 = vmul.f32 %v2599, 1.442695
        %v2697 = vpow.pop %v2696
        %v2698 = vmul.f32 %v2600, 1.442695
        %v2699 = vpow.pop %v2698
        %v2700 = vmul.f32 %v2601, 1.442695
        %v2701 = vpow.pop %v2700
        %v2702 = vmul.f32 %v2602, 1.442695
        %v2703 = vpow.pop %v2702
        %v2704 = vmul.f32 %v2603, 1.442695
        %v2705 = vpow.pop %v2704
        %v2706 = vmul.f32 %v2604, 1.442695
        %v2707 = vpow.pop %v2706
        %v2708 = vmul.f32 %v2605, 1.442695
        %v2709 = vpow.pop %v2708
        %v2710 = vmul.f32 %v2606, 1.442695
        %v2711 = vpow.pop %v2710
        %v2712 = vmul.f32 %v2607, 1.442695
        %v2713 = vpow.pop %v2712
        %v2714 = vmul.f32 %v2608, 1.442695
        %v2715 = vpow.pop %v2714
        %v2716 = vmul.f32 %v2609, 1.442695
        %v2717 = vpow.pop %v2716
        %v2718 = vmul.f32 %v2610, 1.442695
        %v2719 = vpow.pop %v2718
        %v2720 = vmul.f32 %v2611, 1.442695
        %v2721 = vpow.pop %v2720
        %v2722 = vmul.f32 %v2612, 1.442695
        %v2723 = vpow.pop %v2722
        %v2724 = vmul.f32 %v2613, 1.442695
        %v2725 = vpow.pop %v2724
        %v2726 = vmul.f32 %v2614, 1.442695
        %v2727 = vpow.pop %v2726
        %v2728 = vmul.f32 %v2615, 1.442695
        %v2729 = vpow.pop %v2728
        %v2730 = vmul.f32 %v2616, 1.442695
        %v2731 = vpow.pop %v2730
        %v2732 = vmul.f32 %v2617, 1.442695
        %v2733 = vpow.pop %v2732
        %v2734 = vmul.f32 %v2618, 1.442695
        %v2735 = vpow.pop %v2734
        %v2736 = vmul.f32 %v2619, 1.442695
        %v2737 = vpow.pop %v2736
        %v2738 = vmul.f32 %v2620, 1.442695
        %v2739 = vpow.pop %v2738
        %v2740 = vmul.f32 %v2621, 1.442695
        %v2741 = vpow.pop %v2740
        %v2742 = vmul.f32 %v2622, 1.442695
        %v2743 = vpow.pop %v2742
        %v2744 = vmul.f32 %v2623, 1.442695
        %v2745 = vpow.pop %v2744
        %v2746 = vmul.f32 %v2624, 1.442695
        %v2747 = vpow.pop %v2746
        %v2748 = vmul.f32 %v2625, 1.442695
        %v2749 = vpow.pop %v2748
        %v2750 = vmul.f32 %v2626, 1.442695
        %v2751 = vpow.pop %v2750
        %v2752 = vmul.f32 %v2627, 1.442695
        %v2753 = vpow.pop %v2752
        %v2754 = vsel %vm2375, %v2629, 0.0
        %2755 = vadd.xlane.f32.xlu0 %v2754
        %v2756 = vpop.xlane.xlu0 %2755
        %v2757 = vsel %vm2375, %v2631, 0.0
        %2758 = vadd.xlane.f32.xlu0 %v2757
        %v2759 = vpop.xlane.xlu0 %2758
        %v2760 = vsel %vm2375, %v2633, 0.0
        %2761 = vadd.xlane.f32.xlu0 %v2760
        %v2762 = vpop.xlane.xlu0 %2761
        %v2763 = vsel %vm2375, %v2635, 0.0
        %2764 = vadd.xlane.f32.xlu0 %v2763
        %v2765 = vpop.xlane.xlu0 %2764
        %v2766 = vsel %vm2375, %v2637, 0.0
        %2767 = vadd.xlane.f32.xlu0 %v2766
        %v2768 = vpop.xlane.xlu0 %2767
        %v2769 = vsel %vm2375, %v2639, 0.0
        %2770 = vadd.xlane.f32.xlu0 %v2769
        %v2771 = vpop.xlane.xlu0 %2770
        %v2772 = vsel %vm2375, %v2641, 0.0
        %2773 = vadd.xlane.f32.xlu0 %v2772
        %v2774 = vpop.xlane.xlu0 %2773
        %v2775 = vsel %vm2375, %v2643, 0.0
        %2776 = vadd.xlane.f32.xlu0 %v2775
        %v2777 = vpop.xlane.xlu0 %2776
        %v2778 = vsel %vm2375, %v2645, 0.0
        %2779 = vadd.xlane.f32.xlu0 %v2778
        %v2780 = vpop.xlane.xlu0 %2779
        %v2781 = vsel %vm2375, %v2647, 0.0
        %2782 = vadd.xlane.f32.xlu0 %v2781
        %v2783 = vpop.xlane.xlu0 %2782
        %v2784 = vsel %vm2375, %v2649, 0.0
        %2785 = vadd.xlane.f32.xlu0 %v2784
        %v2786 = vpop.xlane.xlu0 %2785
        %v2787 = vsel %vm2375, %v2651, 0.0
        %2788 = vadd.xlane.f32.xlu0 %v2787
        %v2789 = vpop.xlane.xlu0 %2788
        %v2790 = vsel %vm2375, %v2653, 0.0
        %2791 = vadd.xlane.f32.xlu0 %v2790
        %v2792 = vpop.xlane.xlu0 %2791
        %v2793 = vsel %vm2375, %v2655, 0.0
        %2794 = vadd.xlane.f32.xlu0 %v2793
        %v2795 = vpop.xlane.xlu0 %2794
        %v2796 = vsel %vm2375, %v2657, 0.0
        %2797 = vadd.xlane.f32.xlu0 %v2796
        %v2798 = vpop.xlane.xlu0 %2797
        %v2799 = vsel %vm2375, %v2659, 0.0
        %2800 = vadd.xlane.f32.xlu0 %v2799
        %v2801 = vpop.xlane.xlu0 %2800
        %v2802 = vsel %vm2375, %v2661, 0.0
        %2803 = vadd.xlane.f32.xlu0 %v2802
        %v2804 = vpop.xlane.xlu0 %2803
        %v2805 = vsel %vm2375, %v2663, 0.0
        %2806 = vadd.xlane.f32.xlu0 %v2805
        %v2807 = vpop.xlane.xlu0 %2806
        %v2808 = vsel %vm2375, %v2665, 0.0
        %2809 = vadd.xlane.f32.xlu0 %v2808
        %v2810 = vpop.xlane.xlu0 %2809
        %v2811 = vsel %vm2375, %v2667, 0.0
        %2812 = vadd.xlane.f32.xlu0 %v2811
        %v2813 = vpop.xlane.xlu0 %2812
        %v2814 = vsel %vm2375, %v2669, 0.0
        %2815 = vadd.xlane.f32.xlu0 %v2814
        %v2816 = vpop.xlane.xlu0 %2815
        %v2817 = vsel %vm2375, %v2671, 0.0
        %2818 = vadd.xlane.f32.xlu0 %v2817
        %v2819 = vpop.xlane.xlu0 %2818
        %v2820 = vsel %vm2375, %v2673, 0.0
        %2821 = vadd.xlane.f32.xlu0 %v2820
        %v2822 = vpop.xlane.xlu0 %2821
        %v2823 = vsel %vm2375, %v2675, 0.0
        %2824 = vadd.xlane.f32.xlu0 %v2823
        %v2825 = vpop.xlane.xlu0 %2824
        %v2826 = vsel %vm2375, %v2677, 0.0
        %2827 = vadd.xlane.f32.xlu0 %v2826
        %v2828 = vpop.xlane.xlu0 %2827
        %v2829 = vsel %vm2375, %v2679, 0.0
        %2830 = vadd.xlane.f32.xlu0 %v2829
        %v2831 = vpop.xlane.xlu0 %2830
        %v2832 = vsel %vm2375, %v2681, 0.0
        %2833 = vadd.xlane.f32.xlu0 %v2832
        %v2834 = vpop.xlane.xlu0 %2833
        %v2835 = vsel %vm2375, %v2683, 0.0
        %2836 = vadd.xlane.f32.xlu0 %v2835
        %v2837 = vpop.xlane.xlu0 %2836
        %v2838 = vsel %vm2375, %v2685, 0.0
        %2839 = vadd.xlane.f32.xlu0 %v2838
        %v2840 = vpop.xlane.xlu0 %2839
        %v2841 = vsel %vm2375, %v2687, 0.0
        %2842 = vadd.xlane.f32.xlu0 %v2841
        %v2843 = vpop.xlane.xlu0 %2842
        %v2844 = vsel %vm2375, %v2689, 0.0
        %2845 = vadd.xlane.f32.xlu0 %v2844
        %v2846 = vpop.xlane.xlu0 %2845
        %v2847 = vsel %vm2375, %v2691, 0.0
        %2848 = vadd.xlane.f32.xlu0 %v2847
        %v2849 = vpop.xlane.xlu0 %2848
        %v2850 = vsel %vm2375, %v2693, 0.0
        %2851 = vadd.xlane.f32.xlu0 %v2850
        %v2852 = vpop.xlane.xlu0 %2851
        %v2853 = vsel %vm2375, %v2695, 0.0
        %2854 = vadd.xlane.f32.xlu0 %v2853
        %v2855 = vpop.xlane.xlu0 %2854
        %v2856 = vsel %vm2375, %v2697, 0.0
        %2857 = vadd.xlane.f32.xlu0 %v2856
        %v2858 = vpop.xlane.xlu0 %2857
        %v2859 = vsel %vm2375, %v2699, 0.0
        %2860 = vadd.xlane.f32.xlu0 %v2859
        %v2861 = vpop.xlane.xlu0 %2860
        %v2862 = vsel %vm2375, %v2701, 0.0
        %2863 = vadd.xlane.f32.xlu0 %v2862
        %v2864 = vpop.xlane.xlu0 %2863
        %v2865 = vsel %vm2375, %v2703, 0.0
        %2866 = vadd.xlane.f32.xlu0 %v2865
        %v2867 = vpop.xlane.xlu0 %2866
        %v2868 = vsel %vm2375, %v2705, 0.0
        %2869 = vadd.xlane.f32.xlu0 %v2868
        %v2870 = vpop.xlane.xlu0 %2869
        %v2871 = vsel %vm2375, %v2707, 0.0
        %2872 = vadd.xlane.f32.xlu0 %v2871
        %v2873 = vpop.xlane.xlu0 %2872
        %v2874 = vsel %vm2375, %v2709, 0.0
        %2875 = vadd.xlane.f32.xlu0 %v2874
        %v2876 = vpop.xlane.xlu0 %2875
        %v2877 = vsel %vm2375, %v2711, 0.0
        %2878 = vadd.xlane.f32.xlu0 %v2877
        %v2879 = vpop.xlane.xlu0 %2878
        %v2880 = vsel %vm2375, %v2713, 0.0
        %2881 = vadd.xlane.f32.xlu0 %v2880
        %v2882 = vpop.xlane.xlu0 %2881
        %v2883 = vsel %vm2375, %v2715, 0.0
        %2884 = vadd.xlane.f32.xlu0 %v2883
        %v2885 = vpop.xlane.xlu0 %2884
        %v2886 = vsel %vm2375, %v2717, 0.0
        %2887 = vadd.xlane.f32.xlu0 %v2886
        %v2888 = vpop.xlane.xlu0 %2887
        %v2889 = vsel %vm2375, %v2719, 0.0
        %2890 = vadd.xlane.f32.xlu0 %v2889
        %v2891 = vpop.xlane.xlu0 %2890
        %v2892 = vsel %vm2375, %v2721, 0.0
        %2893 = vadd.xlane.f32.xlu0 %v2892
        %v2894 = vpop.xlane.xlu0 %2893
        %v2895 = vsel %vm2375, %v2723, 0.0
        %2896 = vadd.xlane.f32.xlu0 %v2895
        %v2897 = vpop.xlane.xlu0 %2896
        %v2898 = vsel %vm2375, %v2725, 0.0
        %2899 = vadd.xlane.f32.xlu0 %v2898
        %v2900 = vpop.xlane.xlu0 %2899
        %v2901 = vsel %vm2375, %v2727, 0.0
        %2902 = vadd.xlane.f32.xlu0 %v2901
        %v2903 = vpop.xlane.xlu0 %2902
        %v2904 = vsel %vm2375, %v2729, 0.0
        %2905 = vadd.xlane.f32.xlu0 %v2904
        %v2906 = vpop.xlane.xlu0 %2905
        %v2907 = vsel %vm2375, %v2731, 0.0
        %2908 = vadd.xlane.f32.xlu0 %v2907
        %v2909 = vpop.xlane.xlu0 %2908
        %v2910 = vsel %vm2375, %v2733, 0.0
        %2911 = vadd.xlane.f32.xlu0 %v2910
        %v2912 = vpop.xlane.xlu0 %2911
        %v2913 = vsel %vm2375, %v2735, 0.0
        %2914 = vadd.xlane.f32.xlu0 %v2913
        %v2915 = vpop.xlane.xlu0 %2914
        %v2916 = vsel %vm2375, %v2737, 0.0
        %2917 = vadd.xlane.f32.xlu0 %v2916
        %v2918 = vpop.xlane.xlu0 %2917
        %v2919 = vsel %vm2375, %v2739, 0.0
        %2920 = vadd.xlane.f32.xlu0 %v2919
        %v2921 = vpop.xlane.xlu0 %2920
        %v2922 = vsel %vm2375, %v2741, 0.0
        %2923 = vadd.xlane.f32.xlu0 %v2922
        %v2924 = vpop.xlane.xlu0 %2923
        %v2925 = vsel %vm2375, %v2743, 0.0
        %2926 = vadd.xlane.f32.xlu0 %v2925
        %v2927 = vpop.xlane.xlu0 %2926
        %v2928 = vsel %vm2375, %v2745, 0.0
        %2929 = vadd.xlane.f32.xlu0 %v2928
        %v2930 = vpop.xlane.xlu0 %2929
        %v2931 = vsel %vm2375, %v2747, 0.0
        %2932 = vadd.xlane.f32.xlu0 %v2931
        %v2933 = vpop.xlane.xlu0 %2932
        %v2934 = vsel %vm2375, %v2749, 0.0
        %2935 = vadd.xlane.f32.xlu0 %v2934
        %v2936 = vpop.xlane.xlu0 %2935
        %v2937 = vsel %vm2375, %v2751, 0.0
        %2938 = vadd.xlane.f32.xlu0 %v2937
        %v2939 = vpop.xlane.xlu0 %2938
        %v2940 = vsel %vm2375, %v2753, 0.0
        %2941 = vadd.xlane.f32.xlu0 %v2940
        %v2942 = vpop.xlane.xlu0 %2941
        %v2943 = vlog2.pop %v2756
        %v2944 = vmul.f32 %v2943, 0.6931472
        %v2945 = vlog2.pop %v2759
        %v2946 = vmul.f32 %v2945, 0.6931472
        %v2947 = vlog2.pop %v2762
        %v2948 = vmul.f32 %v2947, 0.6931472
        %v2949 = vlog2.pop %v2765
        %v2950 = vmul.f32 %v2949, 0.6931472
        %v2951 = vlog2.pop %v2768
        %v2952 = vmul.f32 %v2951, 0.6931472
        %v2953 = vlog2.pop %v2771
        %v2954 = vmul.f32 %v2953, 0.6931472
        %v2955 = vlog2.pop %v2774
        %v2956 = vmul.f32 %v2955, 0.6931472
        %v2957 = vlog2.pop %v2777
        %v2958 = vmul.f32 %v2957, 0.6931472
        %v2959 = vlog2.pop %v2780
        %v2960 = vmul.f32 %v2959, 0.6931472
        %v2961 = vlog2.pop %v2783
        %v2962 = vmul.f32 %v2961, 0.6931472
        %v2963 = vlog2.pop %v2786
        %v2964 = vmul.f32 %v2963, 0.6931472
        %v2965 = vlog2.pop %v2789
        %v2966 = vmul.f32 %v2965, 0.6931472
        %v2967 = vlog2.pop %v2792
        %v2968 = vmul.f32 %v2967, 0.6931472
        %v2969 = vlog2.pop %v2795
        %v2970 = vmul.f32 %v2969, 0.6931472
        %v2971 = vlog2.pop %v2798
        %v2972 = vmul.f32 %v2971, 0.6931472
        %v2973 = vlog2.pop %v2801
        %v2974 = vmul.f32 %v2973, 0.6931472
        %v2975 = vlog2.pop %v2804
        %v2976 = vmul.f32 %v2975, 0.6931472
        %v2977 = vlog2.pop %v2807
        %v2978 = vmul.f32 %v2977, 0.6931472
        %v2979 = vlog2.pop %v2810
        %v2980 = vmul.f32 %v2979, 0.6931472
        %v2981 = vlog2.pop %v2813
        %v2982 = vmul.f32 %v2981, 0.6931472
        %v2983 = vlog2.pop %v2816
        %v2984 = vmul.f32 %v2983, 0.6931472
        %v2985 = vlog2.pop %v2819
        %v2986 = vmul.f32 %v2985, 0.6931472
        %v2987 = vlog2.pop %v2822
        %v2988 = vmul.f32 %v2987, 0.6931472
        %v2989 = vlog2.pop %v2825
        %v2990 = vmul.f32 %v2989, 0.6931472
        %v2991 = vlog2.pop %v2828
        %v2992 = vmul.f32 %v2991, 0.6931472
        %v2993 = vlog2.pop %v2831
        %v2994 = vmul.f32 %v2993, 0.6931472
        %v2995 = vlog2.pop %v2834
        %v2996 = vmul.f32 %v2995, 0.6931472
        %v2997 = vlog2.pop %v2837
        %v2998 = vmul.f32 %v2997, 0.6931472
        %v2999 = vlog2.pop %v2840
        %v3000 = vmul.f32 %v2999, 0.6931472
        %v3001 = vlog2.pop %v2843
        %v3002 = vmul.f32 %v3001, 0.6931472
        %v3003 = vlog2.pop %v2846
        %v3004 = vmul.f32 %v3003, 0.6931472
        %v3005 = vlog2.pop %v2849
        %v3006 = vmul.f32 %v3005, 0.6931472
        %v3007 = vlog2.pop %v2852
        %v3008 = vmul.f32 %v3007, 0.6931472
        %v3009 = vlog2.pop %v2855
        %v3010 = vmul.f32 %v3009, 0.6931472
        %v3011 = vlog2.pop %v2858
        %v3012 = vmul.f32 %v3011, 0.6931472
        %v3013 = vlog2.pop %v2861
        %v3014 = vmul.f32 %v3013, 0.6931472
        %v3015 = vlog2.pop %v2864
        %v3016 = vmul.f32 %v3015, 0.6931472
        %v3017 = vlog2.pop %v2867
        %v3018 = vmul.f32 %v3017, 0.6931472
        %v3019 = vlog2.pop %v2870
        %v3020 = vmul.f32 %v3019, 0.6931472
        %v3021 = vlog2.pop %v2873
        %v3022 = vmul.f32 %v3021, 0.6931472
        %v3023 = vlog2.pop %v2876
        %v3024 = vmul.f32 %v3023, 0.6931472
        %v3025 = vlog2.pop %v2879
        %v3026 = vmul.f32 %v3025, 0.6931472
        %v3027 = vlog2.pop %v2882
        %v3028 = vmul.f32 %v3027, 0.6931472
        %v3029 = vlog2.pop %v2885
        %v3030 = vmul.f32 %v3029, 0.6931472
        %v3031 = vlog2.pop %v2888
        %v3032 = vmul.f32 %v3031, 0.6931472
        %v3033 = vlog2.pop %v2891
        %v3034 = vmul.f32 %v3033, 0.6931472
        %v3035 = vlog2.pop %v2894
        %v3036 = vmul.f32 %v3035, 0.6931472
        %v3037 = vlog2.pop %v2897
        %v3038 = vmul.f32 %v3037, 0.6931472
        %v3039 = vlog2.pop %v2900
        %v3040 = vmul.f32 %v3039, 0.6931472
        %v3041 = vlog2.pop %v2903
        %v3042 = vmul.f32 %v3041, 0.6931472
        %v3043 = vlog2.pop %v2906
        %v3044 = vmul.f32 %v3043, 0.6931472
        %v3045 = vlog2.pop %v2909
        %v3046 = vmul.f32 %v3045, 0.6931472
        %v3047 = vlog2.pop %v2912
        %v3048 = vmul.f32 %v3047, 0.6931472
        %v3049 = vlog2.pop %v2915
        %v3050 = vmul.f32 %v3049, 0.6931472
        %v3051 = vlog2.pop %v2918
        %v3052 = vmul.f32 %v3051, 0.6931472
        %v3053 = vlog2.pop %v2921
        %v3054 = vmul.f32 %v3053, 0.6931472
        %v3055 = vlog2.pop %v2924
        %v3056 = vmul.f32 %v3055, 0.6931472
        %v3057 = vlog2.pop %v2927
        %v3058 = vmul.f32 %v3057, 0.6931472
        %v3059 = vlog2.pop %v2930
        %v3060 = vmul.f32 %v3059, 0.6931472
        %v3061 = vlog2.pop %v2933
        %v3062 = vmul.f32 %v3061, 0.6931472
        %v3063 = vlog2.pop %v2936
        %v3064 = vmul.f32 %v3063, 0.6931472
        %v3065 = vlog2.pop %v2939
        %v3066 = vmul.f32 %v3065, 0.6931472
        %v3067 = vlog2.pop %v2942
        %v3068 = vmul.f32 %v3067, 0.6931472
        %v3069 = vadd.f32 %v2378, %v2944
        %v3070 = vadd.f32 %v2381, %v2946
        %v3071 = vadd.f32 %v2384, %v2948
        %v3072 = vadd.f32 %v2387, %v2950
        %v3073 = vadd.f32 %v2390, %v2952
        %v3074 = vadd.f32 %v2393, %v2954
        %v3075 = vadd.f32 %v2396, %v2956
        %v3076 = vadd.f32 %v2399, %v2958
        %v3077 = vadd.f32 %v2402, %v2960
        %v3078 = vadd.f32 %v2405, %v2962
        %v3079 = vadd.f32 %v2408, %v2964
        %v3080 = vadd.f32 %v2411, %v2966
        %v3081 = vadd.f32 %v2414, %v2968
        %v3082 = vadd.f32 %v2417, %v2970
        %v3083 = vadd.f32 %v2420, %v2972
        %v3084 = vadd.f32 %v2423, %v2974
        %v3085 = vadd.f32 %v2426, %v2976
        %v3086 = vadd.f32 %v2429, %v2978
        %v3087 = vadd.f32 %v2432, %v2980
        %v3088 = vadd.f32 %v2435, %v2982
        %v3089 = vadd.f32 %v2438, %v2984
        %v3090 = vadd.f32 %v2441, %v2986
        %v3091 = vadd.f32 %v2444, %v2988
        %v3092 = vadd.f32 %v2447, %v2990
        %v3093 = vadd.f32 %v2450, %v2992
        %v3094 = vadd.f32 %v2453, %v2994
        %v3095 = vadd.f32 %v2456, %v2996
        %v3096 = vadd.f32 %v2459, %v2998
        %v3097 = vadd.f32 %v2462, %v3000
        %v3098 = vadd.f32 %v2465, %v3002
        %v3099 = vadd.f32 %v2468, %v3004
        %v3100 = vadd.f32 %v2471, %v3006
        %v3101 = vadd.f32 %v2474, %v3008
        %v3102 = vadd.f32 %v2477, %v3010
        %v3103 = vadd.f32 %v2480, %v3012
        %v3104 = vadd.f32 %v2483, %v3014
        %v3105 = vadd.f32 %v2486, %v3016
        %v3106 = vadd.f32 %v2489, %v3018
        %v3107 = vadd.f32 %v2492, %v3020
        %v3108 = vadd.f32 %v2495, %v3022
        %v3109 = vadd.f32 %v2498, %v3024
        %v3110 = vadd.f32 %v2501, %v3026
        %v3111 = vadd.f32 %v2504, %v3028
        %v3112 = vadd.f32 %v2507, %v3030
        %v3113 = vadd.f32 %v2510, %v3032
        %v3114 = vadd.f32 %v2513, %v3034
        %v3115 = vadd.f32 %v2516, %v3036
        %v3116 = vadd.f32 %v2519, %v3038
        %v3117 = vadd.f32 %v2522, %v3040
        %v3118 = vadd.f32 %v2525, %v3042
        %v3119 = vadd.f32 %v2528, %v3044
        %v3120 = vadd.f32 %v2531, %v3046
        %v3121 = vadd.f32 %v2534, %v3048
        %v3122 = vadd.f32 %v2537, %v3050
        %v3123 = vadd.f32 %v2540, %v3052
        %v3124 = vadd.f32 %v2543, %v3054
        %v3125 = vadd.f32 %v2546, %v3056
        %v3126 = vadd.f32 %v2549, %v3058
        %v3127 = vadd.f32 %v2552, %v3060
        %v3128 = vadd.f32 %v2555, %v3062
        %v3129 = vadd.f32 %v2558, %v3064
        %v3130 = vadd.f32 %v2561, %v3066
        %v3131 = vadd.f32 %v2564, %v3068
        %v3132 = vsub.f32 %v2187, %v3069
        %v3133 = vsub.f32 %v2190, %v3070
        %v3134 = vsub.f32 %v2193, %v3071
        %v3135 = vsub.f32 %v2196, %v3072
        %v3136 = vsub.f32 %v2199, %v3073
        %v3137 = vsub.f32 %v2202, %v3074
        %v3138 = vsub.f32 %v2205, %v3075
        %v3139 = vsub.f32 %v2208, %v3076
        %v3140 = vsub.f32 %v2211, %v3077
        %v3141 = vsub.f32 %v2214, %v3078
        %v3142 = vsub.f32 %v2217, %v3079
        %v3143 = vsub.f32 %v2220, %v3080
        %v3144 = vsub.f32 %v2223, %v3081
        %v3145 = vsub.f32 %v2226, %v3082
        %v3146 = vsub.f32 %v2229, %v3083
        %v3147 = vsub.f32 %v2232, %v3084
        %v3148 = vsub.f32 %v2235, %v3085
        %v3149 = vsub.f32 %v2238, %v3086
        %v3150 = vsub.f32 %v2241, %v3087
        %v3151 = vsub.f32 %v2244, %v3088
        %v3152 = vsub.f32 %v2247, %v3089
        %v3153 = vsub.f32 %v2250, %v3090
        %v3154 = vsub.f32 %v2253, %v3091
        %v3155 = vsub.f32 %v2256, %v3092
        %v3156 = vsub.f32 %v2259, %v3093
        %v3157 = vsub.f32 %v2262, %v3094
        %v3158 = vsub.f32 %v2265, %v3095
        %v3159 = vsub.f32 %v2268, %v3096
        %v3160 = vsub.f32 %v2271, %v3097
        %v3161 = vsub.f32 %v2274, %v3098
        %v3162 = vsub.f32 %v2277, %v3099
        %v3163 = vsub.f32 %v2280, %v3100
        %v3164 = vsub.f32 %v2283, %v3101
        %v3165 = vsub.f32 %v2286, %v3102
        %v3166 = vsub.f32 %v2289, %v3103
        %v3167 = vsub.f32 %v2292, %v3104
        %v3168 = vsub.f32 %v2295, %v3105
        %v3169 = vsub.f32 %v2298, %v3106
        %v3170 = vsub.f32 %v2301, %v3107
        %v3171 = vsub.f32 %v2304, %v3108
        %v3172 = vsub.f32 %v2307, %v3109
        %v3173 = vsub.f32 %v2310, %v3110
        %v3174 = vsub.f32 %v2313, %v3111
        %v3175 = vsub.f32 %v2316, %v3112
        %v3176 = vsub.f32 %v2319, %v3113
        %v3177 = vsub.f32 %v2322, %v3114
        %v3178 = vsub.f32 %v2325, %v3115
        %v3179 = vsub.f32 %v2328, %v3116
        %v3180 = vsub.f32 %v2331, %v3117
        %v3181 = vsub.f32 %v2334, %v3118
        %v3182 = vsub.f32 %v2337, %v3119
        %v3183 = vsub.f32 %v2340, %v3120
        %v3184 = vsub.f32 %v2343, %v3121
        %v3185 = vsub.f32 %v2346, %v3122
        %v3186 = vsub.f32 %v2349, %v3123
        %v3187 = vsub.f32 %v2352, %v3124
        %v3188 = vsub.f32 %v2355, %v3125
        %v3189 = vsub.f32 %v2358, %v3126
        %v3190 = vsub.f32 %v2361, %v3127
        %v3191 = vsub.f32 %v2364, %v3128
        %v3192 = vsub.f32 %v2367, %v3129
        %v3193 = vsub.f32 %v2370, %v3130
        %v3194 = vsub.f32 %v2373, %v3131
        %3195 = vst.msk [vmem:[%s177] sm:$0xff] %vm2375, %v3132
        %3196 = vst.msk [vmem:[%s177 + $0x8] sm:$0xff] %vm2375, %v3133
        %3197 = vst.msk [vmem:[%s177 + $0x10] sm:$0xff] %vm2375, %v3134
        %3198 = vst.msk [vmem:[%s177 + $0x18] sm:$0xff] %vm2375, %v3135
        %3199 = vst.msk [vmem:[%s177 + $0x20] sm:$0xff] %vm2375, %v3136
        %3200 = vst.msk [vmem:[%s177 + $0x28] sm:$0xff] %vm2375, %v3137
        %3201 = vst.msk [vmem:[%s177 + $0x30] sm:$0xff] %vm2375, %v3138
        %3202 = vst.msk [vmem:[%s177 + $0x38] sm:$0xff] %vm2375, %v3139
        %3203 = vst.msk [vmem:[%s177 + $0x40] sm:$0xff] %vm2375, %v3140
        %3204 = vst.msk [vmem:[%s177 + $0x48] sm:$0xff] %vm2375, %v3141
        %3205 = vst.msk [vmem:[%s177 + $0x50] sm:$0xff] %vm2375, %v3142
        %3206 = vst.msk [vmem:[%s177 + $0x58] sm:$0xff] %vm2375, %v3143
        %3207 = vst.msk [vmem:[%s177 + $0x60] sm:$0xff] %vm2375, %v3144
        %3208 = vst.msk [vmem:[%s177 + $0x68] sm:$0xff] %vm2375, %v3145
        %3209 = vst.msk [vmem:[%s177 + $0x70] sm:$0xff] %vm2375, %v3146
        %3210 = vst.msk [vmem:[%s177 + $0x78] sm:$0xff] %vm2375, %v3147
        %3211 = vst.msk [vmem:[%s177 + $0x80] sm:$0xff] %vm2375, %v3148
        %3212 = vst.msk [vmem:[%s177 + $0x88] sm:$0xff] %vm2375, %v3149
        %3213 = vst.msk [vmem:[%s177 + $0x90] sm:$0xff] %vm2375, %v3150
        %3214 = vst.msk [vmem:[%s177 + $0x98] sm:$0xff] %vm2375, %v3151
        %3215 = vst.msk [vmem:[%s177 + $0xa0] sm:$0xff] %vm2375, %v3152
        %3216 = vst.msk [vmem:[%s177 + $0xa8] sm:$0xff] %vm2375, %v3153
        %3217 = vst.msk [vmem:[%s177 + $0xb0] sm:$0xff] %vm2375, %v3154
        %3218 = vst.msk [vmem:[%s177 + $0xb8] sm:$0xff] %vm2375, %v3155
        %3219 = vst.msk [vmem:[%s177 + $0xc0] sm:$0xff] %vm2375, %v3156
        %3220 = vst.msk [vmem:[%s177 + $0xc8] sm:$0xff] %vm2375, %v3157
        %3221 = vst.msk [vmem:[%s177 + $0xd0] sm:$0xff] %vm2375, %v3158
        %3222 = vst.msk [vmem:[%s177 + $0xd8] sm:$0xff] %vm2375, %v3159
        %3223 = vst.msk [vmem:[%s177 + $0xe0] sm:$0xff] %vm2375, %v3160
        %3224 = vst.msk [vmem:[%s177 + $0xe8] sm:$0xff] %vm2375, %v3161
        %3225 = vst.msk [vmem:[%s177 + $0xf0] sm:$0xff] %vm2375, %v3162
        %3226 = vst.msk [vmem:[%s177 + $0xf8] sm:$0xff] %vm2375, %v3163
        %3227 = vst.msk [vmem:[%s177 + $0x100] sm:$0xff] %vm2375, %v3164
        %3228 = vst.msk [vmem:[%s177 + $0x108] sm:$0xff] %vm2375, %v3165
        %3229 = vst.msk [vmem:[%s177 + $0x110] sm:$0xff] %vm2375, %v3166
        %3230 = vst.msk [vmem:[%s177 + $0x118] sm:$0xff] %vm2375, %v3167
        %3231 = vst.msk [vmem:[%s177 + $0x120] sm:$0xff] %vm2375, %v3168
        %3232 = vst.msk [vmem:[%s177 + $0x128] sm:$0xff] %vm2375, %v3169
        %3233 = vst.msk [vmem:[%s177 + $0x130] sm:$0xff] %vm2375, %v3170
        %3234 = vst.msk [vmem:[%s177 + $0x138] sm:$0xff] %vm2375, %v3171
        %3235 = vst.msk [vmem:[%s177 + $0x140] sm:$0xff] %vm2375, %v3172
        %3236 = vst.msk [vmem:[%s177 + $0x148] sm:$0xff] %vm2375, %v3173
        %3237 = vst.msk [vmem:[%s177 + $0x150] sm:$0xff] %vm2375, %v3174
        %3238 = vst.msk [vmem:[%s177 + $0x158] sm:$0xff] %vm2375, %v3175
        %3239 = vst.msk [vmem:[%s177 + $0x160] sm:$0xff] %vm2375, %v3176
        %3240 = vst.msk [vmem:[%s177 + $0x168] sm:$0xff] %vm2375, %v3177
        %3241 = vst.msk [vmem:[%s177 + $0x170] sm:$0xff] %vm2375, %v3178
        %3242 = vst.msk [vmem:[%s177 + $0x178] sm:$0xff] %vm2375, %v3179
        %3243 = vst.msk [vmem:[%s177 + $0x180] sm:$0xff] %vm2375, %v3180
        %3244 = vst.msk [vmem:[%s177 + $0x188] sm:$0xff] %vm2375, %v3181
        %3245 = vst.msk [vmem:[%s177 + $0x190] sm:$0xff] %vm2375, %v3182
        %3246 = vst.msk [vmem:[%s177 + $0x198] sm:$0xff] %vm2375, %v3183
        %3247 = vst.msk [vmem:[%s177 + $0x1a0] sm:$0xff] %vm2375, %v3184
        %3248 = vst.msk [vmem:[%s177 + $0x1a8] sm:$0xff] %vm2375, %v3185
        %3249 = vst.msk [vmem:[%s177 + $0x1b0] sm:$0xff] %vm2375, %v3186
        %3250 = vst.msk [vmem:[%s177 + $0x1b8] sm:$0xff] %vm2375, %v3187
        %3251 = vst.msk [vmem:[%s177 + $0x1c0] sm:$0xff] %vm2375, %v3188
        %3252 = vst.msk [vmem:[%s177 + $0x1c8] sm:$0xff] %vm2375, %v3189
        %3253 = vst.msk [vmem:[%s177 + $0x1d0] sm:$0xff] %vm2375, %v3190
        %3254 = vst.msk [vmem:[%s177 + $0x1d8] sm:$0xff] %vm2375, %v3191
        %3255 = vst.msk [vmem:[%s177 + $0x1e0] sm:$0xff] %vm2375, %v3192
        %3256 = vst.msk [vmem:[%s177 + $0x1e8] sm:$0xff] %vm2375, %v3193
        %3257 = vst.msk [vmem:[%s177 + $0x1f0] sm:$0xff] %vm2375, %v3194
        %s3258 = sand.u32 %s90, 1
        %s3259 = sand.u32 %s90, 1
        %s3260 = smul.addr %s3259, 504
        %s3261 = scalar_lea.vmem [#allocation2], %s3260
        // Predicated region
        $region33: #{tpu_custom_call.1} parent=31 // pred_check
          %p3262 = pneg %p100
        $region34: #{tpu_custom_call.1} parent=31 // pred_check_branch
          %3264 = sbr.rel (%p3262) target = $region36
        $region35: #{tpu_custom_call.1} parent=31 // pred_region
          %s3265 = smul.u32 63, %s14
          %s3266 = ssub.s32 125, %s3265
          %p3267 = scmp.lt.s32.totalorder %s3266, 63
          %s3268 = scalar_select %p3267, %s3266, 63
          %s3269 = smul.u32 8, %s3268
          %p3270 = scmp.ne.s32.totalorder 0, %s3269
          %s3271 = smul.addr %s3265, 8
          %s3272 = scalar_lea.vmem %s3, %s3271
          // Predicated region
          $region37: #{tpu_custom_call.1} parent=35 // pred_check
            %p3273 = pneg %p3270
          $region38: #{tpu_custom_call.1} parent=35 // pred_check_branch
            %3275 = sbr.rel (%p3273) target = $region40
          $region39: #{tpu_custom_call.1} parent=35 // pred_region
            // Predicated region
            $region41: #{tpu_custom_call.1} parent=39 // pred_check
              _
            $region42: #{tpu_custom_call.1} parent=39 // pred_check_branch
              %3277 = sbr.rel (0) target = $region44
            $region43: #{tpu_custom_call.1} parent=39 // pred_region
              // Predicated region
              $region63: #{tpu_custom_call.1} parent=43 // pred_check
                _
              $region64: #{tpu_custom_call.1} parent=43 // pred_check_branch
                %3389 = sbr.rel (0) target = $region66
              $region65: #{tpu_custom_call.1} parent=43 // pred_region
                %s3390 = sshrl.u32 %s3268, 5
                // While loop
                $region67: #{tpu_custom_call.1} parent=65 // loop_pre_header
                  _
                $region68: #{tpu_custom_call.1} parent=65 // loop_header
                  %s3392 = sphi 0, %s3394
                  %p3393 = scmp.ge.s32.totalorder %s3392, %s3390
                  %s3397 = sphi 0, %s3466
                  %s3398 = sphi %s3261, %s3469
                  %s3399 = sphi %s3272, %s3470
                $region69: #{tpu_custom_call.1} parent=65 // loop_header_branch
                  %3396 = sbr.rel (%p3393) target = $region73
                $region70: #{tpu_custom_call.1} parent=65 // loop_body
                  %v3400 = vld [vmem:[%s3398] sm:$0xff]
                  %3401 = vst [vmem:[%s3399] sm:$0xff] %v3400
                  %v3402 = vld [vmem:[%s3398 + $0x8] sm:$0xff]
                  %3403 = vst [vmem:[%s3399 + $0x8] sm:$0xff] %v3402
                  %v3404 = vld [vmem:[%s3398 + $0x10] sm:$0xff]
                  %3405 = vst [vmem:[%s3399 + $0x10] sm:$0xff] %v3404
                  %v3406 = vld [vmem:[%s3398 + $0x18] sm:$0xff]
                  %3407 = vst [vmem:[%s3399 + $0x18] sm:$0xff] %v3406
                  %v3408 = vld [vmem:[%s3398 + $0x20] sm:$0xff]
                  %3409 = vst [vmem:[%s3399 + $0x20] sm:$0xff] %v3408
                  %v3410 = vld [vmem:[%s3398 + $0x28] sm:$0xff]
                  %3411 = vst [vmem:[%s3399 + $0x28] sm:$0xff] %v3410
                  %v3412 = vld [vmem:[%s3398 + $0x30] sm:$0xff]
                  %3413 = vst [vmem:[%s3399 + $0x30] sm:$0xff] %v3412
                  %v3414 = vld [vmem:[%s3398 + $0x38] sm:$0xff]
                  %3415 = vst [vmem:[%s3399 + $0x38] sm:$0xff] %v3414
                  %v3416 = vld [vmem:[%s3398 + $0x40] sm:$0xff]
                  %3417 = vst [vmem:[%s3399 + $0x40] sm:$0xff] %v3416
                  %v3418 = vld [vmem:[%s3398 + $0x48] sm:$0xff]
                  %3419 = vst [vmem:[%s3399 + $0x48] sm:$0xff] %v3418
                  %v3420 = vld [vmem:[%s3398 + $0x50] sm:$0xff]
                  %3421 = vst [vmem:[%s3399 + $0x50] sm:$0xff] %v3420
                  %v3422 = vld [vmem:[%s3398 + $0x58] sm:$0xff]
                  %3423 = vst [vmem:[%s3399 + $0x58] sm:$0xff] %v3422
                  %v3424 = vld [vmem:[%s3398 + $0x60] sm:$0xff]
                  %3425 = vst [vmem:[%s3399 + $0x60] sm:$0xff] %v3424
                  %v3426 = vld [vmem:[%s3398 + $0x68] sm:$0xff]
                  %3427 = vst [vmem:[%s3399 + $0x68] sm:$0xff] %v3426
                  %v3428 = vld [vmem:[%s3398 + $0x70] sm:$0xff]
                  %3429 = vst [vmem:[%s3399 + $0x70] sm:$0xff] %v3428
                  %v3430 = vld [vmem:[%s3398 + $0x78] sm:$0xff]
                  %3431 = vst [vmem:[%s3399 + $0x78] sm:$0xff] %v3430
                  %v3432 = vld [vmem:[%s3398 + $0x80] sm:$0xff]
                  %3433 = vst [vmem:[%s3399 + $0x80] sm:$0xff] %v3432
                  %v3434 = vld [vmem:[%s3398 + $0x88] sm:$0xff]
                  %3435 = vst [vmem:[%s3399 + $0x88] sm:$0xff] %v3434
                  %v3436 = vld [vmem:[%s3398 + $0x90] sm:$0xff]
                  %3437 = vst [vmem:[%s3399 + $0x90] sm:$0xff] %v3436
                  %v3438 = vld [vmem:[%s3398 + $0x98] sm:$0xff]
                  %3439 = vst [vmem:[%s3399 + $0x98] sm:$0xff] %v3438
                  %v3440 = vld [vmem:[%s3398 + $0xa0] sm:$0xff]
                  %3441 = vst [vmem:[%s3399 + $0xa0] sm:$0xff] %v3440
                  %v3442 = vld [vmem:[%s3398 + $0xa8] sm:$0xff]
                  %3443 = vst [vmem:[%s3399 + $0xa8] sm:$0xff] %v3442
                  %v3444 = vld [vmem:[%s3398 + $0xb0] sm:$0xff]
                  %3445 = vst [vmem:[%s3399 + $0xb0] sm:$0xff] %v3444
                  %v3446 = vld [vmem:[%s3398 + $0xb8] sm:$0xff]
                  %3447 = vst [vmem:[%s3399 + $0xb8] sm:$0xff] %v3446
                  %v3448 = vld [vmem:[%s3398 + $0xc0] sm:$0xff]
                  %3449 = vst [vmem:[%s3399 + $0xc0] sm:$0xff] %v3448
                  %v3450 = vld [vmem:[%s3398 + $0xc8] sm:$0xff]
                  %3451 = vst [vmem:[%s3399 + $0xc8] sm:$0xff] %v3450
                  %v3452 = vld [vmem:[%s3398 + $0xd0] sm:$0xff]
                  %3453 = vst [vmem:[%s3399 + $0xd0] sm:$0xff] %v3452
                  %v3454 = vld [vmem:[%s3398 + $0xd8] sm:$0xff]
                  %3455 = vst [vmem:[%s3399 + $0xd8] sm:$0xff] %v3454
                  %v3456 = vld [vmem:[%s3398 + $0xe0] sm:$0xff]
                  %3457 = vst [vmem:[%s3399 + $0xe0] sm:$0xff] %v3456
                  %v3458 = vld [vmem:[%s3398 + $0xe8] sm:$0xff]
                  %3459 = vst [vmem:[%s3399 + $0xe8] sm:$0xff] %v3458
                  %v3460 = vld [vmem:[%s3398 + $0xf0] sm:$0xff]
                  %3461 = vst [vmem:[%s3399 + $0xf0] sm:$0xff] %v3460
                  %v3462 = vld [vmem:[%s3398 + $0xf8] sm:$0xff]
                  %3463 = vst [vmem:[%s3399 + $0xf8] sm:$0xff] %v3462
                  %s3464 = sadd.s32 1, %s3397
                  %p3465 = scmp.ge.s32.totalorder %s3464, %s3390
                  %s3466 = scalar_select %p3465, 0, %s3464
                  %s3467 = smul.u32 %s3466, 256
                  %s3468 = smul.u32 %s3466, 256
                  %s3469 = scalar_lea.vmem %s3261, %s3467 [#allocation2]
                  %s3470 = scalar_lea.vmem %s3272, %s3468
                $region71: #{tpu_custom_call.1} parent=65 // loop_footer
                  %s3394 = sadd.s32 %s3392, 1
                $region72: #{tpu_custom_call.1} parent=65 // loop_footer_branch
                  %3391 = sbr.rel target = $region68
                $region73: #{tpu_custom_call.1} parent=65 // loop_exit
                  _
                %s3471 = sshrl.u32 %s3268, 5
                %s3472 = sand.u32 %s3268, 31
                %s3473 = smul.u32 %s3471, 32
                %s3474 = smul.u32 8, %s3473
                %s3475 = scalar_lea.vmem %s3261, %s3474 [#allocation2]
                %s3476 = smul.u32 8, %s3473
                %s3477 = scalar_lea.vmem %s3272, %s3476
                // While loop
                $region74: #{tpu_custom_call.1} parent=65 // loop_pre_header
                  _
                $region75: #{tpu_custom_call.1} parent=65 // loop_header
                  %s3479 = sphi 0, %s3481
                  %p3480 = scmp.ge.s32.totalorder %s3479, %s3472
                  %s3484 = sphi 0, %s3491
                  %s3485 = sphi %s3475, %s3494
                  %s3486 = sphi %s3477, %s3495
                $region76: #{tpu_custom_call.1} parent=65 // loop_header_branch
                  %3483 = sbr.rel (%p3480) target = $region80
                $region77: #{tpu_custom_call.1} parent=65 // loop_body
                  %v3487 = vld [vmem:[%s3485] sm:$0xff]
                  %3488 = vst [vmem:[%s3486] sm:$0xff] %v3487
                  %s3489 = sadd.s32 1, %s3484
                  %p3490 = scmp.ge.s32.totalorder %s3489, %s3472
                  %s3491 = scalar_select %p3490, 0, %s3489
                  %s3492 = smul.u32 %s3491, 8
                  %s3493 = smul.u32 %s3491, 8
                  %s3494 = scalar_lea.vmem %s3475, %s3492 [#allocation2]
                  %s3495 = scalar_lea.vmem %s3477, %s3493
                $region78: #{tpu_custom_call.1} parent=65 // loop_footer
                  %s3481 = sadd.s32 %s3479, 1
                $region79: #{tpu_custom_call.1} parent=65 // loop_footer_branch
                  %3478 = sbr.rel target = $region75
                $region80: #{tpu_custom_call.1} parent=65 // loop_exit
                  _
              $region66: #{tpu_custom_call.1} parent=43 // pred_fallthru
                _
              // Predicated region
              $region81: #{tpu_custom_call.1} parent=43 // pred_check
                _
              $region82: #{tpu_custom_call.1} parent=43 // pred_check_branch
                %3497 = sbr.rel target = $region84
              $region83: #{tpu_custom_call.1} parent=43 // pred_region
                _
              $region84: #{tpu_custom_call.1} parent=43 // pred_fallthru
                _
            $region44: #{tpu_custom_call.1} parent=39 // pred_fallthru
              _
            // Predicated region
            $region45: #{tpu_custom_call.1} parent=39 // pred_check
              _
            $region46: #{tpu_custom_call.1} parent=39 // pred_check_branch
              %3279 = sbr.rel target = $region48
            $region47: #{tpu_custom_call.1} parent=39 // pred_region
              %s3281 = ssub.s32 256, 1
              %s3282 = sshrl.u32 %s3268, 5
              // While loop
              $region49: #{tpu_custom_call.1} parent=47 // loop_pre_header
                _
              $region50: #{tpu_custom_call.1} parent=47 // loop_header
                %s3284 = sphi 0, %s3286
                %p3285 = scmp.ge.s32.totalorder %s3284, %s3282
                %s3289 = sphi 0, %s3358
                %s3290 = sphi %s3261, %s3361
                %s3291 = sphi %s3272, %s3362
              $region51: #{tpu_custom_call.1} parent=47 // loop_header_branch
                %3288 = sbr.rel (%p3285) target = $region55
              $region52: #{tpu_custom_call.1} parent=47 // loop_body
                %v3292 = vld [vmem:[%s3290] sm:%s3281]
                %3293 = vst [vmem:[%s3291] sm:%s3281] %v3292
                %v3294 = vld [vmem:[%s3290 + $0x8] sm:%s3281]
                %3295 = vst [vmem:[%s3291 + $0x8] sm:%s3281] %v3294
                %v3296 = vld [vmem:[%s3290 + $0x10] sm:%s3281]
                %3297 = vst [vmem:[%s3291 + $0x10] sm:%s3281] %v3296
                %v3298 = vld [vmem:[%s3290 + $0x18] sm:%s3281]
                %3299 = vst [vmem:[%s3291 + $0x18] sm:%s3281] %v3298
                %v3300 = vld [vmem:[%s3290 + $0x20] sm:%s3281]
                %3301 = vst [vmem:[%s3291 + $0x20] sm:%s3281] %v3300
                %v3302 = vld [vmem:[%s3290 + $0x28] sm:%s3281]
                %3303 = vst [vmem:[%s3291 + $0x28] sm:%s3281] %v3302
                %v3304 = vld [vmem:[%s3290 + $0x30] sm:%s3281]
                %3305 = vst [vmem:[%s3291 + $0x30] sm:%s3281] %v3304
                %v3306 = vld [vmem:[%s3290 + $0x38] sm:%s3281]
                %3307 = vst [vmem:[%s3291 + $0x38] sm:%s3281] %v3306
                %v3308 = vld [vmem:[%s3290 + $0x40] sm:%s3281]
                %3309 = vst [vmem:[%s3291 + $0x40] sm:%s3281] %v3308
                %v3310 = vld [vmem:[%s3290 + $0x48] sm:%s3281]
                %3311 = vst [vmem:[%s3291 + $0x48] sm:%s3281] %v3310
                %v3312 = vld [vmem:[%s3290 + $0x50] sm:%s3281]
                %3313 = vst [vmem:[%s3291 + $0x50] sm:%s3281] %v3312
                %v3314 = vld [vmem:[%s3290 + $0x58] sm:%s3281]
                %3315 = vst [vmem:[%s3291 + $0x58] sm:%s3281] %v3314
                %v3316 = vld [vmem:[%s3290 + $0x60] sm:%s3281]
                %3317 = vst [vmem:[%s3291 + $0x60] sm:%s3281] %v3316
                %v3318 = vld [vmem:[%s3290 + $0x68] sm:%s3281]
                %3319 = vst [vmem:[%s3291 + $0x68] sm:%s3281] %v3318
                %v3320 = vld [vmem:[%s3290 + $0x70] sm:%s3281]
                %3321 = vst [vmem:[%s3291 + $0x70] sm:%s3281] %v3320
                %v3322 = vld [vmem:[%s3290 + $0x78] sm:%s3281]
                %3323 = vst [vmem:[%s3291 + $0x78] sm:%s3281] %v3322
                %v3324 = vld [vmem:[%s3290 + $0x80] sm:%s3281]
                %3325 = vst [vmem:[%s3291 + $0x80] sm:%s3281] %v3324
                %v3326 = vld [vmem:[%s3290 + $0x88] sm:%s3281]
                %3327 = vst [vmem:[%s3291 + $0x88] sm:%s3281] %v3326
                %v3328 = vld [vmem:[%s3290 + $0x90] sm:%s3281]
                %3329 = vst [vmem:[%s3291 + $0x90] sm:%s3281] %v3328
                %v3330 = vld [vmem:[%s3290 + $0x98] sm:%s3281]
                %3331 = vst [vmem:[%s3291 + $0x98] sm:%s3281] %v3330
                %v3332 = vld [vmem:[%s3290 + $0xa0] sm:%s3281]
                %3333 = vst [vmem:[%s3291 + $0xa0] sm:%s3281] %v3332
                %v3334 = vld [vmem:[%s3290 + $0xa8] sm:%s3281]
                %3335 = vst [vmem:[%s3291 + $0xa8] sm:%s3281] %v3334
                %v3336 = vld [vmem:[%s3290 + $0xb0] sm:%s3281]
                %3337 = vst [vmem:[%s3291 + $0xb0] sm:%s3281] %v3336
                %v3338 = vld [vmem:[%s3290 + $0xb8] sm:%s3281]
                %3339 = vst [vmem:[%s3291 + $0xb8] sm:%s3281] %v3338
                %v3340 = vld [vmem:[%s3290 + $0xc0] sm:%s3281]
                %3341 = vst [vmem:[%s3291 + $0xc0] sm:%s3281] %v3340
                %v3342 = vld [vmem:[%s3290 + $0xc8] sm:%s3281]
                %3343 = vst [vmem:[%s3291 + $0xc8] sm:%s3281] %v3342
                %v3344 = vld [vmem:[%s3290 + $0xd0] sm:%s3281]
                %3345 = vst [vmem:[%s3291 + $0xd0] sm:%s3281] %v3344
                %v3346 = vld [vmem:[%s3290 + $0xd8] sm:%s3281]
                %3347 = vst [vmem:[%s3291 + $0xd8] sm:%s3281] %v3346
                %v3348 = vld [vmem:[%s3290 + $0xe0] sm:%s3281]
                %3349 = vst [vmem:[%s3291 + $0xe0] sm:%s3281] %v3348
                %v3350 = vld [vmem:[%s3290 + $0xe8] sm:%s3281]
                %3351 = vst [vmem:[%s3291 + $0xe8] sm:%s3281] %v3350
                %v3352 = vld [vmem:[%s3290 + $0xf0] sm:%s3281]
                %3353 = vst [vmem:[%s3291 + $0xf0] sm:%s3281] %v3352
                %v3354 = vld [vmem:[%s3290 + $0xf8] sm:%s3281]
                %3355 = vst [vmem:[%s3291 + $0xf8] sm:%s3281] %v3354
                %s3356 = sadd.s32 1, %s3289
                %p3357 = scmp.ge.s32.totalorder %s3356, %s3282
                %s3358 = scalar_select %p3357, 0, %s3356
                %s3359 = smul.u32 %s3358, 256
                %s3360 = smul.u32 %s3358, 256
                %s3361 = scalar_lea.vmem %s3261, %s3359 [#allocation2]
                %s3362 = scalar_lea.vmem %s3272, %s3360
              $region53: #{tpu_custom_call.1} parent=47 // loop_footer
                %s3286 = sadd.s32 %s3284, 1
              $region54: #{tpu_custom_call.1} parent=47 // loop_footer_branch
                %3283 = sbr.rel target = $region50
              $region55: #{tpu_custom_call.1} parent=47 // loop_exit
                _
              %s3363 = sshrl.u32 %s3268, 5
              %s3364 = sand.u32 %s3268, 31
              %s3365 = smul.u32 %s3363, 32
              %s3366 = smul.u32 8, %s3365
              %s3367 = scalar_lea.vmem %s3261, %s3366 [#allocation2]
              %s3368 = smul.u32 8, %s3365
              %s3369 = scalar_lea.vmem %s3272, %s3368
              // While loop
              $region56: #{tpu_custom_call.1} parent=47 // loop_pre_header
                _
              $region57: #{tpu_custom_call.1} parent=47 // loop_header
                %s3371 = sphi 0, %s3373
                %p3372 = scmp.ge.s32.totalorder %s3371, %s3364
                %s3376 = sphi 0, %s3383
                %s3377 = sphi %s3367, %s3386
                %s3378 = sphi %s3369, %s3387
              $region58: #{tpu_custom_call.1} parent=47 // loop_header_branch
                %3375 = sbr.rel (%p3372) target = $region62
              $region59: #{tpu_custom_call.1} parent=47 // loop_body
                %v3379 = vld [vmem:[%s3377] sm:%s3281]
                %3380 = vst [vmem:[%s3378] sm:%s3281] %v3379
                %s3381 = sadd.s32 1, %s3376
                %p3382 = scmp.ge.s32.totalorder %s3381, %s3364
                %s3383 = scalar_select %p3382, 0, %s3381
                %s3384 = smul.u32 %s3383, 8
                %s3385 = smul.u32 %s3383, 8
                %s3386 = scalar_lea.vmem %s3367, %s3384 [#allocation2]
                %s3387 = scalar_lea.vmem %s3369, %s3385
              $region60: #{tpu_custom_call.1} parent=47 // loop_footer
                %s3373 = sadd.s32 %s3371, 1
              $region61: #{tpu_custom_call.1} parent=47 // loop_footer_branch
                %3370 = sbr.rel target = $region57
              $region62: #{tpu_custom_call.1} parent=47 // loop_exit
                _
            $region48: #{tpu_custom_call.1} parent=39 // pred_fallthru
              _
          $region40: #{tpu_custom_call.1} parent=35 // pred_fallthru
            _
          %3498 = vnop
        $region36: #{tpu_custom_call.1} parent=31 // pred_fallthru
          _
      $region32: #{tpu_custom_call.1} parent=5 // pred_fallthru
        _
      %p3499 = scmp.le.s32.totalorder 2, %s9
      // Predicated region
      $region85: #{tpu_custom_call.1} parent=5 // pred_check
        %p3500 = pneg %p3499
      $region86: #{tpu_custom_call.1} parent=5 // pred_check_branch
        %3502 = sbr.rel (%p3500) target = $region88
      $region87: #{tpu_custom_call.1} parent=5 // pred_region
        %s3503 = ssub.s32 %s9, 2
        // Predicated region
        $region89: #{tpu_custom_call.1} parent=87 // pred_check
          %p3504 = pneg %p106
        $region90: #{tpu_custom_call.1} parent=87 // pred_check_branch
          %3506 = sbr.rel (%p3504) target = $region92
        $region91: #{tpu_custom_call.1} parent=87 // pred_region
          %s3507 = sand.u32 %s91, 1
          %s3508 = sand.u32 %s91, 1
          %s3509 = smul.addr %s3508, 504
          %s3510 = scalar_lea.vmem [#allocation2], %s3509
        $region92: #{tpu_custom_call.1} parent=87 // pred_fallthru
          _
      $region88: #{tpu_custom_call.1} parent=5 // pred_fallthru
        _
    $region6: #{tpu_custom_call.1} parent=1 // loop_footer
      %s13 = sadd.s32 1, %s9
    $region7: #{tpu_custom_call.1} parent=1 // loop_footer_branch
      %8 = sbr.rel target = $region3
    $region8: #{tpu_custom_call.1} parent=1 // loop_exit
      _

</llo_original>
